<compile_context>
chip_gen: v5e
topology: v5e:2x2
jax: 0.10.0
libtpu: 0.0.40
codegen_flags: <defaults>
</compile_context>

<pallas_src>
import functools
import math

import jax
import jax.numpy as jnp
from jax.experimental import pallas as pl
from jax.experimental.pallas import tpu as pltpu

F32 = jnp.float32
BF16 = jnp.bfloat16


# ----------------------------------------------------------------------------
# Pallas kernels
# ----------------------------------------------------------------------------

def _layernorm(x, gamma, beta, eps):
    mu = jnp.mean(x, axis=-1, keepdims=True)
    var = jnp.mean((x - mu) * (x - mu), axis=-1, keepdims=True)
    return (x - mu) * jax.lax.rsqrt(var + eps) * gamma + beta


def encoder_layer_kernel(mask_ref, x_ref, *refs, apply_in_ln, n_heads, eps):
    # One whole transformer layer for b_blk batch elements:
    #   [optional fused embedding LayerNorm]
    #   qkv = x @ Wqkv + b ; per-head softmax(q k^T / sqrt(dh) + mask) v
    #   h1  = LN(ctx @ Wo + bo + x)
    #   out = LN(GELU(h1 @ W1 + b1) @ W2 + b2 + h1)
    if apply_in_ln:
        gin_ref, bin_ref = refs[0], refs[1]
        refs = refs[2:]
    (wqkv_ref, bqkv_ref, wo_ref, bo_ref,
     g1_ref, be1_ref,
     w1_ref, b1_ref, w2_ref, b2_ref,
     g2_ref, be2_ref,
     o_ref, qkv_s, ctx_s) = refs

    Bb, S, H = x_ref.shape
    dh = H // n_heads
    scale = 1.0 / math.sqrt(dh)
    neg = float(jnp.finfo(jnp.float32).min)

    # Flatten batch rows: projection / FFN matmuls see M = Bb*S rows
    # (better MXU occupancy than per-sequence S-row matmuls).
    x = x_ref[...].astype(F32).reshape(Bb * S, H)
    if apply_in_ln:  # fused embedding LayerNorm (first layer only)
        x = _layernorm(x, gin_ref[...], bin_ref[...], eps)

    # --- fused QKV projection: bf16 MXU, f32 accumulate, bf16 scratch ---
    qkv = jnp.dot(x.astype(BF16), wqkv_ref[...], preferred_element_type=F32)
    qkv_s[...] = (qkv + bqkv_ref[...]).astype(BF16)          # (Bb*S, 3H) bf16

    # --- multi-head attention ---
    # TODO(synk): at real dims (12 heads, dh=64, S=512) move heads into a
    # lax.fori_loop / 128-lane-aligned head-pair slices to bound live ranges
    # and avoid masked lane loads; the static loop is fine at toy dims.
    for b in range(Bb):
        # additive mask computed once per sequence, outside the head loop
        bias = jnp.where(mask_ref[b] > 0.0, 0.0, neg)        # (1, S) f32
        r0 = b * S
        for h in range(n_heads):
            q = qkv_s[r0:r0 + S, h * dh:(h + 1) * dh]                 # bf16
            k = qkv_s[r0:r0 + S, H + h * dh:H + (h + 1) * dh]         # bf16
            v = qkv_s[r0:r0 + S, 2 * H + h * dh:2 * H + (h + 1) * dh]  # bf16
            # q @ k^T without a materialized transpose (contract last dims)
            s = jax.lax.dot_general(
                q, k, (((1,), (1,)), ((), ())),
                preferred_element_type=F32) * scale                    # (S, S)
            s = s + bias
            s = s - jnp.max(s, axis=-1, keepdims=True)
            p = jnp.exp(s)
            p = p * pl.reciprocal(jnp.sum(p, axis=-1, keepdims=True),
                                  approx=True)
            ctx = jnp.dot(p.astype(BF16), v, preferred_element_type=F32)
            ctx_s[r0:r0 + S, h * dh:(h + 1) * dh] = ctx.astype(BF16)

    # --- output projection + residual + LayerNorm (f32 math) ---
    sa = (jnp.dot(ctx_s[...], wo_ref[...], preferred_element_type=F32)
          + bo_ref[...])
    h1 = _layernorm(sa + x, g1_ref[...], be1_ref[...], eps)

    # --- feed-forward + residual + LayerNorm ---
    ff = (jnp.dot(h1.astype(BF16), w1_ref[...], preferred_element_type=F32)
          + b1_ref[...])
    # TODO(synk): HF DistilBERT uses exact erf-GELU; tanh approximation here.
    ff = jax.nn.gelu(ff, approximate=True)
    ff = (jnp.dot(ff.astype(BF16), w2_ref[...], preferred_element_type=F32)
          + b2_ref[...])
    out = _layernorm(ff + h1, g2_ref[...], be2_ref[...], eps)

    o_ref[...] = out.reshape(Bb, S, H).astype(o_ref.dtype)


def cls_logsoftmax_kernel(x_ref, w_ref, b_ref, logp_ref):
    # logits = x @ W + b ; log_softmax(logits)   (one row tile per grid step)
    logits = (jnp.dot(x_ref[...], w_ref[...], preferred_element_type=F32)
              + b_ref[...])
    z = logits - jnp.max(logits, axis=-1, keepdims=True)
    logp_ref[...] = z - jnp.log(jnp.sum(jnp.exp(z), axis=-1, keepdims=True))


def cls_logsoftmax_ce_kernel(x_ref, w_ref, b_ref, lbl_ref, msk_ref,
                             logp_ref, loss_ref, sum_s, cnt_s):
    # Fused classifier + LogSoftmax + CrossEntropyLoss, gridded over row tiles.
    # CE numerator/denominator accumulated in VMEM scratch, finalized with
    # pl.when on the last step.  Faithful to the torch code: CE is applied to
    # already log-softmaxed logits, ignore_index = -100 where mask != 1,
    # mean over non-ignored tokens.
    step = pl.program_id(0)

    @pl.when(step == 0)
    def _():
        sum_s[...] = jnp.zeros_like(sum_s)
        cnt_s[...] = jnp.zeros_like(cnt_s)

    logits = (jnp.dot(x_ref[...], w_ref[...], preferred_element_type=F32)
              + b_ref[...])                                       # (tile, C)
    z = logits - jnp.max(logits, axis=-1, keepdims=True)
    logp = z - jnp.log(jnp.sum(jnp.exp(z), axis=-1, keepdims=True))
    logp_ref[...] = logp

    z2 = logp - jnp.max(logp, axis=-1, keepdims=True)
    logq = z2 - jnp.log(jnp.sum(jnp.exp(z2), axis=-1, keepdims=True))
    labels = lbl_ref[...]                                          # (tile, 1)
    active = msk_ref[...] == 1                                     # (tile, 1)
    lbl = jnp.where(active, labels, jnp.full_like(labels, -100))
    classes = jax.lax.broadcasted_iota(jnp.int32, logq.shape, 1)
    onehot = (classes == lbl).astype(F32)
    nll = -jnp.sum(logq * onehot, axis=-1, keepdims=True)          # (tile, 1)
    valid = (lbl != -100).astype(F32)
    sum_s[...] += jnp.sum(nll * valid, axis=0, keepdims=True)      # (1, 1)
    cnt_s[...] += jnp.sum(valid, axis=0, keepdims=True)            # (1, 1)

    @pl.when(step == pl.num_programs(0) - 1)
    def _():
        # NOTE: matches torch semantics (NaN if every token is ignored).
        loss_ref[...] = sum_s[...] / cnt_s[...]


# ----------------------------------------------------------------------------
# Wrappers around pallas_call
# ----------------------------------------------------------------------------

def encoder_layer(x, mask3, lyr, *, n_heads, eps=1e-12, in_ln=None, b_blk=1):
    B, S, H = x.shape
    F = lyr["w1"].shape[1]
    assert B % b_blk == 0

    def resident(shape):
        # Block index constant in the grid index -> weight DMA'd to VMEM once
        # and kept resident across the whole grid.
        # TODO(synk): at real DistilBERT dims, single-buffer these blocks
        # (pipeline_mode=pl.Buffered(1)) and/or tile the FFN reduction so the
        # layer stays inside v7x's 64 MiB VMEM.
        return pl.BlockSpec(shape, lambda b: (0,) * len(shape))

    in_specs = [
        pl.BlockSpec((b_blk, 1, S), lambda b: (b, 0, 0)),     # mask
        pl.BlockSpec((b_blk, S, H), lambda b: (b, 0, 0)),     # x (bf16)
    ]
    args = [mask3, x]
    if in_ln is not None:                                     # fused embed LN
        in_specs += [resident((1, H)), resident((1, H))]
        args += list(in_ln)
    in_specs += [
        resident((H, 3 * H)), resident((1, 3 * H)),           # Wqkv, bqkv
        resident((H, H)), resident((1, H)),                   # Wo,   bo
        resident((1, H)), resident((1, H)),                   # sa_ln gamma/beta
        resident((H, F)), resident((1, F)),                   # W1,   b1
        resident((F, H)), resident((1, H)),                   # W2,   b2
        resident((1, H)), resident((1, H)),                   # out_ln gamma/beta
    ]
    args += [lyr["wqkv"], lyr["bqkv"], lyr["wo"], lyr["bo"],
             lyr["sa_ln_g"], lyr["sa_ln_b"],
             lyr["w1"], lyr["b1"], lyr["w2"], lyr["b2"],
             lyr["out_ln_g"], lyr["out_ln_b"]]

    return pl.pallas_call(
        functools.partial(encoder_layer_kernel,
                          apply_in_ln=in_ln is not None,
                          n_heads=n_heads, eps=eps),
        out_shape=jax.ShapeDtypeStruct((B, S, H), jnp.bfloat16),
        grid=(B // b_blk,),
        in_specs=in_specs,
        out_specs=pl.BlockSpec((b_blk, S, H), lambda b: (b, 0, 0)),
        scratch_shapes=[
            pltpu.VMEM((b_blk * S, 3 * H), jnp.bfloat16),     # QKV scratch
            pltpu.VMEM((b_blk * S, H), jnp.bfloat16),         # attention context
        ],
        compiler_params=pltpu.CompilerParams(
            dimension_semantics=("parallel",),
            vmem_limit_bytes=32 * 1024 * 1024),
    )(*args)


def _row_tile(n):
    # Row tile for the classifier grid (would be 512-1024 at real dims).
    return 8 if n % 8 == 0 else n


def classifier_logsoftmax(x, w, b):
    n, h = x.shape
    c = w.shape[1]
    t = _row_tile(n)
    return pl.pallas_call(
        cls_logsoftmax_kernel,
        out_shape=jax.ShapeDtypeStruct((n, c), jnp.float32),
        grid=(n // t,),
        in_specs=[pl.BlockSpec((t, h), lambda i: (i, 0)),
                  pl.BlockSpec((h, c), lambda i: (0, 0)),
                  pl.BlockSpec((1, c), lambda i: (0, 0))],
        out_specs=pl.BlockSpec((t, c), lambda i: (i, 0)),
        compiler_params=pltpu.CompilerParams(dimension_semantics=("parallel",)),
    )(x, w, b)


def classifier_logsoftmax_ce(x, w, b, labels, mask):
    n, h = x.shape
    c = w.shape[1]
    t = _row_tile(n)
    return pl.pallas_call(
        cls_logsoftmax_ce_kernel,
        out_shape=(jax.ShapeDtypeStruct((n, c), jnp.float32),
                   jax.ShapeDtypeStruct((1, 1), jnp.float32)),
        grid=(n // t,),
        in_specs=[pl.BlockSpec((t, h), lambda i: (i, 0)),
                  pl.BlockSpec((h, c), lambda i: (0, 0)),
                  pl.BlockSpec((1, c), lambda i: (0, 0)),
                  pl.BlockSpec((t, 1), lambda i: (i, 0)),
                  pl.BlockSpec((t, 1), lambda i: (i, 0))],
        out_specs=(pl.BlockSpec((t, c), lambda i: (i, 0)),
                   pl.BlockSpec((1, 1), lambda i: (0, 0))),
        scratch_shapes=[pltpu.VMEM((1, 1), jnp.float32),      # loss numerator
                        pltpu.VMEM((1, 1), jnp.float32)],     # token count
        compiler_params=pltpu.CompilerParams(
            dimension_semantics=("arbitrary",)),
    )(x, w, b, labels, mask)


# ----------------------------------------------------------------------------
# Model definition (synthetic DistilBERT-style) and forward pass
# ----------------------------------------------------------------------------

def init_params(key, *, vocab, max_pos, hidden, n_layers, n_heads, ffn_dim,
                n_labels):
    std = 0.02
    keys = iter(jax.random.split(key, 3 + 4 * n_layers))

    def w(k, din, dout):
        # Weights stored in bf16 (MXU input dtype); biases / LN params in f32.
        return (jax.random.normal(k, (din, dout), jnp.float32) * std).astype(BF16)

    params = {
        "word_emb": jax.random.normal(next(keys), (vocab, hidden), jnp.float32) * std,
        "pos_emb": jax.random.normal(next(keys), (max_pos, hidden), jnp.float32) * std,
        "emb_ln_g": jnp.ones((1, hidden), jnp.float32),
        "emb_ln_b": jnp.zeros((1, hidden), jnp.float32),
        "layers": [],
    }
    for _ in range(n_layers):
        params["layers"].append({
            "wqkv": w(next(keys), hidden, 3 * hidden),
            "bqkv": jnp.zeros((1, 3 * hidden), jnp.float32),
            "wo": w(next(keys), hidden, hidden),
            "bo": jnp.zeros((1, hidden), jnp.float32),
            "sa_ln_g": jnp.ones((1, hidden), jnp.float32),
            "sa_ln_b": jnp.zeros((1, hidden), jnp.float32),
            "w1": w(next(keys), hidden, ffn_dim),
            "b1": jnp.zeros((1, ffn_dim), jnp.float32),
            "w2": w(next(keys), ffn_dim, hidden),
            "b2": jnp.zeros((1, hidden), jnp.float32),
            "out_ln_g": jnp.ones((1, hidden), jnp.float32),
            "out_ln_b": jnp.zeros((1, hidden), jnp.float32),
        })
    params["cls_w"] = w(next(keys), hidden, n_labels)
    params["cls_b"] = jnp.zeros((1, n_labels), jnp.float32)
    return params


def distilbert_forward(params, input_ids, attention_mask, labels=None, *,
                       n_heads, b_blk=1):
    B, S = input_ids.shape
    H = params["word_emb"].shape[1]

    # --- embeddings (gather + add is glue JAX); bf16 activations to kernels ---
    x = params["word_emb"][input_ids] + params["pos_emb"][:S][None, :, :]
    x = x.astype(jnp.bfloat16)

    # --- transformer layers: one fused Pallas kernel per layer.
    #     The embedding LayerNorm is fused into the first layer's kernel. ---
    mask3 = attention_mask.reshape(B, 1, S).astype(jnp.float32)
    for li, lyr in enumerate(params["layers"]):
        in_ln = (params["emb_ln_g"], params["emb_ln_b"]) if li == 0 else None
        x = encoder_layer(x, mask3, lyr, n_heads=n_heads, in_ln=in_ln,
                          b_blk=b_blk)

    # dropout: identity at inference
    xf = x.reshape(B * S, H)
    if labels is not None:
        log_probs, loss = classifier_logsoftmax_ce(
            xf, params["cls_w"], params["cls_b"],
            labels.reshape(B * S, 1).astype(jnp.int32),
            attention_mask.reshape(B * S, 1).astype(jnp.int32))
        return loss[0, 0], log_probs.reshape(B, S, -1)

    log_probs = classifier_logsoftmax(xf, params["cls_w"], params["cls_b"])
    return None, log_probs.reshape(B, S, -1)


# ----------------------------------------------------------------------------
# Main
# ----------------------------------------------------------------------------

if __name__ == "__main__":
    B, S, H, NH, FFN, LAYERS, VOCAB, MAXPOS, NLAB = 2, 8, 32, 4, 64, 2, 128, 64, 3

    key = jax.random.PRNGKey(0)
    k_param, k_ids, k_lab = jax.random.split(key, 3)

    params = init_params(k_param, vocab=VOCAB, max_pos=MAXPOS, hidden=H,
                         n_layers=LAYERS, n_heads=NH, ffn_dim=FFN,
                         n_labels=NLAB)

    input_ids = jax.random.randint(k_ids, (B, S), 0, VOCAB, dtype=jnp.int32)
    # attention mask: second sequence padded on the last 3 tokens
    attention_mask = jnp.ones((B, S), jnp.int32).at[1, S - 3:].set(0)
    labels = jax.random.randint(k_lab, (B, S), 0, NLAB, dtype=jnp.int32)

    # b_blk=1 keeps >=2 parallel grid units at this tiny batch (v7x 2-TC note);
    # at real batch sizes raise b_blk to grow the matmul M dim.
    fwd_loss = jax.jit(functools.partial(distilbert_forward, n_heads=NH, b_blk=1))
    loss, log_probs = fwd_loss(params, input_ids, attention_mask, labels)
    jax.block_until_ready((loss, log_probs))

    fwd_nolab = jax.jit(lambda p, i, m: distilbert_forward(p, i, m, None,
                                                           n_heads=NH, b_blk=1))
    _, log_probs2 = fwd_nolab(params, input_ids, attention_mask)
    jax.block_until_ready(log_probs2)

    assert log_probs.shape == (B, S, NLAB)
    assert log_probs2.shape == (B, S, NLAB)
    assert bool(jnp.isfinite(loss))
    print("KERNEL_OK")
</pallas_src>

<mosaic_0001>
module attributes {stable_mosaic.version = 11 : i64} {
  func.func @encoder_layer_kernel(%arg0: i32, %arg1: memref<1x1x8xf32, #tpu.memory_space<vmem>>, %arg2: memref<1x8x32xbf16, #tpu.memory_space<vmem>>, %arg3: memref<1x32xf32, #tpu.memory_space<vmem>>, %arg4: memref<1x32xf32, #tpu.memory_space<vmem>>, %arg5: memref<32x96xbf16, #tpu.memory_space<vmem>>, %arg6: memref<1x96xf32, #tpu.memory_space<vmem>>, %arg7: memref<32x32xbf16, #tpu.memory_space<vmem>>, %arg8: memref<1x32xf32, #tpu.memory_space<vmem>>, %arg9: memref<1x32xf32, #tpu.memory_space<vmem>>, %arg10: memref<1x32xf32, #tpu.memory_space<vmem>>, %arg11: memref<32x64xbf16, #tpu.memory_space<vmem>>, %arg12: memref<1x64xf32, #tpu.memory_space<vmem>>, %arg13: memref<64x32xbf16, #tpu.memory_space<vmem>>, %arg14: memref<1x32xf32, #tpu.memory_space<vmem>>, %arg15: memref<1x32xf32, #tpu.memory_space<vmem>>, %arg16: memref<1x32xf32, #tpu.memory_space<vmem>>, %arg17: memref<1x8x32xbf16, #tpu.memory_space<vmem>>, %arg18: memref<8x96xbf16, #tpu.memory_space<vmem>>, %arg19: memref<8x32xbf16, #tpu.memory_space<vmem>>) attributes {dimension_semantics = [#tpu.dimension_semantics<parallel>], iteration_bounds = array<i64: 2>, scalar_prefetch = 0 : i64, scratch_operands = 2 : i64, tpu.core_type = #tpu.core_type<tc>, window_params = [{transform_indices = @transform_0, window_bounds = array<i64: 1, 1, 8>}, {transform_indices = @transform_1, window_bounds = array<i64: 1, 8, 32>}, {pipeline_mode = #tpu.pipeline_mode<synchronous>, transform_indices = @transform_2, window_bounds = array<i64: 1, 32>}, {pipeline_mode = #tpu.pipeline_mode<synchronous>, transform_indices = @transform_3, window_bounds = array<i64: 1, 32>}, {pipeline_mode = #tpu.pipeline_mode<synchronous>, transform_indices = @transform_4, window_bounds = array<i64: 32, 96>}, {pipeline_mode = #tpu.pipeline_mode<synchronous>, transform_indices = @transform_5, window_bounds = array<i64: 1, 96>}, {pipeline_mode = #tpu.pipeline_mode<synchronous>, transform_indices = @transform_6, window_bounds = array<i64: 32, 32>}, {pipeline_mode = #tpu.pipeline_mode<synchronous>, transform_indices = @transform_7, window_bounds = array<i64: 1, 32>}, {pipeline_mode = #tpu.pipeline_mode<synchronous>, transform_indices = @transform_8, window_bounds = array<i64: 1, 32>}, {pipeline_mode = #tpu.pipeline_mode<synchronous>, transform_indices = @transform_9, window_bounds = array<i64: 1, 32>}, {pipeline_mode = #tpu.pipeline_mode<synchronous>, transform_indices = @transform_10, window_bounds = array<i64: 32, 64>}, {pipeline_mode = #tpu.pipeline_mode<synchronous>, transform_indices = @transform_11, window_bounds = array<i64: 1, 64>}, {pipeline_mode = #tpu.pipeline_mode<synchronous>, transform_indices = @transform_12, window_bounds = array<i64: 64, 32>}, {pipeline_mode = #tpu.pipeline_mode<synchronous>, transform_indices = @transform_13, window_bounds = array<i64: 1, 32>}, {pipeline_mode = #tpu.pipeline_mode<synchronous>, transform_indices = @transform_14, window_bounds = array<i64: 1, 32>}, {pipeline_mode = #tpu.pipeline_mode<synchronous>, transform_indices = @transform_15, window_bounds = array<i64: 1, 32>}, {transform_indices = @transform_16, window_bounds = array<i64: 1, 8, 32>}]} {
    %c0 = arith.constant 0 : index
    %c0_0 = arith.constant 0 : index
    %c0_1 = arith.constant 0 : index
    %0 = vector.load %arg2[%c0, %c0_0, %c0_1] : memref<1x8x32xbf16, #tpu.memory_space<vmem>>, vector<1x8x32xbf16>
    %1 = arith.extf %0 : vector<1x8x32xbf16> to vector<1x8x32xf32>
    %2 = vector.shape_cast %1 : vector<1x8x32xf32> to vector<8x32xf32>
    %c0_2 = arith.constant 0 : index
    %c0_3 = arith.constant 0 : index
    %3 = vector.load %arg3[%c0_2, %c0_3] : memref<1x32xf32, #tpu.memory_space<vmem>>, vector<1x32xf32>
    %c0_4 = arith.constant 0 : index
    %c0_5 = arith.constant 0 : index
    %4 = vector.load %arg4[%c0_4, %c0_5] : memref<1x32xf32, #tpu.memory_space<vmem>>, vector<1x32xf32>
    %cst = arith.constant dense<0.000000e+00> : vector<8xf32>
    %5 = vector.multi_reduction <add>, %2, %cst [1] : vector<8x32xf32> to vector<8xf32>
    %6 = vector.shape_cast %5 : vector<8xf32> to vector<8x1xf32>
    %cst_6 = arith.constant 3.200000e+01 : f32
    %7 = vector.broadcast %cst_6 : f32 to vector<8x1xf32>
    %8 = arith.divf %6, %7 : vector<8x1xf32>
    %9 = vector.broadcast %8 : vector<8x1xf32> to vector<8x32xf32>
    %10 = arith.subf %2, %9 : vector<8x32xf32>
    %11 = vector.broadcast %8 : vector<8x1xf32> to vector<8x32xf32>
    %12 = arith.subf %2, %11 : vector<8x32xf32>
    %13 = arith.mulf %10, %12 : vector<8x32xf32>
    %cst_7 = arith.constant dense<0.000000e+00> : vector<8xf32>
    %14 = vector.multi_reduction <add>, %13, %cst_7 [1] : vector<8x32xf32> to vector<8xf32>
    %15 = vector.shape_cast %14 : vector<8xf32> to vector<8x1xf32>
    %cst_8 = arith.constant 3.200000e+01 : f32
    %16 = vector.broadcast %cst_8 : f32 to vector<8x1xf32>
    %17 = arith.divf %15, %16 : vector<8x1xf32>
    %18 = vector.broadcast %8 : vector<8x1xf32> to vector<8x32xf32>
    %19 = arith.subf %2, %18 : vector<8x32xf32>
    %cst_9 = arith.constant 9.99999996E-13 : f32
    %20 = vector.broadcast %cst_9 : f32 to vector<8x1xf32>
    %21 = arith.addf %17, %20 : vector<8x1xf32>
    %22 = math.rsqrt %21 : vector<8x1xf32>
    %23 = vector.broadcast %22 : vector<8x1xf32> to vector<8x32xf32>
    %24 = arith.mulf %19, %23 : vector<8x32xf32>
    %25 = vector.broadcast %3 : vector<1x32xf32> to vector<8x32xf32>
    %26 = arith.mulf %24, %25 : vector<8x32xf32>
    %27 = vector.broadcast %4 : vector<1x32xf32> to vector<8x32xf32>
    %28 = arith.addf %26, %27 : vector<8x32xf32>
    %29 = arith.truncf %28 : vector<8x32xf32> to vector<8x32xbf16>
    %c0_10 = arith.constant 0 : index
    %c0_11 = arith.constant 0 : index
    %30 = vector.load %arg5[%c0_10, %c0_11] : memref<32x96xbf16, #tpu.memory_space<vmem>>, vector<32x96xbf16>
    %cst_12 = arith.constant dense<0.000000e+00> : vector<8x96xf32>
    %31 = tpu.matmul %29, %30, %cst_12 {dimension_numbers = #tpu.dot_dimension_numbers<[1], [0], [0], [1], [0, 0, 1, 1], [], []>} : vector<8x32xbf16>, vector<32x96xbf16>, vector<8x96xf32> -> vector<8x96xf32>
    %c0_13 = arith.constant 0 : index
    %c0_14 = arith.constant 0 : index
    %32 = vector.load %arg6[%c0_13, %c0_14] : memref<1x96xf32, #tpu.memory_space<vmem>>, vector<1x96xf32>
    %33 = vector.broadcast %32 : vector<1x96xf32> to vector<8x96xf32>
    %34 = arith.addf %31, %33 : vector<8x96xf32>
    %35 = arith.truncf %34 : vector<8x96xf32> to vector<8x96xbf16>
    %c0_15 = arith.constant 0 : index
    %c0_16 = arith.constant 0 : index
    %36 = vector.load %arg18[%c0_15, %c0_16] : memref<8x96xbf16, #tpu.memory_space<vmem>>, vector<8x96xbf16>
    tpu.vector_store %arg18[%c0_15, %c0_16], %35 {strides = array<i32>} : memref<8x96xbf16, #tpu.memory_space<vmem>>, vector<8x96xbf16>,
    %c0_17 = arith.constant 0 : index
    %c0_18 = arith.constant 0 : index
    %c0_19 = arith.constant 0 : index
    %37 = vector.load %arg1[%c0_17, %c0_18, %c0_19] : memref<1x1x8xf32, #tpu.memory_space<vmem>>, vector<1x1x8xf32>
    %38 = vector.shape_cast %37 : vector<1x1x8xf32> to vector<1x8xf32>
    %cst_20 = arith.constant 0.000000e+00 : f32
    %39 = vector.broadcast %cst_20 : f32 to vector<1x8xf32>
    %40 = arith.cmpf ogt, %38, %39 : vector<1x8xf32>
    %cst_21 = arith.constant 0.000000e+00 : f32
    %cst_22 = arith.constant -3.40282347E+38 : f32
    %41 = vector.broadcast %cst_21 : f32 to vector<1x8xf32>
    %42 = vector.broadcast %cst_22 : f32 to vector<1x8xf32>
    %43 = arith.select %40, %41, %42 : vector<1x8xi1>, vector<1x8xf32>
    %c0_23 = arith.constant 0 : index
    %c0_24 = arith.constant 0 : index
    %44 = vector.load %arg18[%c0_23, %c0_24] : memref<8x96xbf16, #tpu.memory_space<vmem>>, vector<8x8xbf16>
    %c0_25 = arith.constant 0 : index
    %c32 = arith.constant 32 : index
    %45 = vector.load %arg18[%c0_25, %c32] : memref<8x96xbf16, #tpu.memory_space<vmem>>, vector<8x8xbf16>
    %c0_26 = arith.constant 0 : index
    %c64 = arith.constant 64 : index
    %46 = vector.load %arg18[%c0_26, %c64] : memref<8x96xbf16, #tpu.memory_space<vmem>>, vector<8x8xbf16>
    %cst_27 = arith.constant dense<0.000000e+00> : vector<8x8xf32>
    %47 = tpu.matmul %44, %45, %cst_27 {dimension_numbers = #tpu.dot_dimension_numbers<[1], [1], [0], [0], [0, 0, 1, 0], [], []>} : vector<8x8xbf16>, vector<8x8xbf16>, vector<8x8xf32> -> vector<8x8xf32>
    %cst_28 = arith.constant 0.353553385 : f32
    %48 = vector.broadcast %cst_28 : f32 to vector<8x8xf32>
    %49 = arith.mulf %47, %48 : vector<8x8xf32>
    %50 = vector.broadcast %43 : vector<1x8xf32> to vector<8x8xf32>
    %51 = arith.addf %49, %50 : vector<8x8xf32>
    %cst_29 = arith.constant dense<0xFF800000> : vector<8xf32>
    %52 = vector.multi_reduction <maximumf>, %51, %cst_29 [1] : vector<8x8xf32> to vector<8xf32>
    %53 = vector.shape_cast %52 : vector<8xf32> to vector<8x1xf32>
    %54 = vector.broadcast %53 : vector<8x1xf32> to vector<8x8xf32>
    %55 = arith.subf %51, %54 : vector<8x8xf32>
    %56 = math.exp %55 : vector<8x8xf32>
    %cst_30 = arith.constant dense<0.000000e+00> : vector<8xf32>
    %57 = vector.multi_reduction <add>, %56, %cst_30 [1] : vector<8x8xf32> to vector<8xf32>
    %58 = vector.shape_cast %57 : vector<8xf32> to vector<8x1xf32>
    %59 = tpu.reciprocal %58 {approx = true} : vector<8x1xf32> -> vector<8x1xf32>
    %60 = vector.broadcast %59 : vector<8x1xf32> to vector<8x8xf32>
    %61 = arith.mulf %56, %60 : vector<8x8xf32>
    %62 = arith.truncf %61 : vector<8x8xf32> to vector<8x8xbf16>
    %cst_31 = arith.constant dense<0.000000e+00> : vector<8x8xf32>
    %63 = tpu.matmul %62, %46, %cst_31 {dimension_numbers = #tpu.dot_dimension_numbers<[1], [0], [0], [1], [0, 0, 1, 1], [], []>} : vector<8x8xbf16>, vector<8x8xbf16>, vector<8x8xf32> -> vector<8x8xf32>
    %64 = arith.truncf %63 : vector<8x8xf32> to vector<8x8xbf16>
    %c0_32 = arith.constant 0 : index
    %c0_33 = arith.constant 0 : index
    %65 = vector.load %arg19[%c0_32, %c0_33] : memref<8x32xbf16, #tpu.memory_space<vmem>>, vector<8x8xbf16>
    tpu.vector_store %arg19[%c0_32, %c0_33], %64 {strides = array<i32>} : memref<8x32xbf16, #tpu.memory_space<vmem>>, vector<8x8xbf16>,
    %c0_34 = arith.constant 0 : index
    %c8 = arith.constant 8 : index
    %66 = vector.load %arg18[%c0_34, %c8] : memref<8x96xbf16, #tpu.memory_space<vmem>>, vector<8x8xbf16>
    %c0_35 = arith.constant 0 : index
    %c40 = arith.constant 40 : index
    %67 = vector.load %arg18[%c0_35, %c40] : memref<8x96xbf16, #tpu.memory_space<vmem>>, vector<8x8xbf16>
    %c0_36 = arith.constant 0 : index
    %c72 = arith.constant 72 : index
    %68 = vector.load %arg18[%c0_36, %c72] : memref<8x96xbf16, #tpu.memory_space<vmem>>, vector<8x8xbf16>
    %cst_37 = arith.constant dense<0.000000e+00> : vector<8x8xf32>
    %69 = tpu.matmul %66, %67, %cst_37 {dimension_numbers = #tpu.dot_dimension_numbers<[1], [1], [0], [0], [0, 0, 1, 0], [], []>} : vector<8x8xbf16>, vector<8x8xbf16>, vector<8x8xf32> -> vector<8x8xf32>
    %cst_38 = arith.constant 0.353553385 : f32
    %70 = vector.broadcast %cst_38 : f32 to vector<8x8xf32>
    %71 = arith.mulf %69, %70 : vector<8x8xf32>
    %72 = vector.broadcast %43 : vector<1x8xf32> to vector<8x8xf32>
    %73 = arith.addf %71, %72 : vector<8x8xf32>
    %cst_39 = arith.constant dense<0xFF800000> : vector<8xf32>
    %74 = vector.multi_reduction <maximumf>, %73, %cst_39 [1] : vector<8x8xf32> to vector<8xf32>
    %75 = vector.shape_cast %74 : vector<8xf32> to vector<8x1xf32>
    %76 = vector.broadcast %75 : vector<8x1xf32> to vector<8x8xf32>
    %77 = arith.subf %73, %76 : vector<8x8xf32>
    %78 = math.exp %77 : vector<8x8xf32>
    %cst_40 = arith.constant dense<0.000000e+00> : vector<8xf32>
    %79 = vector.multi_reduction <add>, %78, %cst_40 [1] : vector<8x8xf32> to vector<8xf32>
    %80 = vector.shape_cast %79 : vector<8xf32> to vector<8x1xf32>
    %81 = tpu.reciprocal %80 {approx = true} : vector<8x1xf32> -> vector<8x1xf32>
    %82 = vector.broadcast %81 : vector<8x1xf32> to vector<8x8xf32>
    %83 = arith.mulf %78, %82 : vector<8x8xf32>
    %84 = arith.truncf %83 : vector<8x8xf32> to vector<8x8xbf16>
    %cst_41 = arith.constant dense<0.000000e+00> : vector<8x8xf32>
    %85 = tpu.matmul %84, %68, %cst_41 {dimension_numbers = #tpu.dot_dimension_numbers<[1], [0], [0], [1], [0, 0, 1, 1], [], []>} : vector<8x8xbf16>, vector<8x8xbf16>, vector<8x8xf32> -> vector<8x8xf32>
    %86 = arith.truncf %85 : vector<8x8xf32> to vector<8x8xbf16>
    %c0_42 = arith.constant 0 : index
    %c8_43 = arith.constant 8 : index
    %87 = vector.load %arg19[%c0_42, %c8_43] : memref<8x32xbf16, #tpu.memory_space<vmem>>, vector<8x8xbf16>
    tpu.vector_store %arg19[%c0_42, %c8_43], %86 {strides = array<i32>} : memref<8x32xbf16, #tpu.memory_space<vmem>>, vector<8x8xbf16>,
    %c0_44 = arith.constant 0 : index
    %c16 = arith.constant 16 : index
    %88 = vector.load %arg18[%c0_44, %c16] : memref<8x96xbf16, #tpu.memory_space<vmem>>, vector<8x8xbf16>
    %c0_45 = arith.constant 0 : index
    %c48 = arith.constant 48 : index
    %89 = vector.load %arg18[%c0_45, %c48] : memref<8x96xbf16, #tpu.memory_space<vmem>>, vector<8x8xbf16>
    %c0_46 = arith.constant 0 : index
    %c80 = arith.constant 80 : index
    %90 = vector.load %arg18[%c0_46, %c80] : memref<8x96xbf16, #tpu.memory_space<vmem>>, vector<8x8xbf16>
    %cst_47 = arith.constant dense<0.000000e+00> : vector<8x8xf32>
    %91 = tpu.matmul %88, %89, %cst_47 {dimension_numbers = #tpu.dot_dimension_numbers<[1], [1], [0], [0], [0, 0, 1, 0], [], []>} : vector<8x8xbf16>, vector<8x8xbf16>, vector<8x8xf32> -> vector<8x8xf32>
    %cst_48 = arith.constant 0.353553385 : f32
    %92 = vector.broadcast %cst_48 : f32 to vector<8x8xf32>
    %93 = arith.mulf %91, %92 : vector<8x8xf32>
    %94 = vector.broadcast %43 : vector<1x8xf32> to vector<8x8xf32>
    %95 = arith.addf %93, %94 : vector<8x8xf32>
    %cst_49 = arith.constant dense<0xFF800000> : vector<8xf32>
    %96 = vector.multi_reduction <maximumf>, %95, %cst_49 [1] : vector<8x8xf32> to vector<8xf32>
    %97 = vector.shape_cast %96 : vector<8xf32> to vector<8x1xf32>
    %98 = vector.broadcast %97 : vector<8x1xf32> to vector<8x8xf32>
    %99 = arith.subf %95, %98 : vector<8x8xf32>
    %100 = math.exp %99 : vector<8x8xf32>
    %cst_50 = arith.constant dense<0.000000e+00> : vector<8xf32>
    %101 = vector.multi_reduction <add>, %100, %cst_50 [1] : vector<8x8xf32> to vector<8xf32>
    %102 = vector.shape_cast %101 : vector<8xf32> to vector<8x1xf32>
    %103 = tpu.reciprocal %102 {approx = true} : vector<8x1xf32> -> vector<8x1xf32>
    %104 = vector.broadcast %103 : vector<8x1xf32> to vector<8x8xf32>
    %105 = arith.mulf %100, %104 : vector<8x8xf32>
    %106 = arith.truncf %105 : vector<8x8xf32> to vector<8x8xbf16>
    %cst_51 = arith.constant dense<0.000000e+00> : vector<8x8xf32>
    %107 = tpu.matmul %106, %90, %cst_51 {dimension_numbers = #tpu.dot_dimension_numbers<[1], [0], [0], [1], [0, 0, 1, 1], [], []>} : vector<8x8xbf16>, vector<8x8xbf16>, vector<8x8xf32> -> vector<8x8xf32>
    %108 = arith.truncf %107 : vector<8x8xf32> to vector<8x8xbf16>
    %c0_52 = arith.constant 0 : index
    %c16_53 = arith.constant 16 : index
    %109 = vector.load %arg19[%c0_52, %c16_53] : memref<8x32xbf16, #tpu.memory_space<vmem>>, vector<8x8xbf16>
    tpu.vector_store %arg19[%c0_52, %c16_53], %108 {strides = array<i32>} : memref<8x32xbf16, #tpu.memory_space<vmem>>, vector<8x8xbf16>,
    %c0_54 = arith.constant 0 : index
    %c24 = arith.constant 24 : index
    %110 = vector.load %arg18[%c0_54, %c24] : memref<8x96xbf16, #tpu.memory_space<vmem>>, vector<8x8xbf16>
    %c0_55 = arith.constant 0 : index
    %c56 = arith.constant 56 : index
    %111 = vector.load %arg18[%c0_55, %c56] : memref<8x96xbf16, #tpu.memory_space<vmem>>, vector<8x8xbf16>
    %c0_56 = arith.constant 0 : index
    %c88 = arith.constant 88 : index
    %112 = vector.load %arg18[%c0_56, %c88] : memref<8x96xbf16, #tpu.memory_space<vmem>>, vector<8x8xbf16>
    %cst_57 = arith.constant dense<0.000000e+00> : vector<8x8xf32>
    %113 = tpu.matmul %110, %111, %cst_57 {dimension_numbers = #tpu.dot_dimension_numbers<[1], [1], [0], [0], [0, 0, 1, 0], [], []>} : vector<8x8xbf16>, vector<8x8xbf16>, vector<8x8xf32> -> vector<8x8xf32>
    %cst_58 = arith.constant 0.353553385 : f32
    %114 = vector.broadcast %cst_58 : f32 to vector<8x8xf32>
    %115 = arith.mulf %113, %114 : vector<8x8xf32>
    %116 = vector.broadcast %43 : vector<1x8xf32> to vector<8x8xf32>
    %117 = arith.addf %115, %116 : vector<8x8xf32>
    %cst_59 = arith.constant dense<0xFF800000> : vector<8xf32>
    %118 = vector.multi_reduction <maximumf>, %117, %cst_59 [1] : vector<8x8xf32> to vector<8xf32>
    %119 = vector.shape_cast %118 : vector<8xf32> to vector<8x1xf32>
    %120 = vector.broadcast %119 : vector<8x1xf32> to vector<8x8xf32>
    %121 = arith.subf %117, %120 : vector<8x8xf32>
    %122 = math.exp %121 : vector<8x8xf32>
    %cst_60 = arith.constant dense<0.000000e+00> : vector<8xf32>
    %123 = vector.multi_reduction <add>, %122, %cst_60 [1] : vector<8x8xf32> to vector<8xf32>
    %124 = vector.shape_cast %123 : vector<8xf32> to vector<8x1xf32>
    %125 = tpu.reciprocal %124 {approx = true} : vector<8x1xf32> -> vector<8x1xf32>
    %126 = vector.broadcast %125 : vector<8x1xf32> to vector<8x8xf32>
    %127 = arith.mulf %122, %126 : vector<8x8xf32>
    %128 = arith.truncf %127 : vector<8x8xf32> to vector<8x8xbf16>
    %cst_61 = arith.constant dense<0.000000e+00> : vector<8x8xf32>
    %129 = tpu.matmul %128, %112, %cst_61 {dimension_numbers = #tpu.dot_dimension_numbers<[1], [0], [0], [1], [0, 0, 1, 1], [], []>} : vector<8x8xbf16>, vector<8x8xbf16>, vector<8x8xf32> -> vector<8x8xf32>
    %130 = arith.truncf %129 : vector<8x8xf32> to vector<8x8xbf16>
    %c0_62 = arith.constant 0 : index
    %c24_63 = arith.constant 24 : index
    %131 = vector.load %arg19[%c0_62, %c24_63] : memref<8x32xbf16, #tpu.memory_space<vmem>>, vector<8x8xbf16>
    tpu.vector_store %arg19[%c0_62, %c24_63], %130 {strides = array<i32>} : memref<8x32xbf16, #tpu.memory_space<vmem>>, vector<8x8xbf16>,
    %c0_64 = arith.constant 0 : index
    %c0_65 = arith.constant 0 : index
    %132 = vector.load %arg19[%c0_64, %c0_65] : memref<8x32xbf16, #tpu.memory_space<vmem>>, vector<8x32xbf16>
    %c0_66 = arith.constant 0 : index
    %c0_67 = arith.constant 0 : index
    %133 = vector.load %arg7[%c0_66, %c0_67] : memref<32x32xbf16, #tpu.memory_space<vmem>>, vector<32x32xbf16>
    %cst_68 = arith.constant dense<0.000000e+00> : vector<8x32xf32>
    %134 = tpu.matmul %132, %133, %cst_68 {dimension_numbers = #tpu.dot_dimension_numbers<[1], [0], [0], [1], [0, 0, 1, 1], [], []>} : vector<8x32xbf16>, vector<32x32xbf16>, vector<8x32xf32> -> vector<8x32xf32>
    %c0_69 = arith.constant 0 : index
    %c0_70 = arith.constant 0 : index
    %135 = vector.load %arg8[%c0_69, %c0_70] : memref<1x32xf32, #tpu.memory_space<vmem>>, vector<1x32xf32>
    %136 = vector.broadcast %135 : vector<1x32xf32> to vector<8x32xf32>
    %137 = arith.addf %134, %136 : vector<8x32xf32>
    %138 = arith.addf %137, %28 : vector<8x32xf32>
    %c0_71 = arith.constant 0 : index
    %c0_72 = arith.constant 0 : index
    %139 = vector.load %arg9[%c0_71, %c0_72] : memref<1x32xf32, #tpu.memory_space<vmem>>, vector<1x32xf32>
    %c0_73 = arith.constant 0 : index
    %c0_74 = arith.constant 0 : index
    %140 = vector.load %arg10[%c0_73, %c0_74] : memref<1x32xf32, #tpu.memory_space<vmem>>, vector<1x32xf32>
    %cst_75 = arith.constant dense<0.000000e+00> : vector<8xf32>
    %141 = vector.multi_reduction <add>, %138, %cst_75 [1] : vector<8x32xf32> to vector<8xf32>
    %142 = vector.shape_cast %141 : vector<8xf32> to vector<8x1xf32>
    %cst_76 = arith.constant 3.200000e+01 : f32
    %143 = vector.broadcast %cst_76 : f32 to vector<8x1xf32>
    %144 = arith.divf %142, %143 : vector<8x1xf32>
    %145 = vector.broadcast %144 : vector<8x1xf32> to vector<8x32xf32>
    %146 = arith.subf %138, %145 : vector<8x32xf32>
    %147 = vector.broadcast %144 : vector<8x1xf32> to vector<8x32xf32>
    %148 = arith.subf %138, %147 : vector<8x32xf32>
    %149 = arith.mulf %146, %148 : vector<8x32xf32>
    %cst_77 = arith.constant dense<0.000000e+00> : vector<8xf32>
    %150 = vector.multi_reduction <add>, %149, %cst_77 [1] : vector<8x32xf32> to vector<8xf32>
    %151 = vector.shape_cast %150 : vector<8xf32> to vector<8x1xf32>
    %cst_78 = arith.constant 3.200000e+01 : f32
    %152 = vector.broadcast %cst_78 : f32 to vector<8x1xf32>
    %153 = arith.divf %151, %152 : vector<8x1xf32>
    %154 = vector.broadcast %144 : vector<8x1xf32> to vector<8x32xf32>
    %155 = arith.subf %138, %154 : vector<8x32xf32>
    %cst_79 = arith.constant 9.99999996E-13 : f32
    %156 = vector.broadcast %cst_79 : f32 to vector<8x1xf32>
    %157 = arith.addf %153, %156 : vector<8x1xf32>
    %158 = math.rsqrt %157 : vector<8x1xf32>
    %159 = vector.broadcast %158 : vector<8x1xf32> to vector<8x32xf32>
    %160 = arith.mulf %155, %159 : vector<8x32xf32>
    %161 = vector.broadcast %139 : vector<1x32xf32> to vector<8x32xf32>
    %162 = arith.mulf %160, %161 : vector<8x32xf32>
    %163 = vector.broadcast %140 : vector<1x32xf32> to vector<8x32xf32>
    %164 = arith.addf %162, %163 : vector<8x32xf32>
    %165 = arith.truncf %164 : vector<8x32xf32> to vector<8x32xbf16>
    %c0_80 = arith.constant 0 : index
    %c0_81 = arith.constant 0 : index
    %166 = vector.load %arg11[%c0_80, %c0_81] : memref<32x64xbf16, #tpu.memory_space<vmem>>, vector<32x64xbf16>
    %cst_82 = arith.constant dense<0.000000e+00> : vector<8x64xf32>
    %167 = tpu.matmul %165, %166, %cst_82 {dimension_numbers = #tpu.dot_dimension_numbers<[1], [0], [0], [1], [0, 0, 1, 1], [], []>} : vector<8x32xbf16>, vector<32x64xbf16>, vector<8x64xf32> -> vector<8x64xf32>
    %c0_83 = arith.constant 0 : index
    %c0_84 = arith.constant 0 : index
    %168 = vector.load %arg12[%c0_83, %c0_84] : memref<1x64xf32, #tpu.memory_space<vmem>>, vector<1x64xf32>
    %169 = vector.broadcast %168 : vector<1x64xf32> to vector<8x64xf32>
    %170 = arith.addf %167, %169 : vector<8x64xf32>
    %171 = arith.mulf %170, %170 : vector<8x64xf32>
    %172 = arith.mulf %170, %171 : vector<8x64xf32>
    %cst_85 = arith.constant 4.471500e-02 : f32
    %173 = vector.broadcast %cst_85 : f32 to vector<8x64xf32>
    %174 = arith.mulf %173, %172 : vector<8x64xf32>
    %175 = arith.addf %170, %174 : vector<8x64xf32>
    %cst_86 = arith.constant 0.797884583 : f32
    %176 = vector.broadcast %cst_86 : f32 to vector<8x64xf32>
    %177 = arith.mulf %176, %175 : vector<8x64xf32>
    %178 = math.tanh %177 : vector<8x64xf32>
    %cst_87 = arith.constant 1.000000e+00 : f32
    %179 = vector.broadcast %cst_87 : f32 to vector<8x64xf32>
    %180 = arith.addf %179, %178 : vector<8x64xf32>
    %cst_88 = arith.constant 5.000000e-01 : f32
    %181 = vector.broadcast %cst_88 : f32 to vector<8x64xf32>
    %182 = arith.mulf %181, %180 : vector<8x64xf32>
    %183 = arith.mulf %170, %182 : vector<8x64xf32>
    %184 = arith.truncf %183 : vector<8x64xf32> to vector<8x64xbf16>
    %c0_89 = arith.constant 0 : index
    %c0_90 = arith.constant 0 : index
    %185 = vector.load %arg13[%c0_89, %c0_90] : memref<64x32xbf16, #tpu.memory_space<vmem>>, vector<64x32xbf16>
    %cst_91 = arith.constant dense<0.000000e+00> : vector<8x32xf32>
    %186 = tpu.matmul %184, %185, %cst_91 {dimension_numbers = #tpu.dot_dimension_numbers<[1], [0], [0], [1], [0, 0, 1, 1], [], []>} : vector<8x64xbf16>, vector<64x32xbf16>, vector<8x32xf32> -> vector<8x32xf32>
    %c0_92 = arith.constant 0 : index
    %c0_93 = arith.constant 0 : index
    %187 = vector.load %arg14[%c0_92, %c0_93] : memref<1x32xf32, #tpu.memory_space<vmem>>, vector<1x32xf32>
    %188 = vector.broadcast %187 : vector<1x32xf32> to vector<8x32xf32>
    %189 = arith.addf %186, %188 : vector<8x32xf32>
    %190 = arith.addf %189, %164 : vector<8x32xf32>
    %c0_94 = arith.constant 0 : index
    %c0_95 = arith.constant 0 : index
    %191 = vector.load %arg15[%c0_94, %c0_95] : memref<1x32xf32, #tpu.memory_space<vmem>>, vector<1x32xf32>
    %c0_96 = arith.constant 0 : index
    %c0_97 = arith.constant 0 : index
    %192 = vector.load %arg16[%c0_96, %c0_97] : memref<1x32xf32, #tpu.memory_space<vmem>>, vector<1x32xf32>
    %cst_98 = arith.constant dense<0.000000e+00> : vector<8xf32>
    %193 = vector.multi_reduction <add>, %190, %cst_98 [1] : vector<8x32xf32> to vector<8xf32>
    %194 = vector.shape_cast %193 : vector<8xf32> to vector<8x1xf32>
    %cst_99 = arith.constant 3.200000e+01 : f32
    %195 = vector.broadcast %cst_99 : f32 to vector<8x1xf32>
    %196 = arith.divf %194, %195 : vector<8x1xf32>
    %197 = vector.broadcast %196 : vector<8x1xf32> to vector<8x32xf32>
    %198 = arith.subf %190, %197 : vector<8x32xf32>
    %199 = vector.broadcast %196 : vector<8x1xf32> to vector<8x32xf32>
    %200 = arith.subf %190, %199 : vector<8x32xf32>
    %201 = arith.mulf %198, %200 : vector<8x32xf32>
    %cst_100 = arith.constant dense<0.000000e+00> : vector<8xf32>
    %202 = vector.multi_reduction <add>, %201, %cst_100 [1] : vector<8x32xf32> to vector<8xf32>
    %203 = vector.shape_cast %202 : vector<8xf32> to vector<8x1xf32>
    %cst_101 = arith.constant 3.200000e+01 : f32
    %204 = vector.broadcast %cst_101 : f32 to vector<8x1xf32>
    %205 = arith.divf %203, %204 : vector<8x1xf32>
    %206 = vector.broadcast %196 : vector<8x1xf32> to vector<8x32xf32>
    %207 = arith.subf %190, %206 : vector<8x32xf32>
    %cst_102 = arith.constant 9.99999996E-13 : f32
    %208 = vector.broadcast %cst_102 : f32 to vector<8x1xf32>
    %209 = arith.addf %205, %208 : vector<8x1xf32>
    %210 = math.rsqrt %209 : vector<8x1xf32>
    %211 = vector.broadcast %210 : vector<8x1xf32> to vector<8x32xf32>
    %212 = arith.mulf %207, %211 : vector<8x32xf32>
    %213 = vector.broadcast %191 : vector<1x32xf32> to vector<8x32xf32>
    %214 = arith.mulf %212, %213 : vector<8x32xf32>
    %215 = vector.broadcast %192 : vector<1x32xf32> to vector<8x32xf32>
    %216 = arith.addf %214, %215 : vector<8x32xf32>
    %217 = vector.shape_cast %216 : vector<8x32xf32> to vector<1x8x32xf32>
    %218 = arith.truncf %217 : vector<1x8x32xf32> to vector<1x8x32xbf16>
    %c0_103 = arith.constant 0 : index
    %c0_104 = arith.constant 0 : index
    %c0_105 = arith.constant 0 : index
    %219 = vector.load %arg17[%c0_103, %c0_104, %c0_105] : memref<1x8x32xbf16, #tpu.memory_space<vmem>>, vector<1x8x32xbf16>
    tpu.vector_store %arg17[%c0_103, %c0_104, %c0_105], %218 {strides = array<i32>} : memref<1x8x32xbf16, #tpu.memory_space<vmem>>, vector<1x8x32xbf16>,
    return
  }
  func.func @transform_0(%arg0: i32) -> (i32, i32, i32) {
    %c0_i32 = arith.constant 0 : i32
    %c0_i32_0 = arith.constant 0 : i32
    %c0_i32_1 = arith.constant 0 : i32
    return %arg0, %c0_i32, %c0_i32_0 : i32, i32, i32
  }
  func.func @transform_1(%arg0: i32) -> (i32, i32, i32) {
    %c0_i32 = arith.constant 0 : i32
    %c0_i32_0 = arith.constant 0 : i32
    %c0_i32_1 = arith.constant 0 : i32
    return %arg0, %c0_i32, %c0_i32_0 : i32, i32, i32
  }
  func.func @transform_2(%arg0: i32) -> (i32, i32) {
    %c0_i32 = arith.constant 0 : i32
    %c0_i32_0 = arith.constant 0 : i32
    %c0_i32_1 = arith.constant 0 : i32
    return %c0_i32, %c0_i32_0 : i32, i32
  }
  func.func @transform_3(%arg0: i32) -> (i32, i32) {
    %c0_i32 = arith.constant 0 : i32
    %c0_i32_0 = arith.constant 0 : i32
    %c0_i32_1 = arith.constant 0 : i32
    return %c0_i32, %c0_i32_0 : i32, i32
  }
  func.func @transform_4(%arg0: i32) -> (i32, i32) {
    %c0_i32 = arith.constant 0 : i32
    %c0_i32_0 = arith.constant 0 : i32
    %c0_i32_1 = arith.constant 0 : i32
    return %c0_i32, %c0_i32_0 : i32, i32
  }
  func.func @transform_5(%arg0: i32) -> (i32, i32) {
    %c0_i32 = arith.constant 0 : i32
    %c0_i32_0 = arith.constant 0 : i32
    %c0_i32_1 = arith.constant 0 : i32
    return %c0_i32, %c0_i32_0 : i32, i32
  }
  func.func @transform_6(%arg0: i32) -> (i32, i32) {
    %c0_i32 = arith.constant 0 : i32
    %c0_i32_0 = arith.constant 0 : i32
    %c0_i32_1 = arith.constant 0 : i32
    return %c0_i32, %c0_i32_0 : i32, i32
  }
  func.func @transform_7(%arg0: i32) -> (i32, i32) {
    %c0_i32 = arith.constant 0 : i32
    %c0_i32_0 = arith.constant 0 : i32
    %c0_i32_1 = arith.constant 0 : i32
    return %c0_i32, %c0_i32_0 : i32, i32
  }
  func.func @transform_8(%arg0: i32) -> (i32, i32) {
    %c0_i32 = arith.constant 0 : i32
    %c0_i32_0 = arith.constant 0 : i32
    %c0_i32_1 = arith.constant 0 : i32
    return %c0_i32, %c0_i32_0 : i32, i32
  }
  func.func @transform_9(%arg0: i32) -> (i32, i32) {
    %c0_i32 = arith.constant 0 : i32
    %c0_i32_0 = arith.constant 0 : i32
    %c0_i32_1 = arith.constant 0 : i32
    return %c0_i32, %c0_i32_0 : i32, i32
  }
  func.func @transform_10(%arg0: i32) -> (i32, i32) {
    %c0_i32 = arith.constant 0 : i32
    %c0_i32_0 = arith.constant 0 : i32
    %c0_i32_1 = arith.constant 0 : i32
    return %c0_i32, %c0_i32_0 : i32, i32
  }
  func.func @transform_11(%arg0: i32) -> (i32, i32) {
    %c0_i32 = arith.constant 0 : i32
    %c0_i32_0 = arith.constant 0 : i32
    %c0_i32_1 = arith.constant 0 : i32
    return %c0_i32, %c0_i32_0 : i32, i32
  }
  func.func @transform_12(%arg0: i32) -> (i32, i32) {
    %c0_i32 = arith.constant 0 : i32
    %c0_i32_0 = arith.constant 0 : i32
    %c0_i32_1 = arith.constant 0 : i32
    return %c0_i32, %c0_i32_0 : i32, i32
  }
  func.func @transform_13(%arg0: i32) -> (i32, i32) {
    %c0_i32 = arith.constant 0 : i32
    %c0_i32_0 = arith.constant 0 : i32
    %c0_i32_1 = arith.constant 0 : i32
    return %c0_i32, %c0_i32_0 : i32, i32
  }
  func.func @transform_14(%arg0: i32) -> (i32, i32) {
    %c0_i32 = arith.constant 0 : i32
    %c0_i32_0 = arith.constant 0 : i32
    %c0_i32_1 = arith.constant 0 : i32
    return %c0_i32, %c0_i32_0 : i32, i32
  }
  func.func @transform_15(%arg0: i32) -> (i32, i32) {
    %c0_i32 = arith.constant 0 : i32
    %c0_i32_0 = arith.constant 0 : i32
    %c0_i32_1 = arith.constant 0 : i32
    return %c0_i32, %c0_i32_0 : i32, i32
  }
  func.func @transform_16(%arg0: i32) -> (i32, i32, i32) {
    %c0_i32 = arith.constant 0 : i32
    %c0_i32_0 = arith.constant 0 : i32
    %c0_i32_1 = arith.constant 0 : i32
    return %arg0, %c0_i32, %c0_i32_0 : i32, i32, i32
  }
}

module attributes {stable_mosaic.version = 11 : i64} {
  func.func @cls_logsoftmax_ce_kernel(%arg0: i32, %arg1: memref<8x32xbf16, #tpu.memory_space<vmem>>, %arg2: memref<32x3xbf16, #tpu.memory_space<vmem>>, %arg3: memref<1x3xf32, #tpu.memory_space<vmem>>, %arg4: memref<8x1xi32, #tpu.memory_space<vmem>>, %arg5: memref<8x1xi32, #tpu.memory_space<vmem>>, %arg6: memref<8x3xf32, #tpu.memory_space<vmem>>, %arg7: memref<1x1xf32, #tpu.memory_space<vmem>>, %arg8: memref<1x1xf32, #tpu.memory_space<vmem>>, %arg9: memref<1x1xf32, #tpu.memory_space<vmem>>) attributes {dimension_semantics = [#tpu.dimension_semantics<arbitrary>], iteration_bounds = array<i64: 2>, scalar_prefetch = 0 : i64, scratch_operands = 2 : i64, tpu.core_type = #tpu.core_type<tc>, window_params = [{transform_indices = @transform_0, window_bounds = array<i64: 8, 32>}, {pipeline_mode = #tpu.pipeline_mode<synchronous>, transform_indices = @transform_1, window_bounds = array<i64: 32, 3>}, {pipeline_mode = #tpu.pipeline_mode<synchronous>, transform_indices = @transform_2, window_bounds = array<i64: 1, 3>}, {transform_indices = @transform_3, window_bounds = array<i64: 8, 1>}, {transform_indices = @transform_4, window_bounds = array<i64: 8, 1>}, {transform_indices = @transform_5, window_bounds = array<i64: 8, 3>}, {pipeline_mode = #tpu.pipeline_mode<synchronous>, transform_indices = @transform_6, window_bounds = array<i64: 1, 1>}]} {
    %c0_i32 = arith.constant 0 : i32
    %0 = arith.cmpi eq, %arg0, %c0_i32 : i32
    %1 = arith.extui %0 : i1 to i32
    %c0_i32_0 = arith.constant 0 : i32
    %2 = arith.cmpi ne, %1, %c0_i32_0 : i32
    scf.if %2 {
      %cst_31 = arith.constant 0.000000e+00 : f32
      %64 = vector.broadcast %cst_31 : f32 to vector<1x1xf32>
      %c0_32 = arith.constant 0 : index
      %c0_33 = arith.constant 0 : index
      %65 = vector.load %arg8[%c0_32, %c0_33] : memref<1x1xf32, #tpu.memory_space<vmem>>, vector<1x1xf32>
      tpu.vector_store %arg8[%c0_32, %c0_33], %64 {strides = array<i32>} : memref<1x1xf32, #tpu.memory_space<vmem>>, vector<1x1xf32>,
      %cst_34 = arith.constant 0.000000e+00 : f32
      %66 = vector.broadcast %cst_34 : f32 to vector<1x1xf32>
      %c0_35 = arith.constant 0 : index
      %c0_36 = arith.constant 0 : index
      %67 = vector.load %arg9[%c0_35, %c0_36] : memref<1x1xf32, #tpu.memory_space<vmem>>, vector<1x1xf32>
      tpu.vector_store %arg9[%c0_35, %c0_36], %66 {strides = array<i32>} : memref<1x1xf32, #tpu.memory_space<vmem>>, vector<1x1xf32>,
    } else {
    }
    %c0 = arith.constant 0 : index
    %c0_1 = arith.constant 0 : index
    %3 = vector.load %arg1[%c0, %c0_1] : memref<8x32xbf16, #tpu.memory_space<vmem>>, vector<8x32xbf16>
    %c0_2 = arith.constant 0 : index
    %c0_3 = arith.constant 0 : index
    %4 = vector.load %arg2[%c0_2, %c0_3] : memref<32x3xbf16, #tpu.memory_space<vmem>>, vector<32x3xbf16>
    %cst = arith.constant dense<0.000000e+00> : vector<8x3xf32>
    %5 = tpu.matmul %3, %4, %cst {dimension_numbers = #tpu.dot_dimension_numbers<[1], [0], [0], [1], [0, 0, 1, 1], [], []>} : vector<8x32xbf16>, vector<32x3xbf16>, vector<8x3xf32> -> vector<8x3xf32>
    %c0_4 = arith.constant 0 : index
    %c0_5 = arith.constant 0 : index
    %6 = vector.load %arg3[%c0_4, %c0_5] : memref<1x3xf32, #tpu.memory_space<vmem>>, vector<1x3xf32>
    %7 = vector.broadcast %6 : vector<1x3xf32> to vector<8x3xf32>
    %8 = arith.addf %5, %7 : vector<8x3xf32>
    %cst_6 = arith.constant dense<0xFF800000> : vector<8xf32>
    %9 = vector.multi_reduction <maximumf>, %8, %cst_6 [1] : vector<8x3xf32> to vector<8xf32>
    %10 = vector.shape_cast %9 : vector<8xf32> to vector<8x1xf32>
    %11 = vector.broadcast %10 : vector<8x1xf32> to vector<8x3xf32>
    %12 = arith.subf %8, %11 : vector<8x3xf32>
    %13 = math.exp %12 : vector<8x3xf32>
    %cst_7 = arith.constant dense<0.000000e+00> : vector<8xf32>
    %14 = vector.multi_reduction <add>, %13, %cst_7 [1] : vector<8x3xf32> to vector<8xf32>
    %15 = vector.shape_cast %14 : vector<8xf32> to vector<8x1xf32>
    %16 = math.log %15 : vector<8x1xf32>
    %17 = vector.broadcast %16 : vector<8x1xf32> to vector<8x3xf32>
    %18 = arith.subf %12, %17 : vector<8x3xf32>
    %c0_8 = arith.constant 0 : index
    %c0_9 = arith.constant 0 : index
    %19 = vector.load %arg6[%c0_8, %c0_9] : memref<8x3xf32, #tpu.memory_space<vmem>>, vector<8x3xf32>
    tpu.vector_store %arg6[%c0_8, %c0_9], %18 {strides = array<i32>} : memref<8x3xf32, #tpu.memory_space<vmem>>, vector<8x3xf32>,
    %cst_10 = arith.constant dense<0xFF800000> : vector<8xf32>
    %20 = vector.multi_reduction <maximumf>, %18, %cst_10 [1] : vector<8x3xf32> to vector<8xf32>
    %21 = vector.shape_cast %20 : vector<8xf32> to vector<8x1xf32>
    %22 = vector.broadcast %21 : vector<8x1xf32> to vector<8x3xf32>
    %23 = arith.subf %18, %22 : vector<8x3xf32>
    %24 = math.exp %23 : vector<8x3xf32>
    %cst_11 = arith.constant dense<0.000000e+00> : vector<8xf32>
    %25 = vector.multi_reduction <add>, %24, %cst_11 [1] : vector<8x3xf32> to vector<8xf32>
    %26 = vector.shape_cast %25 : vector<8xf32> to vector<8x1xf32>
    %27 = math.log %26 : vector<8x1xf32>
    %28 = vector.broadcast %27 : vector<8x1xf32> to vector<8x3xf32>
    %29 = arith.subf %23, %28 : vector<8x3xf32>
    %c0_12 = arith.constant 0 : index
    %c0_13 = arith.constant 0 : index
    %30 = vector.load %arg4[%c0_12, %c0_13] : memref<8x1xi32, #tpu.memory_space<vmem>>, vector<8x1xi32>
    %c0_14 = arith.constant 0 : index
    %c0_15 = arith.constant 0 : index
    %31 = vector.load %arg5[%c0_14, %c0_15] : memref<8x1xi32, #tpu.memory_space<vmem>>, vector<8x1xi32>
    %c1_i32 = arith.constant 1 : i32
    %32 = vector.broadcast %c1_i32 : i32 to vector<8x1xi32>
    %33 = arith.cmpi eq, %31, %32 : vector<8x1xi32>
    %c-100_i32 = arith.constant -100 : i32
    %34 = vector.broadcast %c-100_i32 : i32 to vector<8x1xi32>
    %35 = arith.select %33, %30, %34 : vector<8x1xi1>, vector<8x1xi32>
    %36 = tpu.iota {dimensions = array<i32: 1>} : vector<8x3xi32>
    %37 = vector.broadcast %35 : vector<8x1xi32> to vector<8x3xi32>
    %38 = arith.cmpi eq, %36, %37 : vector<8x3xi32>
    %39 = arith.extui %38 : vector<8x3xi1> to vector<8x3xi32>
    %40 = arith.sitofp %39 : vector<8x3xi32> to vector<8x3xf32>
    %41 = arith.mulf %29, %40 : vector<8x3xf32>
    %cst_16 = arith.constant dense<0.000000e+00> : vector<8xf32>
    %42 = vector.multi_reduction <add>, %41, %cst_16 [1] : vector<8x3xf32> to vector<8xf32>
    %43 = vector.shape_cast %42 : vector<8xf32> to vector<8x1xf32>
    %cst_17 = arith.constant 0.000000e+00 : f32
    %44 = vector.broadcast %cst_17 : f32 to vector<8x1xf32>
    %45 = arith.subf %44, %43 : vector<8x1xf32>
    %c-100_i32_18 = arith.constant -100 : i32
    %46 = vector.broadcast %c-100_i32_18 : i32 to vector<8x1xi32>
    %47 = arith.cmpi ne, %35, %46 : vector<8x1xi32>
    %48 = arith.extui %47 : vector<8x1xi1> to vector<8x1xi32>
    %49 = arith.sitofp %48 : vector<8x1xi32> to vector<8x1xf32>
    %c0_19 = arith.constant 0 : index
    %c0_20 = arith.constant 0 : index
    %50 = vector.load %arg8[%c0_19, %c0_20] : memref<1x1xf32, #tpu.memory_space<vmem>>, vector<1x1xf32>
    %51 = arith.mulf %45, %49 : vector<8x1xf32>
    %cst_21 = arith.constant dense<0.000000e+00> : vector<1xf32>
    %52 = vector.multi_reduction <add>, %51, %cst_21 [0] : vector<8x1xf32> to vector<1xf32>
    %53 = vector.shape_cast %52 : vector<1xf32> to vector<1x1xf32>
    %54 = arith.addf %50, %53 : vector<1x1xf32>
    %c0_22 = arith.constant 0 : index
    %c0_23 = arith.constant 0 : index
    %55 = vector.load %arg8[%c0_22, %c0_23] : memref<1x1xf32, #tpu.memory_space<vmem>>, vector<1x1xf32>
    tpu.vector_store %arg8[%c0_22, %c0_23], %54 {strides = array<i32>} : memref<1x1xf32, #tpu.memory_space<vmem>>, vector<1x1xf32>,
    %c0_24 = arith.constant 0 : index
    %c0_25 = arith.constant 0 : index
    %56 = vector.load %arg9[%c0_24, %c0_25] : memref<1x1xf32, #tpu.memory_space<vmem>>, vector<1x1xf32>
    %cst_26 = arith.constant dense<0.000000e+00> : vector<1xf32>
    %57 = vector.multi_reduction <add>, %49, %cst_26 [0] : vector<8x1xf32> to vector<1xf32>
    %58 = vector.shape_cast %57 : vector<1xf32> to vector<1x1xf32>
    %59 = arith.addf %56, %58 : vector<1x1xf32>
    %c0_27 = arith.constant 0 : index
    %c0_28 = arith.constant 0 : index
    %60 = vector.load %arg9[%c0_27, %c0_28] : memref<1x1xf32, #tpu.memory_space<vmem>>, vector<1x1xf32>
    tpu.vector_store %arg9[%c0_27, %c0_28], %59 {strides = array<i32>} : memref<1x1xf32, #tpu.memory_space<vmem>>, vector<1x1xf32>,
    %c1_i32_29 = arith.constant 1 : i32
    %61 = arith.cmpi eq, %arg0, %c1_i32_29 : i32
    %62 = arith.extui %61 : i1 to i32
    %c0_i32_30 = arith.constant 0 : i32
    %63 = arith.cmpi ne, %62, %c0_i32_30 : i32
    scf.if %63 {
      %c0_31 = arith.constant 0 : index
      %c0_32 = arith.constant 0 : index
      %64 = vector.load %arg8[%c0_31, %c0_32] : memref<1x1xf32, #tpu.memory_space<vmem>>, vector<1x1xf32>
      %c0_33 = arith.constant 0 : index
      %c0_34 = arith.constant 0 : index
      %65 = vector.load %arg9[%c0_33, %c0_34] : memref<1x1xf32, #tpu.memory_space<vmem>>, vector<1x1xf32>
      %66 = arith.divf %64, %65 : vector<1x1xf32>
      %c0_35 = arith.constant 0 : index
      %c0_36 = arith.constant 0 : index
      %67 = vector.load %arg7[%c0_35, %c0_36] : memref<1x1xf32, #tpu.memory_space<vmem>>, vector<1x1xf32>
      tpu.vector_store %arg7[%c0_35, %c0_36], %66 {strides = array<i32>} : memref<1x1xf32, #tpu.memory_space<vmem>>, vector<1x1xf32>,
    } else {
    }
    return
  }
  func.func @transform_0(%arg0: i32) -> (i32, i32) {
    %c0_i32 = arith.constant 0 : i32
    %c0_i32_0 = arith.constant 0 : i32
    return %arg0, %c0_i32 : i32, i32
  }
  func.func @transform_1(%arg0: i32) -> (i32, i32) {
    %c0_i32 = arith.constant 0 : i32
    %c0_i32_0 = arith.constant 0 : i32
    %c0_i32_1 = arith.constant 0 : i32
    return %c0_i32, %c0_i32_0 : i32, i32
  }
  func.func @transform_2(%arg0: i32) -> (i32, i32) {
    %c0_i32 = arith.constant 0 : i32
    %c0_i32_0 = arith.constant 0 : i32
    %c0_i32_1 = arith.constant 0 : i32
    return %c0_i32, %c0_i32_0 : i32, i32
  }
  func.func @transform_3(%arg0: i32) -> (i32, i32) {
    %c0_i32 = arith.constant 0 : i32
    %c0_i32_0 = arith.constant 0 : i32
    return %arg0, %c0_i32 : i32, i32
  }
  func.func @transform_4(%arg0: i32) -> (i32, i32) {
    %c0_i32 = arith.constant 0 : i32
    %c0_i32_0 = arith.constant 0 : i32
    return %arg0, %c0_i32 : i32, i32
  }
  func.func @transform_5(%arg0: i32) -> (i32, i32) {
    %c0_i32 = arith.constant 0 : i32
    %c0_i32_0 = arith.constant 0 : i32
    return %arg0, %c0_i32 : i32, i32
  }
  func.func @transform_6(%arg0: i32) -> (i32, i32) {
    %c0_i32 = arith.constant 0 : i32
    %c0_i32_0 = arith.constant 0 : i32
    %c0_i32_1 = arith.constant 0 : i32
    return %c0_i32, %c0_i32_0 : i32, i32
  }
}

module attributes {stable_mosaic.version = 11 : i64} {
  func.func @encoder_layer_kernel(%arg0: i32, %arg1: memref<1x1x8xf32, #tpu.memory_space<vmem>>, %arg2: memref<1x8x32xbf16, #tpu.memory_space<vmem>>, %arg3: memref<32x96xbf16, #tpu.memory_space<vmem>>, %arg4: memref<1x96xf32, #tpu.memory_space<vmem>>, %arg5: memref<32x32xbf16, #tpu.memory_space<vmem>>, %arg6: memref<1x32xf32, #tpu.memory_space<vmem>>, %arg7: memref<1x32xf32, #tpu.memory_space<vmem>>, %arg8: memref<1x32xf32, #tpu.memory_space<vmem>>, %arg9: memref<32x64xbf16, #tpu.memory_space<vmem>>, %arg10: memref<1x64xf32, #tpu.memory_space<vmem>>, %arg11: memref<64x32xbf16, #tpu.memory_space<vmem>>, %arg12: memref<1x32xf32, #tpu.memory_space<vmem>>, %arg13: memref<1x32xf32, #tpu.memory_space<vmem>>, %arg14: memref<1x32xf32, #tpu.memory_space<vmem>>, %arg15: memref<1x8x32xbf16, #tpu.memory_space<vmem>>, %arg16: memref<8x96xbf16, #tpu.memory_space<vmem>>, %arg17: memref<8x32xbf16, #tpu.memory_space<vmem>>) attributes {dimension_semantics = [#tpu.dimension_semantics<parallel>], iteration_bounds = array<i64: 2>, scalar_prefetch = 0 : i64, scratch_operands = 2 : i64, tpu.core_type = #tpu.core_type<tc>, window_params = [{transform_indices = @transform_0, window_bounds = array<i64: 1, 1, 8>}, {transform_indices = @transform_1, window_bounds = array<i64: 1, 8, 32>}, {pipeline_mode = #tpu.pipeline_mode<synchronous>, transform_indices = @transform_2, window_bounds = array<i64: 32, 96>}, {pipeline_mode = #tpu.pipeline_mode<synchronous>, transform_indices = @transform_3, window_bounds = array<i64: 1, 96>}, {pipeline_mode = #tpu.pipeline_mode<synchronous>, transform_indices = @transform_4, window_bounds = array<i64: 32, 32>}, {pipeline_mode = #tpu.pipeline_mode<synchronous>, transform_indices = @transform_5, window_bounds = array<i64: 1, 32>}, {pipeline_mode = #tpu.pipeline_mode<synchronous>, transform_indices = @transform_6, window_bounds = array<i64: 1, 32>}, {pipeline_mode = #tpu.pipeline_mode<synchronous>, transform_indices = @transform_7, window_bounds = array<i64: 1, 32>}, {pipeline_mode = #tpu.pipeline_mode<synchronous>, transform_indices = @transform_8, window_bounds = array<i64: 32, 64>}, {pipeline_mode = #tpu.pipeline_mode<synchronous>, transform_indices = @transform_9, window_bounds = array<i64: 1, 64>}, {pipeline_mode = #tpu.pipeline_mode<synchronous>, transform_indices = @transform_10, window_bounds = array<i64: 64, 32>}, {pipeline_mode = #tpu.pipeline_mode<synchronous>, transform_indices = @transform_11, window_bounds = array<i64: 1, 32>}, {pipeline_mode = #tpu.pipeline_mode<synchronous>, transform_indices = @transform_12, window_bounds = array<i64: 1, 32>}, {pipeline_mode = #tpu.pipeline_mode<synchronous>, transform_indices = @transform_13, window_bounds = array<i64: 1, 32>}, {transform_indices = @transform_14, window_bounds = array<i64: 1, 8, 32>}]} {
    %c0 = arith.constant 0 : index
    %c0_0 = arith.constant 0 : index
    %c0_1 = arith.constant 0 : index
    %0 = vector.load %arg2[%c0, %c0_0, %c0_1] : memref<1x8x32xbf16, #tpu.memory_space<vmem>>, vector<1x8x32xbf16>
    %1 = arith.extf %0 : vector<1x8x32xbf16> to vector<1x8x32xf32>
    %2 = vector.shape_cast %1 : vector<1x8x32xf32> to vector<8x32xf32>
    %3 = arith.truncf %2 : vector<8x32xf32> to vector<8x32xbf16>
    %c0_2 = arith.constant 0 : index
    %c0_3 = arith.constant 0 : index
    %4 = vector.load %arg3[%c0_2, %c0_3] : memref<32x96xbf16, #tpu.memory_space<vmem>>, vector<32x96xbf16>
    %cst = arith.constant dense<0.000000e+00> : vector<8x96xf32>
    %5 = tpu.matmul %3, %4, %cst {dimension_numbers = #tpu.dot_dimension_numbers<[1], [0], [0], [1], [0, 0, 1, 1], [], []>} : vector<8x32xbf16>, vector<32x96xbf16>, vector<8x96xf32> -> vector<8x96xf32>
    %c0_4 = arith.constant 0 : index
    %c0_5 = arith.constant 0 : index
    %6 = vector.load %arg4[%c0_4, %c0_5] : memref<1x96xf32, #tpu.memory_space<vmem>>, vector<1x96xf32>
    %7 = vector.broadcast %6 : vector<1x96xf32> to vector<8x96xf32>
    %8 = arith.addf %5, %7 : vector<8x96xf32>
    %9 = arith.truncf %8 : vector<8x96xf32> to vector<8x96xbf16>
    %c0_6 = arith.constant 0 : index
    %c0_7 = arith.constant 0 : index
    %10 = vector.load %arg16[%c0_6, %c0_7] : memref<8x96xbf16, #tpu.memory_space<vmem>>, vector<8x96xbf16>
    tpu.vector_store %arg16[%c0_6, %c0_7], %9 {strides = array<i32>} : memref<8x96xbf16, #tpu.memory_space<vmem>>, vector<8x96xbf16>,
    %c0_8 = arith.constant 0 : index
    %c0_9 = arith.constant 0 : index
    %c0_10 = arith.constant 0 : index
    %11 = vector.load %arg1[%c0_8, %c0_9, %c0_10] : memref<1x1x8xf32, #tpu.memory_space<vmem>>, vector<1x1x8xf32>
    %12 = vector.shape_cast %11 : vector<1x1x8xf32> to vector<1x8xf32>
    %cst_11 = arith.constant 0.000000e+00 : f32
    %13 = vector.broadcast %cst_11 : f32 to vector<1x8xf32>
    %14 = arith.cmpf ogt, %12, %13 : vector<1x8xf32>
    %cst_12 = arith.constant 0.000000e+00 : f32
    %cst_13 = arith.constant -3.40282347E+38 : f32
    %15 = vector.broadcast %cst_12 : f32 to vector<1x8xf32>
    %16 = vector.broadcast %cst_13 : f32 to vector<1x8xf32>
    %17 = arith.select %14, %15, %16 : vector<1x8xi1>, vector<1x8xf32>
    %c0_14 = arith.constant 0 : index
    %c0_15 = arith.constant 0 : index
    %18 = vector.load %arg16[%c0_14, %c0_15] : memref<8x96xbf16, #tpu.memory_space<vmem>>, vector<8x8xbf16>
    %c0_16 = arith.constant 0 : index
    %c32 = arith.constant 32 : index
    %19 = vector.load %arg16[%c0_16, %c32] : memref<8x96xbf16, #tpu.memory_space<vmem>>, vector<8x8xbf16>
    %c0_17 = arith.constant 0 : index
    %c64 = arith.constant 64 : index
    %20 = vector.load %arg16[%c0_17, %c64] : memref<8x96xbf16, #tpu.memory_space<vmem>>, vector<8x8xbf16>
    %cst_18 = arith.constant dense<0.000000e+00> : vector<8x8xf32>
    %21 = tpu.matmul %18, %19, %cst_18 {dimension_numbers = #tpu.dot_dimension_numbers<[1], [1], [0], [0], [0, 0, 1, 0], [], []>} : vector<8x8xbf16>, vector<8x8xbf16>, vector<8x8xf32> -> vector<8x8xf32>
    %cst_19 = arith.constant 0.353553385 : f32
    %22 = vector.broadcast %cst_19 : f32 to vector<8x8xf32>
    %23 = arith.mulf %21, %22 : vector<8x8xf32>
    %24 = vector.broadcast %17 : vector<1x8xf32> to vector<8x8xf32>
    %25 = arith.addf %23, %24 : vector<8x8xf32>
    %cst_20 = arith.constant dense<0xFF800000> : vector<8xf32>
    %26 = vector.multi_reduction <maximumf>, %25, %cst_20 [1] : vector<8x8xf32> to vector<8xf32>
    %27 = vector.shape_cast %26 : vector<8xf32> to vector<8x1xf32>
    %28 = vector.broadcast %27 : vector<8x1xf32> to vector<8x8xf32>
    %29 = arith.subf %25, %28 : vector<8x8xf32>
    %30 = math.exp %29 : vector<8x8xf32>
    %cst_21 = arith.constant dense<0.000000e+00> : vector<8xf32>
    %31 = vector.multi_reduction <add>, %30, %cst_21 [1] : vector<8x8xf32> to vector<8xf32>
    %32 = vector.shape_cast %31 : vector<8xf32> to vector<8x1xf32>
    %33 = tpu.reciprocal %32 {approx = true} : vector<8x1xf32> -> vector<8x1xf32>
    %34 = vector.broadcast %33 : vector<8x1xf32> to vector<8x8xf32>
    %35 = arith.mulf %30, %34 : vector<8x8xf32>
    %36 = arith.truncf %35 : vector<8x8xf32> to vector<8x8xbf16>
    %cst_22 = arith.constant dense<0.000000e+00> : vector<8x8xf32>
    %37 = tpu.matmul %36, %20, %cst_22 {dimension_numbers = #tpu.dot_dimension_numbers<[1], [0], [0], [1], [0, 0, 1, 1], [], []>} : vector<8x8xbf16>, vector<8x8xbf16>, vector<8x8xf32> -> vector<8x8xf32>
    %38 = arith.truncf %37 : vector<8x8xf32> to vector<8x8xbf16>
    %c0_23 = arith.constant 0 : index
    %c0_24 = arith.constant 0 : index
    %39 = vector.load %arg17[%c0_23, %c0_24] : memref<8x32xbf16, #tpu.memory_space<vmem>>, vector<8x8xbf16>
    tpu.vector_store %arg17[%c0_23, %c0_24], %38 {strides = array<i32>} : memref<8x32xbf16, #tpu.memory_space<vmem>>, vector<8x8xbf16>,
    %c0_25 = arith.constant 0 : index
    %c8 = arith.constant 8 : index
    %40 = vector.load %arg16[%c0_25, %c8] : memref<8x96xbf16, #tpu.memory_space<vmem>>, vector<8x8xbf16>
    %c0_26 = arith.constant 0 : index
    %c40 = arith.constant 40 : index
    %41 = vector.load %arg16[%c0_26, %c40] : memref<8x96xbf16, #tpu.memory_space<vmem>>, vector<8x8xbf16>
    %c0_27 = arith.constant 0 : index
    %c72 = arith.constant 72 : index
    %42 = vector.load %arg16[%c0_27, %c72] : memref<8x96xbf16, #tpu.memory_space<vmem>>, vector<8x8xbf16>
    %cst_28 = arith.constant dense<0.000000e+00> : vector<8x8xf32>
    %43 = tpu.matmul %40, %41, %cst_28 {dimension_numbers = #tpu.dot_dimension_numbers<[1], [1], [0], [0], [0, 0, 1, 0], [], []>} : vector<8x8xbf16>, vector<8x8xbf16>, vector<8x8xf32> -> vector<8x8xf32>
    %cst_29 = arith.constant 0.353553385 : f32
    %44 = vector.broadcast %cst_29 : f32 to vector<8x8xf32>
    %45 = arith.mulf %43, %44 : vector<8x8xf32>
    %46 = vector.broadcast %17 : vector<1x8xf32> to vector<8x8xf32>
    %47 = arith.addf %45, %46 : vector<8x8xf32>
    %cst_30 = arith.constant dense<0xFF800000> : vector<8xf32>
    %48 = vector.multi_reduction <maximumf>, %47, %cst_30 [1] : vector<8x8xf32> to vector<8xf32>
    %49 = vector.shape_cast %48 : vector<8xf32> to vector<8x1xf32>
    %50 = vector.broadcast %49 : vector<8x1xf32> to vector<8x8xf32>
    %51 = arith.subf %47, %50 : vector<8x8xf32>
    %52 = math.exp %51 : vector<8x8xf32>
    %cst_31 = arith.constant dense<0.000000e+00> : vector<8xf32>
    %53 = vector.multi_reduction <add>, %52, %cst_31 [1] : vector<8x8xf32> to vector<8xf32>
    %54 = vector.shape_cast %53 : vector<8xf32> to vector<8x1xf32>
    %55 = tpu.reciprocal %54 {approx = true} : vector<8x1xf32> -> vector<8x1xf32>
    %56 = vector.broadcast %55 : vector<8x1xf32> to vector<8x8xf32>
    %57 = arith.mulf %52, %56 : vector<8x8xf32>
    %58 = arith.truncf %57 : vector<8x8xf32> to vector<8x8xbf16>
    %cst_32 = arith.constant dense<0.000000e+00> : vector<8x8xf32>
    %59 = tpu.matmul %58, %42, %cst_32 {dimension_numbers = #tpu.dot_dimension_numbers<[1], [0], [0], [1], [0, 0, 1, 1], [], []>} : vector<8x8xbf16>, vector<8x8xbf16>, vector<8x8xf32> -> vector<8x8xf32>
    %60 = arith.truncf %59 : vector<8x8xf32> to vector<8x8xbf16>
    %c0_33 = arith.constant 0 : index
    %c8_34 = arith.constant 8 : index
    %61 = vector.load %arg17[%c0_33, %c8_34] : memref<8x32xbf16, #tpu.memory_space<vmem>>, vector<8x8xbf16>
    tpu.vector_store %arg17[%c0_33, %c8_34], %60 {strides = array<i32>} : memref<8x32xbf16, #tpu.memory_space<vmem>>, vector<8x8xbf16>,
    %c0_35 = arith.constant 0 : index
    %c16 = arith.constant 16 : index
    %62 = vector.load %arg16[%c0_35, %c16] : memref<8x96xbf16, #tpu.memory_space<vmem>>, vector<8x8xbf16>
    %c0_36 = arith.constant 0 : index
    %c48 = arith.constant 48 : index
    %63 = vector.load %arg16[%c0_36, %c48] : memref<8x96xbf16, #tpu.memory_space<vmem>>, vector<8x8xbf16>
    %c0_37 = arith.constant 0 : index
    %c80 = arith.constant 80 : index
    %64 = vector.load %arg16[%c0_37, %c80] : memref<8x96xbf16, #tpu.memory_space<vmem>>, vector<8x8xbf16>
    %cst_38 = arith.constant dense<0.000000e+00> : vector<8x8xf32>
    %65 = tpu.matmul %62, %63, %cst_38 {dimension_numbers = #tpu.dot_dimension_numbers<[1], [1], [0], [0], [0, 0, 1, 0], [], []>} : vector<8x8xbf16>, vector<8x8xbf16>, vector<8x8xf32> -> vector<8x8xf32>
    %cst_39 = arith.constant 0.353553385 : f32
    %66 = vector.broadcast %cst_39 : f32 to vector<8x8xf32>
    %67 = arith.mulf %65, %66 : vector<8x8xf32>
    %68 = vector.broadcast %17 : vector<1x8xf32> to vector<8x8xf32>
    %69 = arith.addf %67, %68 : vector<8x8xf32>
    %cst_40 = arith.constant dense<0xFF800000> : vector<8xf32>
    %70 = vector.multi_reduction <maximumf>, %69, %cst_40 [1] : vector<8x8xf32> to vector<8xf32>
    %71 = vector.shape_cast %70 : vector<8xf32> to vector<8x1xf32>
    %72 = vector.broadcast %71 : vector<8x1xf32> to vector<8x8xf32>
    %73 = arith.subf %69, %72 : vector<8x8xf32>
    %74 = math.exp %73 : vector<8x8xf32>
    %cst_41 = arith.constant dense<0.000000e+00> : vector<8xf32>
    %75 = vector.multi_reduction <add>, %74, %cst_41 [1] : vector<8x8xf32> to vector<8xf32>
    %76 = vector.shape_cast %75 : vector<8xf32> to vector<8x1xf32>
    %77 = tpu.reciprocal %76 {approx = true} : vector<8x1xf32> -> vector<8x1xf32>
    %78 = vector.broadcast %77 : vector<8x1xf32> to vector<8x8xf32>
    %79 = arith.mulf %74, %78 : vector<8x8xf32>
    %80 = arith.truncf %79 : vector<8x8xf32> to vector<8x8xbf16>
    %cst_42 = arith.constant dense<0.000000e+00> : vector<8x8xf32>
    %81 = tpu.matmul %80, %64, %cst_42 {dimension_numbers = #tpu.dot_dimension_numbers<[1], [0], [0], [1], [0, 0, 1, 1], [], []>} : vector<8x8xbf16>, vector<8x8xbf16>, vector<8x8xf32> -> vector<8x8xf32>
    %82 = arith.truncf %81 : vector<8x8xf32> to vector<8x8xbf16>
    %c0_43 = arith.constant 0 : index
    %c16_44 = arith.constant 16 : index
    %83 = vector.load %arg17[%c0_43, %c16_44] : memref<8x32xbf16, #tpu.memory_space<vmem>>, vector<8x8xbf16>
    tpu.vector_store %arg17[%c0_43, %c16_44], %82 {strides = array<i32>} : memref<8x32xbf16, #tpu.memory_space<vmem>>, vector<8x8xbf16>,
    %c0_45 = arith.constant 0 : index
    %c24 = arith.constant 24 : index
    %84 = vector.load %arg16[%c0_45, %c24] : memref<8x96xbf16, #tpu.memory_space<vmem>>, vector<8x8xbf16>
    %c0_46 = arith.constant 0 : index
    %c56 = arith.constant 56 : index
    %85 = vector.load %arg16[%c0_46, %c56] : memref<8x96xbf16, #tpu.memory_space<vmem>>, vector<8x8xbf16>
    %c0_47 = arith.constant 0 : index
    %c88 = arith.constant 88 : index
    %86 = vector.load %arg16[%c0_47, %c88] : memref<8x96xbf16, #tpu.memory_space<vmem>>, vector<8x8xbf16>
    %cst_48 = arith.constant dense<0.000000e+00> : vector<8x8xf32>
    %87 = tpu.matmul %84, %85, %cst_48 {dimension_numbers = #tpu.dot_dimension_numbers<[1], [1], [0], [0], [0, 0, 1, 0], [], []>} : vector<8x8xbf16>, vector<8x8xbf16>, vector<8x8xf32> -> vector<8x8xf32>
    %cst_49 = arith.constant 0.353553385 : f32
    %88 = vector.broadcast %cst_49 : f32 to vector<8x8xf32>
    %89 = arith.mulf %87, %88 : vector<8x8xf32>
    %90 = vector.broadcast %17 : vector<1x8xf32> to vector<8x8xf32>
    %91 = arith.addf %89, %90 : vector<8x8xf32>
    %cst_50 = arith.constant dense<0xFF800000> : vector<8xf32>
    %92 = vector.multi_reduction <maximumf>, %91, %cst_50 [1] : vector<8x8xf32> to vector<8xf32>
    %93 = vector.shape_cast %92 : vector<8xf32> to vector<8x1xf32>
    %94 = vector.broadcast %93 : vector<8x1xf32> to vector<8x8xf32>
    %95 = arith.subf %91, %94 : vector<8x8xf32>
    %96 = math.exp %95 : vector<8x8xf32>
    %cst_51 = arith.constant dense<0.000000e+00> : vector<8xf32>
    %97 = vector.multi_reduction <add>, %96, %cst_51 [1] : vector<8x8xf32> to vector<8xf32>
    %98 = vector.shape_cast %97 : vector<8xf32> to vector<8x1xf32>
    %99 = tpu.reciprocal %98 {approx = true} : vector<8x1xf32> -> vector<8x1xf32>
    %100 = vector.broadcast %99 : vector<8x1xf32> to vector<8x8xf32>
    %101 = arith.mulf %96, %100 : vector<8x8xf32>
    %102 = arith.truncf %101 : vector<8x8xf32> to vector<8x8xbf16>
    %cst_52 = arith.constant dense<0.000000e+00> : vector<8x8xf32>
    %103 = tpu.matmul %102, %86, %cst_52 {dimension_numbers = #tpu.dot_dimension_numbers<[1], [0], [0], [1], [0, 0, 1, 1], [], []>} : vector<8x8xbf16>, vector<8x8xbf16>, vector<8x8xf32> -> vector<8x8xf32>
    %104 = arith.truncf %103 : vector<8x8xf32> to vector<8x8xbf16>
    %c0_53 = arith.constant 0 : index
    %c24_54 = arith.constant 24 : index
    %105 = vector.load %arg17[%c0_53, %c24_54] : memref<8x32xbf16, #tpu.memory_space<vmem>>, vector<8x8xbf16>
    tpu.vector_store %arg17[%c0_53, %c24_54], %104 {strides = array<i32>} : memref<8x32xbf16, #tpu.memory_space<vmem>>, vector<8x8xbf16>,
    %c0_55 = arith.constant 0 : index
    %c0_56 = arith.constant 0 : index
    %106 = vector.load %arg17[%c0_55, %c0_56] : memref<8x32xbf16, #tpu.memory_space<vmem>>, vector<8x32xbf16>
    %c0_57 = arith.constant 0 : index
    %c0_58 = arith.constant 0 : index
    %107 = vector.load %arg5[%c0_57, %c0_58] : memref<32x32xbf16, #tpu.memory_space<vmem>>, vector<32x32xbf16>
    %cst_59 = arith.constant dense<0.000000e+00> : vector<8x32xf32>
    %108 = tpu.matmul %106, %107, %cst_59 {dimension_numbers = #tpu.dot_dimension_numbers<[1], [0], [0], [1], [0, 0, 1, 1], [], []>} : vector<8x32xbf16>, vector<32x32xbf16>, vector<8x32xf32> -> vector<8x32xf32>
    %c0_60 = arith.constant 0 : index
    %c0_61 = arith.constant 0 : index
    %109 = vector.load %arg6[%c0_60, %c0_61] : memref<1x32xf32, #tpu.memory_space<vmem>>, vector<1x32xf32>
    %110 = vector.broadcast %109 : vector<1x32xf32> to vector<8x32xf32>
    %111 = arith.addf %108, %110 : vector<8x32xf32>
    %112 = arith.addf %111, %2 : vector<8x32xf32>
    %c0_62 = arith.constant 0 : index
    %c0_63 = arith.constant 0 : index
    %113 = vector.load %arg7[%c0_62, %c0_63] : memref<1x32xf32, #tpu.memory_space<vmem>>, vector<1x32xf32>
    %c0_64 = arith.constant 0 : index
    %c0_65 = arith.constant 0 : index
    %114 = vector.load %arg8[%c0_64, %c0_65] : memref<1x32xf32, #tpu.memory_space<vmem>>, vector<1x32xf32>
    %cst_66 = arith.constant dense<0.000000e+00> : vector<8xf32>
    %115 = vector.multi_reduction <add>, %112, %cst_66 [1] : vector<8x32xf32> to vector<8xf32>
    %116 = vector.shape_cast %115 : vector<8xf32> to vector<8x1xf32>
    %cst_67 = arith.constant 3.200000e+01 : f32
    %117 = vector.broadcast %cst_67 : f32 to vector<8x1xf32>
    %118 = arith.divf %116, %117 : vector<8x1xf32>
    %119 = vector.broadcast %118 : vector<8x1xf32> to vector<8x32xf32>
    %120 = arith.subf %112, %119 : vector<8x32xf32>
    %121 = vector.broadcast %118 : vector<8x1xf32> to vector<8x32xf32>
    %122 = arith.subf %112, %121 : vector<8x32xf32>
    %123 = arith.mulf %120, %122 : vector<8x32xf32>
    %cst_68 = arith.constant dense<0.000000e+00> : vector<8xf32>
    %124 = vector.multi_reduction <add>, %123, %cst_68 [1] : vector<8x32xf32> to vector<8xf32>
    %125 = vector.shape_cast %124 : vector<8xf32> to vector<8x1xf32>
    %cst_69 = arith.constant 3.200000e+01 : f32
    %126 = vector.broadcast %cst_69 : f32 to vector<8x1xf32>
    %127 = arith.divf %125, %126 : vector<8x1xf32>
    %128 = vector.broadcast %118 : vector<8x1xf32> to vector<8x32xf32>
    %129 = arith.subf %112, %128 : vector<8x32xf32>
    %cst_70 = arith.constant 9.99999996E-13 : f32
    %130 = vector.broadcast %cst_70 : f32 to vector<8x1xf32>
    %131 = arith.addf %127, %130 : vector<8x1xf32>
    %132 = math.rsqrt %131 : vector<8x1xf32>
    %133 = vector.broadcast %132 : vector<8x1xf32> to vector<8x32xf32>
    %134 = arith.mulf %129, %133 : vector<8x32xf32>
    %135 = vector.broadcast %113 : vector<1x32xf32> to vector<8x32xf32>
    %136 = arith.mulf %134, %135 : vector<8x32xf32>
    %137 = vector.broadcast %114 : vector<1x32xf32> to vector<8x32xf32>
    %138 = arith.addf %136, %137 : vector<8x32xf32>
    %139 = arith.truncf %138 : vector<8x32xf32> to vector<8x32xbf16>
    %c0_71 = arith.constant 0 : index
    %c0_72 = arith.constant 0 : index
    %140 = vector.load %arg9[%c0_71, %c0_72] : memref<32x64xbf16, #tpu.memory_space<vmem>>, vector<32x64xbf16>
    %cst_73 = arith.constant dense<0.000000e+00> : vector<8x64xf32>
    %141 = tpu.matmul %139, %140, %cst_73 {dimension_numbers = #tpu.dot_dimension_numbers<[1], [0], [0], [1], [0, 0, 1, 1], [], []>} : vector<8x32xbf16>, vector<32x64xbf16>, vector<8x64xf32> -> vector<8x64xf32>
    %c0_74 = arith.constant 0 : index
    %c0_75 = arith.constant 0 : index
    %142 = vector.load %arg10[%c0_74, %c0_75] : memref<1x64xf32, #tpu.memory_space<vmem>>, vector<1x64xf32>
    %143 = vector.broadcast %142 : vector<1x64xf32> to vector<8x64xf32>
    %144 = arith.addf %141, %143 : vector<8x64xf32>
    %145 = arith.mulf %144, %144 : vector<8x64xf32>
    %146 = arith.mulf %144, %145 : vector<8x64xf32>
    %cst_76 = arith.constant 4.471500e-02 : f32
    %147 = vector.broadcast %cst_76 : f32 to vector<8x64xf32>
    %148 = arith.mulf %147, %146 : vector<8x64xf32>
    %149 = arith.addf %144, %148 : vector<8x64xf32>
    %cst_77 = arith.constant 0.797884583 : f32
    %150 = vector.broadcast %cst_77 : f32 to vector<8x64xf32>
    %151 = arith.mulf %150, %149 : vector<8x64xf32>
    %152 = math.tanh %151 : vector<8x64xf32>
    %cst_78 = arith.constant 1.000000e+00 : f32
    %153 = vector.broadcast %cst_78 : f32 to vector<8x64xf32>
    %154 = arith.addf %153, %152 : vector<8x64xf32>
    %cst_79 = arith.constant 5.000000e-01 : f32
    %155 = vector.broadcast %cst_79 : f32 to vector<8x64xf32>
    %156 = arith.mulf %155, %154 : vector<8x64xf32>
    %157 = arith.mulf %144, %156 : vector<8x64xf32>
    %158 = arith.truncf %157 : vector<8x64xf32> to vector<8x64xbf16>
    %c0_80 = arith.constant 0 : index
    %c0_81 = arith.constant 0 : index
    %159 = vector.load %arg11[%c0_80, %c0_81] : memref<64x32xbf16, #tpu.memory_space<vmem>>, vector<64x32xbf16>
    %cst_82 = arith.constant dense<0.000000e+00> : vector<8x32xf32>
    %160 = tpu.matmul %158, %159, %cst_82 {dimension_numbers = #tpu.dot_dimension_numbers<[1], [0], [0], [1], [0, 0, 1, 1], [], []>} : vector<8x64xbf16>, vector<64x32xbf16>, vector<8x32xf32> -> vector<8x32xf32>
    %c0_83 = arith.constant 0 : index
    %c0_84 = arith.constant 0 : index
    %161 = vector.load %arg12[%c0_83, %c0_84] : memref<1x32xf32, #tpu.memory_space<vmem>>, vector<1x32xf32>
    %162 = vector.broadcast %161 : vector<1x32xf32> to vector<8x32xf32>
    %163 = arith.addf %160, %162 : vector<8x32xf32>
    %164 = arith.addf %163, %138 : vector<8x32xf32>
    %c0_85 = arith.constant 0 : index
    %c0_86 = arith.constant 0 : index
    %165 = vector.load %arg13[%c0_85, %c0_86] : memref<1x32xf32, #tpu.memory_space<vmem>>, vector<1x32xf32>
    %c0_87 = arith.constant 0 : index
    %c0_88 = arith.constant 0 : index
    %166 = vector.load %arg14[%c0_87, %c0_88] : memref<1x32xf32, #tpu.memory_space<vmem>>, vector<1x32xf32>
    %cst_89 = arith.constant dense<0.000000e+00> : vector<8xf32>
    %167 = vector.multi_reduction <add>, %164, %cst_89 [1] : vector<8x32xf32> to vector<8xf32>
    %168 = vector.shape_cast %167 : vector<8xf32> to vector<8x1xf32>
    %cst_90 = arith.constant 3.200000e+01 : f32
    %169 = vector.broadcast %cst_90 : f32 to vector<8x1xf32>
    %170 = arith.divf %168, %169 : vector<8x1xf32>
    %171 = vector.broadcast %170 : vector<8x1xf32> to vector<8x32xf32>
    %172 = arith.subf %164, %171 : vector<8x32xf32>
    %173 = vector.broadcast %170 : vector<8x1xf32> to vector<8x32xf32>
    %174 = arith.subf %164, %173 : vector<8x32xf32>
    %175 = arith.mulf %172, %174 : vector<8x32xf32>
    %cst_91 = arith.constant dense<0.000000e+00> : vector<8xf32>
    %176 = vector.multi_reduction <add>, %175, %cst_91 [1] : vector<8x32xf32> to vector<8xf32>
    %177 = vector.shape_cast %176 : vector<8xf32> to vector<8x1xf32>
    %cst_92 = arith.constant 3.200000e+01 : f32
    %178 = vector.broadcast %cst_92 : f32 to vector<8x1xf32>
    %179 = arith.divf %177, %178 : vector<8x1xf32>
    %180 = vector.broadcast %170 : vector<8x1xf32> to vector<8x32xf32>
    %181 = arith.subf %164, %180 : vector<8x32xf32>
    %cst_93 = arith.constant 9.99999996E-13 : f32
    %182 = vector.broadcast %cst_93 : f32 to vector<8x1xf32>
    %183 = arith.addf %179, %182 : vector<8x1xf32>
    %184 = math.rsqrt %183 : vector<8x1xf32>
    %185 = vector.broadcast %184 : vector<8x1xf32> to vector<8x32xf32>
    %186 = arith.mulf %181, %185 : vector<8x32xf32>
    %187 = vector.broadcast %165 : vector<1x32xf32> to vector<8x32xf32>
    %188 = arith.mulf %186, %187 : vector<8x32xf32>
    %189 = vector.broadcast %166 : vector<1x32xf32> to vector<8x32xf32>
    %190 = arith.addf %188, %189 : vector<8x32xf32>
    %191 = vector.shape_cast %190 : vector<8x32xf32> to vector<1x8x32xf32>
    %192 = arith.truncf %191 : vector<1x8x32xf32> to vector<1x8x32xbf16>
    %c0_94 = arith.constant 0 : index
    %c0_95 = arith.constant 0 : index
    %c0_96 = arith.constant 0 : index
    %193 = vector.load %arg15[%c0_94, %c0_95, %c0_96] : memref<1x8x32xbf16, #tpu.memory_space<vmem>>, vector<1x8x32xbf16>
    tpu.vector_store %arg15[%c0_94, %c0_95, %c0_96], %192 {strides = array<i32>} : memref<1x8x32xbf16, #tpu.memory_space<vmem>>, vector<1x8x32xbf16>,
    return
  }
  func.func @transform_0(%arg0: i32) -> (i32, i32, i32) {
    %c0_i32 = arith.constant 0 : i32
    %c0_i32_0 = arith.constant 0 : i32
    %c0_i32_1 = arith.constant 0 : i32
    return %arg0, %c0_i32, %c0_i32_0 : i32, i32, i32
  }
  func.func @transform_1(%arg0: i32) -> (i32, i32, i32) {
    %c0_i32 = arith.constant 0 : i32
    %c0_i32_0 = arith.constant 0 : i32
    %c0_i32_1 = arith.constant 0 : i32
    return %arg0, %c0_i32, %c0_i32_0 : i32, i32, i32
  }
  func.func @transform_2(%arg0: i32) -> (i32, i32) {
    %c0_i32 = arith.constant 0 : i32
    %c0_i32_0 = arith.constant 0 : i32
    %c0_i32_1 = arith.constant 0 : i32
    return %c0_i32, %c0_i32_0 : i32, i32
  }
  func.func @transform_3(%arg0: i32) -> (i32, i32) {
    %c0_i32 = arith.constant 0 : i32
    %c0_i32_0 = arith.constant 0 : i32
    %c0_i32_1 = arith.constant 0 : i32
    return %c0_i32, %c0_i32_0 : i32, i32
  }
  func.func @transform_4(%arg0: i32) -> (i32, i32) {
    %c0_i32 = arith.constant 0 : i32
    %c0_i32_0 = arith.constant 0 : i32
    %c0_i32_1 = arith.constant 0 : i32
    return %c0_i32, %c0_i32_0 : i32, i32
  }
  func.func @transform_5(%arg0: i32) -> (i32, i32) {
    %c0_i32 = arith.constant 0 : i32
    %c0_i32_0 = arith.constant 0 : i32
    %c0_i32_1 = arith.constant 0 : i32
    return %c0_i32, %c0_i32_0 : i32, i32
  }
  func.func @transform_6(%arg0: i32) -> (i32, i32) {
    %c0_i32 = arith.constant 0 : i32
    %c0_i32_0 = arith.constant 0 : i32
    %c0_i32_1 = arith.constant 0 : i32
    return %c0_i32, %c0_i32_0 : i32, i32
  }
  func.func @transform_7(%arg0: i32) -> (i32, i32) {
    %c0_i32 = arith.constant 0 : i32
    %c0_i32_0 = arith.constant 0 : i32
    %c0_i32_1 = arith.constant 0 : i32
    return %c0_i32, %c0_i32_0 : i32, i32
  }
  func.func @transform_8(%arg0: i32) -> (i32, i32) {
    %c0_i32 = arith.constant 0 : i32
    %c0_i32_0 = arith.constant 0 : i32
    %c0_i32_1 = arith.constant 0 : i32
    return %c0_i32, %c0_i32_0 : i32, i32
  }
  func.func @transform_9(%arg0: i32) -> (i32, i32) {
    %c0_i32 = arith.constant 0 : i32
    %c0_i32_0 = arith.constant 0 : i32
    %c0_i32_1 = arith.constant 0 : i32
    return %c0_i32, %c0_i32_0 : i32, i32
  }
  func.func @transform_10(%arg0: i32) -> (i32, i32) {
    %c0_i32 = arith.constant 0 : i32
    %c0_i32_0 = arith.constant 0 : i32
    %c0_i32_1 = arith.constant 0 : i32
    return %c0_i32, %c0_i32_0 : i32, i32
  }
  func.func @transform_11(%arg0: i32) -> (i32, i32) {
    %c0_i32 = arith.constant 0 : i32
    %c0_i32_0 = arith.constant 0 : i32
    %c0_i32_1 = arith.constant 0 : i32
    return %c0_i32, %c0_i32_0 : i32, i32
  }
  func.func @transform_12(%arg0: i32) -> (i32, i32) {
    %c0_i32 = arith.constant 0 : i32
    %c0_i32_0 = arith.constant 0 : i32
    %c0_i32_1 = arith.constant 0 : i32
    return %c0_i32, %c0_i32_0 : i32, i32
  }
  func.func @transform_13(%arg0: i32) -> (i32, i32) {
    %c0_i32 = arith.constant 0 : i32
    %c0_i32_0 = arith.constant 0 : i32
    %c0_i32_1 = arith.constant 0 : i32
    return %c0_i32, %c0_i32_0 : i32, i32
  }
  func.func @transform_14(%arg0: i32) -> (i32, i32, i32) {
    %c0_i32 = arith.constant 0 : i32
    %c0_i32_0 = arith.constant 0 : i32
    %c0_i32_1 = arith.constant 0 : i32
    return %arg0, %c0_i32, %c0_i32_0 : i32, i32, i32
  }
}

</mosaic_0001>

<llo_original>
// kernel: distilbert_forward.5
$region0: #{distilbert_forward.5}
  #allocation0 [shape = 'u32[]', space=smem, size = 0x4, offset = 0x4, fixed_abs, tag = 'smem constant byte address 0x4 - core index']
  #allocation1 [shape = 'u32[72,128]{1,0:T(1,128)}', space=vmem, size = 0x9000, scoped, tag = 'internal scratch']
  #allocation2 [shape = 'f32[1,1]{1,0:T(1,128)}', space=vmem, size = 0x200, scoped, tag = 'scratch operand']
  #allocation3 [shape = 'f32[1,1]{1,0:T(1,128)}', space=vmem, size = 0x200, scoped, tag = 'scratch operand']
  %s0 = inlined_call_operand.vmem [shape: bf16[16,32], index: 0, kind: input, shape index: {}]
  %s1 = inlined_call_operand.vmem [shape: bf16[32,3], index: 1, kind: input, shape index: {}]
  %s2 = inlined_call_operand.vmem [shape: f32[1,3], index: 2, kind: input, shape index: {}]
  %s3 = inlined_call_operand.vmem [shape: s32[16,1], index: 3, kind: input, shape index: {}]
  %s4 = inlined_call_operand.vmem [shape: s32[16,1], index: 4, kind: input, shape index: {}]
  %s5 = inlined_call_operand.vmem [shape: f32[16,3], index: 5, kind: output, shape index: {0}]
  %s6 = inlined_call_operand.hbm [shape: f32[1,1], index: 6, kind: output, shape index: {1}]
  %7 = xla_tuple %s5, %s6
  %s8 = sld [smem:[#allocation0]]
  $region69: #{distilbert_forward.5} parent=0
    _
  %s10 = ssub.s32 1, %s8
  %s11 = scalar_select 0, %s10, %s8
  $region1: #{distilbert_forward.5} parent=0
    #allocation4 [shape = 'u8[512]{0}', space=vmem, size = 0x400, scoped, tag = 'output window, operand 1, single buffered']
    #allocation5 [shape = 's32[2]{0}', space=sflag, size = 0x8, scoped, tag = 'scoped memory for distilbert_forward.5']
    %12 = vsyncpa [#allocation5], 0
    loop: start=0, step=1, limit=4
    $region2: #{distilbert_forward.5} parent=1 // loop_pre_header
      _
    $region3: #{distilbert_forward.5} parent=1 // loop_header
      %s14 = sphi 0, %s18
      %p15 = scmp.ge.s32.totalorder %s14, 4
      %s24 = sphi 0, %s26
      %s27 = sphi 0, %s24
      %s28 = sphi 0, %s27
      %s44 = sphi 0, %s28
      %s48 = sphi 0, %s48
      %s50 = sphi 0, %s48
      %s51 = sphi 0, %s50
      %s65 = sphi 0, %s51
      %s69 = sphi 0, %s69
      %s71 = sphi 0, %s69
      %s72 = sphi 0, %s71
      %s86 = sphi 0, %s72
      %s92 = sphi 0, %s94
      %s95 = sphi 0, %s92
      %s96 = sphi 0, %s95
      %s112 = sphi 0, %s96
      %s118 = sphi 0, %s120
      %s121 = sphi 0, %s118
      %s122 = sphi 0, %s121
      %s138 = sphi 0, %s122
      %s144 = sphi 0, %s146
      %s147 = sphi 0, %s144
      %s148 = sphi 0, %s147
      %s164 = sphi 0, %s148
      %s168 = sphi 0, %s168
      %s170 = sphi 0, %s168
      %s171 = sphi 0, %s170
      %s185 = sphi 0, %s171
    $region4: #{distilbert_forward.5} parent=1 // loop_header_branch
      %17 = sbr.rel (%p15) target = $region8
    $region5: #{distilbert_forward.5} parent=1 // loop_body
      %s19 = ssub.s32 %s14, 1
      %s20 = ssub.s32 %s14, 2
      %s21 = sadd.s32 %s14, 1
      %s22 = ssub.s32 %s14, %s21
      %p23 = scmp.eq.s32.totalorder %s22, 0
      %s25 = sadd.s32 %s24, 1
      %s26 = scalar_select %p23, %s24, %s25
      %p29 = pneg %p23
      %p30 = scmp.eq.s32.totalorder %s14, 1
      %p31 = por %p29, %p30
      %p32 = scmp.ne.s32.totalorder %s24, %s27
      %p33 = scmp.eq.s32.totalorder %s14, 0
      %p34 = por %p32, %p33
      %p35 = scmp.ne.s32.totalorder %s24, %s27
      %p36 = scmp.eq.s32.totalorder %s19, 1
      %p37 = por %p35, %p36
      %p38 = scmp.ne.s32.totalorder %s27, %s28
      %p39 = scmp.eq.s32.totalorder %s19, 0
      %p40 = por %p38, %p39
      %p41 = scmp.ne.s32.totalorder %s27, %s28
      %p42 = scmp.eq.s32.totalorder %s20, 1
      %p43 = por %p41, %p42
      %p45 = scmp.ne.s32.totalorder %s28, %s44
      %p46 = scmp.eq.s32.totalorder %s20, 0
      %p47 = por %p45, %p46
      %s49 = sadd.s32 %s48, 1
      %p52 = scmp.eq.s32.totalorder %s14, 1
      %p53 = scmp.ne.s32.totalorder %s48, %s50
      %p54 = scmp.eq.s32.totalorder %s14, 0
      %p55 = por %p53, %p54
      %p56 = scmp.ne.s32.totalorder %s48, %s50
      %p57 = scmp.eq.s32.totalorder %s19, 1
      %p58 = por %p56, %p57
      %p59 = scmp.ne.s32.totalorder %s50, %s51
      %p60 = scmp.eq.s32.totalorder %s19, 0
      %p61 = por %p59, %p60
      %p62 = scmp.ne.s32.totalorder %s50, %s51
      %p63 = scmp.eq.s32.totalorder %s20, 1
      %p64 = por %p62, %p63
      %p66 = scmp.ne.s32.totalorder %s51, %s65
      %p67 = scmp.eq.s32.totalorder %s20, 0
      %p68 = por %p66, %p67
      %s70 = sadd.s32 %s69, 1
      %p73 = scmp.eq.s32.totalorder %s14, 1
      %p74 = scmp.ne.s32.totalorder %s69, %s71
      %p75 = scmp.eq.s32.totalorder %s14, 0
      %p76 = por %p74, %p75
      %p77 = scmp.ne.s32.totalorder %s69, %s71
      %p78 = scmp.eq.s32.totalorder %s19, 1
      %p79 = por %p77, %p78
      %p80 = scmp.ne.s32.totalorder %s71, %s72
      %p81 = scmp.eq.s32.totalorder %s19, 0
      %p82 = por %p80, %p81
      %p83 = scmp.ne.s32.totalorder %s71, %s72
      %p84 = scmp.eq.s32.totalorder %s20, 1
      %p85 = por %p83, %p84
      %p87 = scmp.ne.s32.totalorder %s72, %s86
      %p88 = scmp.eq.s32.totalorder %s20, 0
      %p89 = por %p87, %p88
      %s90 = ssub.s32 %s14, %s21
      %p91 = scmp.eq.s32.totalorder %s90, 0
      %s93 = sadd.s32 %s92, 1
      %s94 = scalar_select %p91, %s92, %s93
      %p97 = pneg %p91
      %p98 = scmp.eq.s32.totalorder %s14, 1
      %p99 = por %p97, %p98
      %p100 = scmp.ne.s32.totalorder %s92, %s95
      %p101 = scmp.eq.s32.totalorder %s14, 0
      %p102 = por %p100, %p101
      %p103 = scmp.ne.s32.totalorder %s92, %s95
      %p104 = scmp.eq.s32.totalorder %s19, 1
      %p105 = por %p103, %p104
      %p106 = scmp.ne.s32.totalorder %s95, %s96
      %p107 = scmp.eq.s32.totalorder %s19, 0
      %p108 = por %p106, %p107
      %p109 = scmp.ne.s32.totalorder %s95, %s96
      %p110 = scmp.eq.s32.totalorder %s20, 1
      %p111 = por %p109, %p110
      %p113 = scmp.ne.s32.totalorder %s96, %s112
      %p114 = scmp.eq.s32.totalorder %s20, 0
      %p115 = por %p113, %p114
      %s116 = ssub.s32 %s14, %s21
      %p117 = scmp.eq.s32.totalorder %s116, 0
      %s119 = sadd.s32 %s118, 1
      %s120 = scalar_select %p117, %s118, %s119
      %p123 = pneg %p117
      %p124 = scmp.eq.s32.totalorder %s14, 1
      %p125 = por %p123, %p124
      %p126 = scmp.ne.s32.totalorder %s118, %s121
      %p127 = scmp.eq.s32.totalorder %s14, 0
      %p128 = por %p126, %p127
      %p129 = scmp.ne.s32.totalorder %s118, %s121
      %p130 = scmp.eq.s32.totalorder %s19, 1
      %p131 = por %p129, %p130
      %p132 = scmp.ne.s32.totalorder %s121, %s122
      %p133 = scmp.eq.s32.totalorder %s19, 0
      %p134 = por %p132, %p133
      %p135 = scmp.ne.s32.totalorder %s121, %s122
      %p136 = scmp.eq.s32.totalorder %s20, 1
      %p137 = por %p135, %p136
      %p139 = scmp.ne.s32.totalorder %s122, %s138
      %p140 = scmp.eq.s32.totalorder %s20, 0
      %p141 = por %p139, %p140
      %s142 = ssub.s32 %s14, %s21
      %p143 = scmp.eq.s32.totalorder %s142, 0
      %s145 = sadd.s32 %s144, 1
      %s146 = scalar_select %p143, %s144, %s145
      %p149 = pneg %p143
      %p150 = scmp.eq.s32.totalorder %s14, 1
      %p151 = por %p149, %p150
      %p152 = scmp.ne.s32.totalorder %s144, %s147
      %p153 = scmp.eq.s32.totalorder %s14, 0
      %p154 = por %p152, %p153
      %p155 = scmp.ne.s32.totalorder %s144, %s147
      %p156 = scmp.eq.s32.totalorder %s19, 1
      %p157 = por %p155, %p156
      %p158 = scmp.ne.s32.totalorder %s147, %s148
      %p159 = scmp.eq.s32.totalorder %s19, 0
      %p160 = por %p158, %p159
      %p161 = scmp.ne.s32.totalorder %s147, %s148
      %p162 = scmp.eq.s32.totalorder %s20, 1
      %p163 = por %p161, %p162
      %p165 = scmp.ne.s32.totalorder %s148, %s164
      %p166 = scmp.eq.s32.totalorder %s20, 0
      %p167 = por %p165, %p166
      %s169 = sadd.s32 %s168, 1
      %p172 = scmp.eq.s32.totalorder %s14, 1
      %p173 = scmp.ne.s32.totalorder %s168, %s170
      %p174 = scmp.eq.s32.totalorder %s14, 0
      %p175 = por %p173, %p174
      %p176 = scmp.ne.s32.totalorder %s168, %s170
      %p177 = scmp.eq.s32.totalorder %s19, 1
      %p178 = por %p176, %p177
      %p179 = scmp.ne.s32.totalorder %s170, %s171
      %p180 = scmp.eq.s32.totalorder %s19, 0
      %p181 = por %p179, %p180
      %p182 = scmp.ne.s32.totalorder %s170, %s171
      %p183 = scmp.eq.s32.totalorder %s20, 1
      %p184 = por %p182, %p183
      %p186 = scmp.ne.s32.totalorder %s171, %s185
      %p187 = scmp.eq.s32.totalorder %s20, 0
      %p188 = por %p186, %p187
      %p189 = scmp.le.s32.totalorder 1, %s14
      %p190 = scmp.lt.s32.totalorder %s14, 3
      %p191 = pnand %p189, %p190
      %p192 = pneg %p191
      // Predicated region
      $region9: #{distilbert_forward.5} parent=5 // pred_check
        _
      $region10: #{distilbert_forward.5} parent=5 // pred_check_branch
        %194 = sbr.rel (%p191) target = $region12
      $region11: #{distilbert_forward.5} parent=5 // pred_region
        %s195 = ssub.s32 %s14, 1
        // Predicated region
        $region13: #{distilbert_forward.5} parent=11 // pred_check
          %p196 = pneg %p61
        $region14: #{distilbert_forward.5} parent=11 // pred_check_branch
          %198 = sbr.rel (%p196) target = $region16
        $region15: #{distilbert_forward.5} parent=11 // pred_region
          _
        $region16: #{distilbert_forward.5} parent=11 // pred_fallthru
          _
        // Predicated region
        $region17: #{distilbert_forward.5} parent=11 // pred_check
          %p199 = pneg %p82
        $region18: #{distilbert_forward.5} parent=11 // pred_check_branch
          %201 = sbr.rel (%p199) target = $region20
        $region19: #{distilbert_forward.5} parent=11 // pred_region
          _
        $region20: #{distilbert_forward.5} parent=11 // pred_fallthru
          _
      $region12: #{distilbert_forward.5} parent=5 // pred_fallthru
        _
      %p202 = scmp.lt.s32.totalorder %s14, 2
      // Predicated region
      $region21: #{distilbert_forward.5} parent=5 // pred_check
        %p203 = pneg %p202
      $region22: #{distilbert_forward.5} parent=5 // pred_check_branch
        %205 = sbr.rel (%p203) target = $region24
      $region23: #{distilbert_forward.5} parent=5 // pred_region
        // Predicated region
        $region25: #{distilbert_forward.5} parent=23 // pred_check
          %p206 = pneg %p34
        $region26: #{distilbert_forward.5} parent=23 // pred_check_branch
          %208 = sbr.rel (%p206) target = $region28
        $region27: #{distilbert_forward.5} parent=23 // pred_region
          %p209 = scmp.lt.s32.totalorder %s14, 1
          %s210 = scalar_select %p209, %s14, 1
          %s211 = smul.addr %s210, 4
          %s212 = scalar_lea.vmem %s0, %s211
        $region28: #{distilbert_forward.5} parent=23 // pred_fallthru
          _
        // Predicated region
        $region29: #{distilbert_forward.5} parent=23 // pred_check
          %p213 = pneg %p102
        $region30: #{distilbert_forward.5} parent=23 // pred_check_branch
          %215 = sbr.rel (%p213) target = $region32
        $region31: #{distilbert_forward.5} parent=23 // pred_region
          %p216 = scmp.lt.s32.totalorder %s14, 1
          %s217 = scalar_select %p216, %s14, 1
          %s218 = smul.addr %s217, 8
          %s219 = scalar_lea.vmem %s3, %s218
        $region32: #{distilbert_forward.5} parent=23 // pred_fallthru
          _
        // Predicated region
        $region33: #{distilbert_forward.5} parent=23 // pred_check
          %p220 = pneg %p128
        $region34: #{distilbert_forward.5} parent=23 // pred_check_branch
          %222 = sbr.rel (%p220) target = $region36
        $region35: #{distilbert_forward.5} parent=23 // pred_region
          %p223 = scmp.lt.s32.totalorder %s14, 1
          %s224 = scalar_select %p223, %s14, 1
          %s225 = smul.addr %s224, 8
          %s226 = scalar_lea.vmem %s4, %s225
        $region36: #{distilbert_forward.5} parent=23 // pred_fallthru
          _
      $region24: #{distilbert_forward.5} parent=5 // pred_fallthru
        _
      %p227 = scmp.le.s32.totalorder 1, %s14
      %p228 = scmp.lt.s32.totalorder %s14, 3
      %p229 = pnand %p227, %p228
      %p230 = pneg %p229
      // Predicated region
      $region37: #{distilbert_forward.5} parent=5 // pred_check
        _
      $region38: #{distilbert_forward.5} parent=5 // pred_check_branch
        %232 = sbr.rel (%p229) target = $region40
      $region39: #{distilbert_forward.5} parent=5 // pred_region
        %s233 = ssub.s32 %s14, 1
        %p234 = scmp.lt.s32.totalorder %s19, 1
        %s235 = scalar_select %p234, %s19, 1
        %s236 = smul.addr %s235, 4
        %s237 = scalar_lea.vmem %s0, %s236
        %p238 = pneg %p40
        %p239 = pneg %p37
        %p240 = pneg %p61
        %p241 = pneg %p58
        %p242 = pneg %p82
        %p243 = pneg %p79
        %p244 = scmp.lt.s32.totalorder %s19, 1
        %s245 = scalar_select %p244, %s19, 1
        %s246 = smul.addr %s245, 8
        %s247 = scalar_lea.vmem %s3, %s246
        %p248 = pneg %p108
        %p249 = pneg %p105
        %p250 = scmp.lt.s32.totalorder %s19, 1
        %s251 = scalar_select %p250, %s19, 1
        %s252 = smul.addr %s251, 8
        %s253 = scalar_lea.vmem %s4, %s252
        %p254 = pneg %p134
        %p255 = pneg %p131
        %p256 = pneg %p160
        %p257 = pneg %p157
        %p258 = scmp.lt.s32.totalorder %s19, 1
        %s259 = scalar_select %p258, %s19, 1
        %s260 = smul.addr %s259, 8
        %s261 = scalar_lea.vmem %s5, %s260
        %p262 = pneg %p181
        %p263 = pneg %p178
        %p264 = scmp.lt.s32.totalorder %s19, 1
        %s265 = scalar_select %p264, %s19, 1
        %s266 = smul.addr %s265, 4
        %s267 = scalar_lea.vmem %s0, %s266
        %p268 = scmp.lt.s32.totalorder %s19, 1
        %s269 = scalar_select %p268, %s19, 1
        %s270 = smul.addr %s269, 8
        %s271 = scalar_lea.vmem %s3, %s270
        %p272 = scmp.lt.s32.totalorder %s19, 1
        %s273 = scalar_select %p272, %s19, 1
        %s274 = smul.addr %s273, 8
        %s275 = scalar_lea.vmem %s4, %s274
        %p276 = scmp.lt.s32.totalorder %s19, 1
        %s277 = scalar_select %p276, %s19, 1
        %s278 = smul.addr %s277, 8
        %s279 = scalar_lea.vmem %s5, %s278
        %p281 = scmp.eq.s32.totalorder %s19, 0
        // Predicated region
        $region41: #{distilbert_forward.5} parent=39 // pred_check
          %p282 = pneg %p281
        $region42: #{distilbert_forward.5} parent=39 // pred_check_branch
          %284 = sbr.rel (%p282) target = $region44
        $region43: #{distilbert_forward.5} parent=39 // pred_region
          %vm285 = vcmask 0
          %286 = vst.msk [vmem:[#allocation2] sm:$0x1] %vm285, 0.0
          %287 = vst.msk [vmem:[#allocation3] sm:$0x1] %vm285, 0.0
        $region44: #{distilbert_forward.5} parent=39 // pred_fallthru
          _
        %v288 = vld [vmem:[%s267] sm:$0xf]
        %v289 = vld [vmem:[%s1] sm:$0xf]
        %v290 = vld [vmem:[%s1 + $0x4] sm:$0xf]
        %v291 = vld [vmem:[%s1 + $0x8] sm:$0xf]
        %v292 = vld [vmem:[%s1 + $0xc] sm:$0xf]
        %v293 = vld [vmem:[%s2] sm:$0x1]
        %v295 = vperm.slane %v293, 0
        %v301 = vunpack.c.l.b16 %v289
        %v302 = vunpack.c.l.b16 %v290
        %v303 = vunpack.c.l.b16 %v291
        %v304 = vunpack.c.l.b16 %v292
        %v305 = vpack.c.b16 %v302, %v301
        %v306 = vpack.c.b16 %v304, %v303
        %vm309 = vcmask 261120
        %v311 = vsel %vm309, %v288, 0
        %313 = vmatpush.bf16.msra.mxu0 0
        %314 = vmatpush.bf16.msra.mxu0 0
        %315 = vmatpush.bf16.msra.mxu0 0
        %316 = vmatpush.bf16.msra.mxu0 0
        %317 = vmatpush.bf16.msra.mxu0 0
        %318 = vmatpush.bf16.msra.mxu0 0
        %319 = vmatpush.bf16.msra.mxu0 %v306
        %320 = vmatpush.bf16.msra.mxu0 %v305
        %321 = vmatmul.bf16.gmra.mxu0 %v311
        %v322 = vpop.f32.mrf.mxu0
        %v323 = vadd.f32 %v295, %v322
        %v324 = vpop.f32.mrf.mxu0
        %325 = vdwg.mxu0
        %vm326 = vcmask 23552
        %v327 = vsel %vm326, %v323, -inf
        %328 = vmax.xlane.f32.xlu0 %v327
        %v329 = vpop.xlane.xlu0 %328
        %v330 = vsub.f32 %v323, %v329
        %v331 = vmul.f32 %v330, 1.442695
        %v332 = vpow.pop %v331
        %v333 = vsel %vm326, %v332, 0.0
        %334 = vadd.xlane.f32.xlu0 %v333
        %v335 = vpop.xlane.xlu0 %334
        %v336 = vlog2.pop %v335
        %v337 = vmul.f32 %v336, 0.6931472
        %v338 = vsub.f32 %v330, %v337
        %339 = vst.msk [vmem:[%s279] sm:$0xff] %vm326, %v338
        %v340 = vsel %vm326, %v338, -inf
        %341 = vmax.xlane.f32.xlu0 %v340
        %v342 = vpop.xlane.xlu0 %341
        %v343 = vsub.f32 %v338, %v342
        %v344 = vmul.f32 %v343, 1.442695
        %v345 = vpow.pop %v344
        %v346 = vsel %vm326, %v345, 0.0
        %347 = vadd.xlane.f32.xlu0 %v346
        %v348 = vpop.xlane.xlu0 %347
        %v349 = vlog2.pop %v348
        %v350 = vmul.f32 %v349, 0.6931472
        %v351 = vsub.f32 %v343, %v350
        %v352 = vld [vmem:[%s271] sm:$0xff]
        %v353 = vld [vmem:[%s275] sm:$0xff]
        %vm354 = vcmp.eq.s32.totalorder %v353, 1
        %v355 = vsel %vm354, %v352, 4294967196
        %v356 = vlaneseq
        %v357 = vand.u32 %v356, 127
        %358 = vset.pattern.permute.xlu0 0
        %359 = vperm.xlu0 %358, %v355
        %v360 = vpop.permute.xlu0 %359
        %vm361 = vcmp.eq.s32.totalorder %v357, %v360
        %v362 = vsel %vm361, 1, 0
        %v363 = vcvt.s32.f32 %v362
        %v364 = vmul.f32 %v351, %v363
        %v365 = vsel %vm326, %v364, 0.0
        %366 = vadd.xlane.f32.xlu0 %v365
        %v367 = vpop.xlane.xlu0 %366
        %v368 = vsub.f32 0.0, %v367
        %vm369 = vcmp.ne.s32.totalorder %v355, 4294967196
        %v370 = vsel %vm369, 1, 0
        %v371 = vcvt.s32.f32 %v370
        %v372 = vld [vmem:[#allocation2] sm:$0x1]
        %v373 = vmul.f32 %v368, %v371
        %vm374 = vcmask 7168
        %v375 = vsel %vm374, %v373, 0.0
        %v376 = vrot.slane %v375, 4
        %v377 = vadd.f32 %v375, %v376
        %v378 = vrot.slane %v377, 2
        %v379 = vadd.f32 %v377, %v378
        %v380 = vrot.slane %v379, 1
        %v381 = vadd.f32 %v379, %v380
        %v382 = vadd.f32 %v372, %v381
        %vm383 = vcmask 0
        %384 = vst.msk [vmem:[#allocation2] sm:$0x1] %vm383, %v382
        %v385 = vld [vmem:[#allocation3] sm:$0x1]
        %v386 = vsel %vm374, %v371, 0.0
        %v387 = vrot.slane %v386, 4
        %v388 = vadd.f32 %v386, %v387
        %v389 = vrot.slane %v388, 2
        %v390 = vadd.f32 %v388, %v389
        %v391 = vrot.slane %v390, 1
        %v392 = vadd.f32 %v390, %v391
        %v393 = vadd.f32 %v385, %v392
        %394 = vst.msk [vmem:[#allocation3] sm:$0x1] %vm383, %v393
        %p395 = scmp.eq.s32.totalorder %s19, 1
        // Predicated region
        $region45: #{distilbert_forward.5} parent=39 // pred_check
          %p396 = pneg %p395
        $region46: #{distilbert_forward.5} parent=39 // pred_check_branch
          %398 = sbr.rel (%p396) target = $region48
        $region47: #{distilbert_forward.5} parent=39 // pred_region
          %v399 = vld [vmem:[#allocation2] sm:$0x1]
          %v400 = vld [vmem:[#allocation3] sm:$0x1]
          %v401 = vrcp.pop %v400
          %v402 = vmul.f32 %v400, %v401
          %v403 = vsub.f32 1.0, %v402
          %v404 = vmul.f32 %v401, %v403
          %v405 = vadd.f32 %v401, %v404
          %vm406 = vweird.f32 %v400
          %vm407 = vweird.f32 %v401
          %vm408 = vmor %vm406, %vm407
          %v409 = vsel %vm408, %v401, %v405
          %v410 = vand.u32 2147483647, %v400
          %vm411 = vcmp.eq.f32.partialorder %v410, 8.507059e+37
          %v412 = vand.u32 %v400, 2147483648
          %v413 = vor.u32 1.1754944e-38, %v412
          %v414 = vsel %vm411, %v413, %v409
          %v415 = vmul.f32 %v399, %v414
          %416 = vst.msk [vmem:[#allocation4] sm:$0x1] %vm383, %v415
        $region48: #{distilbert_forward.5} parent=39 // pred_fallthru
          _
        %p417 = scmp.lt.s32.totalorder %s19, 1
        %s418 = scalar_select %p417, %s19, 1
        %s419 = smul.addr %s418, 8
        %s420 = scalar_lea.vmem %s5, %s419
        // Predicated region
        $region49: #{distilbert_forward.5} parent=39 // pred_check
          %p421 = pneg %p157
        $region50: #{distilbert_forward.5} parent=39 // pred_check_branch
          %423 = sbr.rel (%p421) target = $region52
        $region51: #{distilbert_forward.5} parent=39 // pred_region
          _
        $region52: #{distilbert_forward.5} parent=39 // pred_fallthru
          _
        // Predicated region
        $region53: #{distilbert_forward.5} parent=39 // pred_check
          %p424 = pneg %p178
        $region54: #{distilbert_forward.5} parent=39 // pred_check_branch
          %426 = sbr.rel (%p424) target = $region56
        $region55: #{distilbert_forward.5} parent=39 // pred_region
          %428 = vsyncadd [#allocation5], 0
          %s430 = sshll.u32 [#allocation4], 4
          %s431 = int_to_ptr.vmem [resolvable:$true] %s430
          %s432 = sshll.u32 %s6, 4
          %s433 = int_to_ptr.hbm [resolvable:$true] %s432
          %435 = dma.vmem_to_hbm [thread:$0]  %s431, 16, %s433, [#allocation5]
        $region56: #{distilbert_forward.5} parent=39 // pred_fallthru
          _
        // Predicated region
        $region57: #{distilbert_forward.5} parent=39 // pred_check
          %p436 = pneg %p178
        $region58: #{distilbert_forward.5} parent=39 // pred_check_branch
          %438 = sbr.rel (%p436) target = $region60
        $region59: #{distilbert_forward.5} parent=39 // pred_region
          %440 = dma.done [#allocation5], 16
        $region60: #{distilbert_forward.5} parent=39 // pred_fallthru
          _
      $region40: #{distilbert_forward.5} parent=5 // pred_fallthru
        _
      %p441 = scmp.le.s32.totalorder 2, %s14
      // Predicated region
      $region61: #{distilbert_forward.5} parent=5 // pred_check
        %p442 = pneg %p441
      $region62: #{distilbert_forward.5} parent=5 // pred_check_branch
        %444 = sbr.rel (%p442) target = $region64
      $region63: #{distilbert_forward.5} parent=5 // pred_region
        %s445 = ssub.s32 %s14, 2
        // Predicated region
        $region65: #{distilbert_forward.5} parent=63 // pred_check
          %p446 = pneg %p163
        $region66: #{distilbert_forward.5} parent=63 // pred_check_branch
          %448 = sbr.rel (%p446) target = $region68
        $region67: #{distilbert_forward.5} parent=63 // pred_region
          %p449 = scmp.lt.s32.totalorder %s20, 1
          %s450 = scalar_select %p449, %s20, 1
          %s451 = smul.addr %s450, 8
          %s452 = scalar_lea.vmem %s5, %s451
        $region68: #{distilbert_forward.5} parent=63 // pred_fallthru
          _
      $region64: #{distilbert_forward.5} parent=5 // pred_fallthru
        _
    $region6: #{distilbert_forward.5} parent=1 // loop_footer
      %s18 = sadd.s32 1, %s14
    $region7: #{distilbert_forward.5} parent=1 // loop_footer_branch
      %13 = sbr.rel target = $region3
    $region8: #{distilbert_forward.5} parent=1 // loop_exit
      _
    %453 = vsyncpa [#allocation5], 1
    %s454 = scalar_lea.sflag [#allocation5], 1
    %455 = vsyncpa %s454, 1

// kernel: distilbert_forward.4
$region0: #{distilbert_forward.4}
  #allocation0 [shape = 'u32[]', space=smem, size = 0x4, offset = 0x4, fixed_abs, tag = 'smem constant byte address 0x4 - core index']
  #allocation1 [shape = 'u32[72,128]{1,0:T(1,128)}', space=vmem, size = 0x9000, scoped, tag = 'internal scratch']
  #allocation2 [shape = 'bf16[8,96]{1,0:T(8,128)(2,1)}', space=vmem, size = 0x800, scoped, tag = 'scratch operand']
  #allocation3 [shape = 'bf16[8,32]{1,0:T(8,128)(2,1)}', space=vmem, size = 0x800, scoped, tag = 'scratch operand']
  %s0 = inlined_call_operand.vmem [shape: f32[2,1,8], index: 0, kind: input, shape index: {}]
  %s1 = inlined_call_operand.vmem [shape: bf16[2,8,32], index: 1, kind: input, shape index: {}]
  %s2 = inlined_call_operand.vmem [shape: bf16[32,96], index: 2, kind: input, shape index: {}]
  %s3 = inlined_call_operand.vmem [shape: f32[1,96], index: 3, kind: input, shape index: {}]
  %s4 = inlined_call_operand.vmem [shape: bf16[32,32], index: 4, kind: input, shape index: {}]
  %s5 = inlined_call_operand.vmem [shape: f32[1,32], index: 5, kind: input, shape index: {}]
  %s6 = inlined_call_operand.vmem [shape: f32[1,32], index: 6, kind: input, shape index: {}]
  %s7 = inlined_call_operand.vmem [shape: f32[1,32], index: 7, kind: input, shape index: {}]
  %s8 = inlined_call_operand.vmem [shape: bf16[32,64], index: 8, kind: input, shape index: {}]
  %s9 = inlined_call_operand.vmem [shape: f32[1,64], index: 9, kind: input, shape index: {}]
  %s10 = inlined_call_operand.vmem [shape: bf16[64,32], index: 10, kind: input, shape index: {}]
  %s11 = inlined_call_operand.vmem [shape: f32[1,32], index: 11, kind: input, shape index: {}]
  %s12 = inlined_call_operand.vmem [shape: f32[1,32], index: 12, kind: input, shape index: {}]
  %s13 = inlined_call_operand.vmem [shape: f32[1,32], index: 13, kind: input, shape index: {}]
  %s14 = inlined_call_operand.vmem [shape: bf16[2,8,32], index: 14, kind: output, shape index: {}]
  %s15 = sld [smem:[#allocation0]]
  $region89: #{distilbert_forward.4} parent=0
    _
  %s17 = ssub.s32 1, %s15
  %s18 = scalar_select 0, %s17, %s15
  loop: start=0, step=1, limit=4
  $region2: #{distilbert_forward.4} parent=0 // loop_pre_header
    _
  $region3: #{distilbert_forward.4} parent=0 // loop_header
    %s20 = sphi 0, %s24
    %p21 = scmp.ge.s32.totalorder %s20, 4
    %s30 = sphi 0, %s32
    %s33 = sphi 0, %s30
    %s34 = sphi 0, %s33
    %s50 = sphi 0, %s34
    %s56 = sphi 0, %s58
    %s59 = sphi 0, %s56
    %s60 = sphi 0, %s59
    %s76 = sphi 0, %s60
    %s80 = sphi 0, %s80
    %s82 = sphi 0, %s80
    %s83 = sphi 0, %s82
    %s97 = sphi 0, %s83
    %s101 = sphi 0, %s101
    %s103 = sphi 0, %s101
    %s104 = sphi 0, %s103
    %s118 = sphi 0, %s104
    %s122 = sphi 0, %s122
    %s124 = sphi 0, %s122
    %s125 = sphi 0, %s124
    %s139 = sphi 0, %s125
    %s143 = sphi 0, %s143
    %s145 = sphi 0, %s143
    %s146 = sphi 0, %s145
    %s160 = sphi 0, %s146
    %s164 = sphi 0, %s164
    %s166 = sphi 0, %s164
    %s167 = sphi 0, %s166
    %s181 = sphi 0, %s167
    %s185 = sphi 0, %s185
    %s187 = sphi 0, %s185
    %s188 = sphi 0, %s187
    %s202 = sphi 0, %s188
    %s206 = sphi 0, %s206
    %s208 = sphi 0, %s206
    %s209 = sphi 0, %s208
    %s223 = sphi 0, %s209
    %s227 = sphi 0, %s227
    %s229 = sphi 0, %s227
    %s230 = sphi 0, %s229
    %s244 = sphi 0, %s230
    %s248 = sphi 0, %s248
    %s250 = sphi 0, %s248
    %s251 = sphi 0, %s250
    %s265 = sphi 0, %s251
    %s269 = sphi 0, %s269
    %s271 = sphi 0, %s269
    %s272 = sphi 0, %s271
    %s286 = sphi 0, %s272
    %s290 = sphi 0, %s290
    %s292 = sphi 0, %s290
    %s293 = sphi 0, %s292
    %s307 = sphi 0, %s293
    %s311 = sphi 0, %s311
    %s313 = sphi 0, %s311
    %s314 = sphi 0, %s313
    %s328 = sphi 0, %s314
    %s334 = sphi 0, %s336
    %s337 = sphi 0, %s334
    %s338 = sphi 0, %s337
    %s354 = sphi 0, %s338
  $region4: #{distilbert_forward.4} parent=0 // loop_header_branch
    %23 = sbr.rel (%p21) target = $region8
  $region5: #{distilbert_forward.4} parent=0 // loop_body
    %s25 = ssub.s32 %s20, 1
    %s26 = ssub.s32 %s20, 2
    %s27 = sadd.s32 %s20, 1
    %s28 = ssub.s32 %s20, %s27
    %p29 = scmp.eq.s32.totalorder %s28, 0
    %s31 = sadd.s32 %s30, 1
    %s32 = scalar_select %p29, %s30, %s31
    %p35 = pneg %p29
    %p36 = scmp.eq.s32.totalorder %s20, 1
    %p37 = por %p35, %p36
    %p38 = scmp.ne.s32.totalorder %s30, %s33
    %p39 = scmp.eq.s32.totalorder %s20, 0
    %p40 = por %p38, %p39
    %p41 = scmp.ne.s32.totalorder %s30, %s33
    %p42 = scmp.eq.s32.totalorder %s25, 1
    %p43 = por %p41, %p42
    %p44 = scmp.ne.s32.totalorder %s33, %s34
    %p45 = scmp.eq.s32.totalorder %s25, 0
    %p46 = por %p44, %p45
    %p47 = scmp.ne.s32.totalorder %s33, %s34
    %p48 = scmp.eq.s32.totalorder %s26, 1
    %p49 = por %p47, %p48
    %p51 = scmp.ne.s32.totalorder %s34, %s50
    %p52 = scmp.eq.s32.totalorder %s26, 0
    %p53 = por %p51, %p52
    %s54 = ssub.s32 %s20, %s27
    %p55 = scmp.eq.s32.totalorder %s54, 0
    %s57 = sadd.s32 %s56, 1
    %s58 = scalar_select %p55, %s56, %s57
    %p61 = pneg %p55
    %p62 = scmp.eq.s32.totalorder %s20, 1
    %p63 = por %p61, %p62
    %p64 = scmp.ne.s32.totalorder %s56, %s59
    %p65 = scmp.eq.s32.totalorder %s20, 0
    %p66 = por %p64, %p65
    %p67 = scmp.ne.s32.totalorder %s56, %s59
    %p68 = scmp.eq.s32.totalorder %s25, 1
    %p69 = por %p67, %p68
    %p70 = scmp.ne.s32.totalorder %s59, %s60
    %p71 = scmp.eq.s32.totalorder %s25, 0
    %p72 = por %p70, %p71
    %p73 = scmp.ne.s32.totalorder %s59, %s60
    %p74 = scmp.eq.s32.totalorder %s26, 1
    %p75 = por %p73, %p74
    %p77 = scmp.ne.s32.totalorder %s60, %s76
    %p78 = scmp.eq.s32.totalorder %s26, 0
    %p79 = por %p77, %p78
    %s81 = sadd.s32 %s80, 1
    %p84 = scmp.eq.s32.totalorder %s20, 1
    %p85 = scmp.ne.s32.totalorder %s80, %s82
    %p86 = scmp.eq.s32.totalorder %s20, 0
    %p87 = por %p85, %p86
    %p88 = scmp.ne.s32.totalorder %s80, %s82
    %p89 = scmp.eq.s32.totalorder %s25, 1
    %p90 = por %p88, %p89
    %p91 = scmp.ne.s32.totalorder %s82, %s83
    %p92 = scmp.eq.s32.totalorder %s25, 0
    %p93 = por %p91, %p92
    %p94 = scmp.ne.s32.totalorder %s82, %s83
    %p95 = scmp.eq.s32.totalorder %s26, 1
    %p96 = por %p94, %p95
    %p98 = scmp.ne.s32.totalorder %s83, %s97
    %p99 = scmp.eq.s32.totalorder %s26, 0
    %p100 = por %p98, %p99
    %s102 = sadd.s32 %s101, 1
    %p105 = scmp.eq.s32.totalorder %s20, 1
    %p106 = scmp.ne.s32.totalorder %s101, %s103
    %p107 = scmp.eq.s32.totalorder %s20, 0
    %p108 = por %p106, %p107
    %p109 = scmp.ne.s32.totalorder %s101, %s103
    %p110 = scmp.eq.s32.totalorder %s25, 1
    %p111 = por %p109, %p110
    %p112 = scmp.ne.s32.totalorder %s103, %s104
    %p113 = scmp.eq.s32.totalorder %s25, 0
    %p114 = por %p112, %p113
    %p115 = scmp.ne.s32.totalorder %s103, %s104
    %p116 = scmp.eq.s32.totalorder %s26, 1
    %p117 = por %p115, %p116
    %p119 = scmp.ne.s32.totalorder %s104, %s118
    %p120 = scmp.eq.s32.totalorder %s26, 0
    %p121 = por %p119, %p120
    %s123 = sadd.s32 %s122, 1
    %p126 = scmp.eq.s32.totalorder %s20, 1
    %p127 = scmp.ne.s32.totalorder %s122, %s124
    %p128 = scmp.eq.s32.totalorder %s20, 0
    %p129 = por %p127, %p128
    %p130 = scmp.ne.s32.totalorder %s122, %s124
    %p131 = scmp.eq.s32.totalorder %s25, 1
    %p132 = por %p130, %p131
    %p133 = scmp.ne.s32.totalorder %s124, %s125
    %p134 = scmp.eq.s32.totalorder %s25, 0
    %p135 = por %p133, %p134
    %p136 = scmp.ne.s32.totalorder %s124, %s125
    %p137 = scmp.eq.s32.totalorder %s26, 1
    %p138 = por %p136, %p137
    %p140 = scmp.ne.s32.totalorder %s125, %s139
    %p141 = scmp.eq.s32.totalorder %s26, 0
    %p142 = por %p140, %p141
    %s144 = sadd.s32 %s143, 1
    %p147 = scmp.eq.s32.totalorder %s20, 1
    %p148 = scmp.ne.s32.totalorder %s143, %s145
    %p149 = scmp.eq.s32.totalorder %s20, 0
    %p150 = por %p148, %p149
    %p151 = scmp.ne.s32.totalorder %s143, %s145
    %p152 = scmp.eq.s32.totalorder %s25, 1
    %p153 = por %p151, %p152
    %p154 = scmp.ne.s32.totalorder %s145, %s146
    %p155 = scmp.eq.s32.totalorder %s25, 0
    %p156 = por %p154, %p155
    %p157 = scmp.ne.s32.totalorder %s145, %s146
    %p158 = scmp.eq.s32.totalorder %s26, 1
    %p159 = por %p157, %p158
    %p161 = scmp.ne.s32.totalorder %s146, %s160
    %p162 = scmp.eq.s32.totalorder %s26, 0
    %p163 = por %p161, %p162
    %s165 = sadd.s32 %s164, 1
    %p168 = scmp.eq.s32.totalorder %s20, 1
    %p169 = scmp.ne.s32.totalorder %s164, %s166
    %p170 = scmp.eq.s32.totalorder %s20, 0
    %p171 = por %p169, %p170
    %p172 = scmp.ne.s32.totalorder %s164, %s166
    %p173 = scmp.eq.s32.totalorder %s25, 1
    %p174 = por %p172, %p173
    %p175 = scmp.ne.s32.totalorder %s166, %s167
    %p176 = scmp.eq.s32.totalorder %s25, 0
    %p177 = por %p175, %p176
    %p178 = scmp.ne.s32.totalorder %s166, %s167
    %p179 = scmp.eq.s32.totalorder %s26, 1
    %p180 = por %p178, %p179
    %p182 = scmp.ne.s32.totalorder %s167, %s181
    %p183 = scmp.eq.s32.totalorder %s26, 0
    %p184 = por %p182, %p183
    %s186 = sadd.s32 %s185, 1
    %p189 = scmp.eq.s32.totalorder %s20, 1
    %p190 = scmp.ne.s32.totalorder %s185, %s187
    %p191 = scmp.eq.s32.totalorder %s20, 0
    %p192 = por %p190, %p191
    %p193 = scmp.ne.s32.totalorder %s185, %s187
    %p194 = scmp.eq.s32.totalorder %s25, 1
    %p195 = por %p193, %p194
    %p196 = scmp.ne.s32.totalorder %s187, %s188
    %p197 = scmp.eq.s32.totalorder %s25, 0
    %p198 = por %p196, %p197
    %p199 = scmp.ne.s32.totalorder %s187, %s188
    %p200 = scmp.eq.s32.totalorder %s26, 1
    %p201 = por %p199, %p200
    %p203 = scmp.ne.s32.totalorder %s188, %s202
    %p204 = scmp.eq.s32.totalorder %s26, 0
    %p205 = por %p203, %p204
    %s207 = sadd.s32 %s206, 1
    %p210 = scmp.eq.s32.totalorder %s20, 1
    %p211 = scmp.ne.s32.totalorder %s206, %s208
    %p212 = scmp.eq.s32.totalorder %s20, 0
    %p213 = por %p211, %p212
    %p214 = scmp.ne.s32.totalorder %s206, %s208
    %p215 = scmp.eq.s32.totalorder %s25, 1
    %p216 = por %p214, %p215
    %p217 = scmp.ne.s32.totalorder %s208, %s209
    %p218 = scmp.eq.s32.totalorder %s25, 0
    %p219 = por %p217, %p218
    %p220 = scmp.ne.s32.totalorder %s208, %s209
    %p221 = scmp.eq.s32.totalorder %s26, 1
    %p222 = por %p220, %p221
    %p224 = scmp.ne.s32.totalorder %s209, %s223
    %p225 = scmp.eq.s32.totalorder %s26, 0
    %p226 = por %p224, %p225
    %s228 = sadd.s32 %s227, 1
    %p231 = scmp.eq.s32.totalorder %s20, 1
    %p232 = scmp.ne.s32.totalorder %s227, %s229
    %p233 = scmp.eq.s32.totalorder %s20, 0
    %p234 = por %p232, %p233
    %p235 = scmp.ne.s32.totalorder %s227, %s229
    %p236 = scmp.eq.s32.totalorder %s25, 1
    %p237 = por %p235, %p236
    %p238 = scmp.ne.s32.totalorder %s229, %s230
    %p239 = scmp.eq.s32.totalorder %s25, 0
    %p240 = por %p238, %p239
    %p241 = scmp.ne.s32.totalorder %s229, %s230
    %p242 = scmp.eq.s32.totalorder %s26, 1
    %p243 = por %p241, %p242
    %p245 = scmp.ne.s32.totalorder %s230, %s244
    %p246 = scmp.eq.s32.totalorder %s26, 0
    %p247 = por %p245, %p246
    %s249 = sadd.s32 %s248, 1
    %p252 = scmp.eq.s32.totalorder %s20, 1
    %p253 = scmp.ne.s32.totalorder %s248, %s250
    %p254 = scmp.eq.s32.totalorder %s20, 0
    %p255 = por %p253, %p254
    %p256 = scmp.ne.s32.totalorder %s248, %s250
    %p257 = scmp.eq.s32.totalorder %s25, 1
    %p258 = por %p256, %p257
    %p259 = scmp.ne.s32.totalorder %s250, %s251
    %p260 = scmp.eq.s32.totalorder %s25, 0
    %p261 = por %p259, %p260
    %p262 = scmp.ne.s32.totalorder %s250, %s251
    %p263 = scmp.eq.s32.totalorder %s26, 1
    %p264 = por %p262, %p263
    %p266 = scmp.ne.s32.totalorder %s251, %s265
    %p267 = scmp.eq.s32.totalorder %s26, 0
    %p268 = por %p266, %p267
    %s270 = sadd.s32 %s269, 1
    %p273 = scmp.eq.s32.totalorder %s20, 1
    %p274 = scmp.ne.s32.totalorder %s269, %s271
    %p275 = scmp.eq.s32.totalorder %s20, 0
    %p276 = por %p274, %p275
    %p277 = scmp.ne.s32.totalorder %s269, %s271
    %p278 = scmp.eq.s32.totalorder %s25, 1
    %p279 = por %p277, %p278
    %p280 = scmp.ne.s32.totalorder %s271, %s272
    %p281 = scmp.eq.s32.totalorder %s25, 0
    %p282 = por %p280, %p281
    %p283 = scmp.ne.s32.totalorder %s271, %s272
    %p284 = scmp.eq.s32.totalorder %s26, 1
    %p285 = por %p283, %p284
    %p287 = scmp.ne.s32.totalorder %s272, %s286
    %p288 = scmp.eq.s32.totalorder %s26, 0
    %p289 = por %p287, %p288
    %s291 = sadd.s32 %s290, 1
    %p294 = scmp.eq.s32.totalorder %s20, 1
    %p295 = scmp.ne.s32.totalorder %s290, %s292
    %p296 = scmp.eq.s32.totalorder %s20, 0
    %p297 = por %p295, %p296
    %p298 = scmp.ne.s32.totalorder %s290, %s292
    %p299 = scmp.eq.s32.totalorder %s25, 1
    %p300 = por %p298, %p299
    %p301 = scmp.ne.s32.totalorder %s292, %s293
    %p302 = scmp.eq.s32.totalorder %s25, 0
    %p303 = por %p301, %p302
    %p304 = scmp.ne.s32.totalorder %s292, %s293
    %p305 = scmp.eq.s32.totalorder %s26, 1
    %p306 = por %p304, %p305
    %p308 = scmp.ne.s32.totalorder %s293, %s307
    %p309 = scmp.eq.s32.totalorder %s26, 0
    %p310 = por %p308, %p309
    %s312 = sadd.s32 %s311, 1
    %p315 = scmp.eq.s32.totalorder %s20, 1
    %p316 = scmp.ne.s32.totalorder %s311, %s313
    %p317 = scmp.eq.s32.totalorder %s20, 0
    %p318 = por %p316, %p317
    %p319 = scmp.ne.s32.totalorder %s311, %s313
    %p320 = scmp.eq.s32.totalorder %s25, 1
    %p321 = por %p319, %p320
    %p322 = scmp.ne.s32.totalorder %s313, %s314
    %p323 = scmp.eq.s32.totalorder %s25, 0
    %p324 = por %p322, %p323
    %p325 = scmp.ne.s32.totalorder %s313, %s314
    %p326 = scmp.eq.s32.totalorder %s26, 1
    %p327 = por %p325, %p326
    %p329 = scmp.ne.s32.totalorder %s314, %s328
    %p330 = scmp.eq.s32.totalorder %s26, 0
    %p331 = por %p329, %p330
    %s332 = ssub.s32 %s20, %s27
    %p333 = scmp.eq.s32.totalorder %s332, 0
    %s335 = sadd.s32 %s334, 1
    %s336 = scalar_select %p333, %s334, %s335
    %p339 = pneg %p333
    %p340 = scmp.eq.s32.totalorder %s20, 1
    %p341 = por %p339, %p340
    %p342 = scmp.ne.s32.totalorder %s334, %s337
    %p343 = scmp.eq.s32.totalorder %s20, 0
    %p344 = por %p342, %p343
    %p345 = scmp.ne.s32.totalorder %s334, %s337
    %p346 = scmp.eq.s32.totalorder %s25, 1
    %p347 = por %p345, %p346
    %p348 = scmp.ne.s32.totalorder %s337, %s338
    %p349 = scmp.eq.s32.totalorder %s25, 0
    %p350 = por %p348, %p349
    %p351 = scmp.ne.s32.totalorder %s337, %s338
    %p352 = scmp.eq.s32.totalorder %s26, 1
    %p353 = por %p351, %p352
    %p355 = scmp.ne.s32.totalorder %s338, %s354
    %p356 = scmp.eq.s32.totalorder %s26, 0
    %p357 = por %p355, %p356
    %p358 = scmp.le.s32.totalorder 1, %s20
    %p359 = scmp.lt.s32.totalorder %s20, 3
    %p360 = pnand %p358, %p359
    %p361 = pneg %p360
    // Predicated region
    $region9: #{distilbert_forward.4} parent=5 // pred_check
      _
    $region10: #{distilbert_forward.4} parent=5 // pred_check_branch
      %363 = sbr.rel (%p360) target = $region12
    $region11: #{distilbert_forward.4} parent=5 // pred_region
      %s364 = ssub.s32 %s20, 1
      // Predicated region
      $region13: #{distilbert_forward.4} parent=11 // pred_check
        %p365 = pneg %p93
      $region14: #{distilbert_forward.4} parent=11 // pred_check_branch
        %367 = sbr.rel (%p365) target = $region16
      $region15: #{distilbert_forward.4} parent=11 // pred_region
        _
      $region16: #{distilbert_forward.4} parent=11 // pred_fallthru
        _
      // Predicated region
      $region17: #{distilbert_forward.4} parent=11 // pred_check
        %p368 = pneg %p114
      $region18: #{distilbert_forward.4} parent=11 // pred_check_branch
        %370 = sbr.rel (%p368) target = $region20
      $region19: #{distilbert_forward.4} parent=11 // pred_region
        _
      $region20: #{distilbert_forward.4} parent=11 // pred_fallthru
        _
      // Predicated region
      $region21: #{distilbert_forward.4} parent=11 // pred_check
        %p371 = pneg %p135
      $region22: #{distilbert_forward.4} parent=11 // pred_check_branch
        %373 = sbr.rel (%p371) target = $region24
      $region23: #{distilbert_forward.4} parent=11 // pred_region
        _
      $region24: #{distilbert_forward.4} parent=11 // pred_fallthru
        _
      // Predicated region
      $region25: #{distilbert_forward.4} parent=11 // pred_check
        %p374 = pneg %p156
      $region26: #{distilbert_forward.4} parent=11 // pred_check_branch
        %376 = sbr.rel (%p374) target = $region28
      $region27: #{distilbert_forward.4} parent=11 // pred_region
        _
      $region28: #{distilbert_forward.4} parent=11 // pred_fallthru
        _
      // Predicated region
      $region29: #{distilbert_forward.4} parent=11 // pred_check
        %p377 = pneg %p177
      $region30: #{distilbert_forward.4} parent=11 // pred_check_branch
        %379 = sbr.rel (%p377) target = $region32
      $region31: #{distilbert_forward.4} parent=11 // pred_region
        _
      $region32: #{distilbert_forward.4} parent=11 // pred_fallthru
        _
      // Predicated region
      $region33: #{distilbert_forward.4} parent=11 // pred_check
        %p380 = pneg %p198
      $region34: #{distilbert_forward.4} parent=11 // pred_check_branch
        %382 = sbr.rel (%p380) target = $region36
      $region35: #{distilbert_forward.4} parent=11 // pred_region
        _
      $region36: #{distilbert_forward.4} parent=11 // pred_fallthru
        _
      // Predicated region
      $region37: #{distilbert_forward.4} parent=11 // pred_check
        %p383 = pneg %p219
      $region38: #{distilbert_forward.4} parent=11 // pred_check_branch
        %385 = sbr.rel (%p383) target = $region40
      $region39: #{distilbert_forward.4} parent=11 // pred_region
        _
      $region40: #{distilbert_forward.4} parent=11 // pred_fallthru
        _
      // Predicated region
      $region41: #{distilbert_forward.4} parent=11 // pred_check
        %p386 = pneg %p240
      $region42: #{distilbert_forward.4} parent=11 // pred_check_branch
        %388 = sbr.rel (%p386) target = $region44
      $region43: #{distilbert_forward.4} parent=11 // pred_region
        _
      $region44: #{distilbert_forward.4} parent=11 // pred_fallthru
        _
      // Predicated region
      $region45: #{distilbert_forward.4} parent=11 // pred_check
        %p389 = pneg %p261
      $region46: #{distilbert_forward.4} parent=11 // pred_check_branch
        %391 = sbr.rel (%p389) target = $region48
      $region47: #{distilbert_forward.4} parent=11 // pred_region
        _
      $region48: #{distilbert_forward.4} parent=11 // pred_fallthru
        _
      // Predicated region
      $region49: #{distilbert_forward.4} parent=11 // pred_check
        %p392 = pneg %p282
      $region50: #{distilbert_forward.4} parent=11 // pred_check_branch
        %394 = sbr.rel (%p392) target = $region52
      $region51: #{distilbert_forward.4} parent=11 // pred_region
        _
      $region52: #{distilbert_forward.4} parent=11 // pred_fallthru
        _
      // Predicated region
      $region53: #{distilbert_forward.4} parent=11 // pred_check
        %p395 = pneg %p303
      $region54: #{distilbert_forward.4} parent=11 // pred_check_branch
        %397 = sbr.rel (%p395) target = $region56
      $region55: #{distilbert_forward.4} parent=11 // pred_region
        _
      $region56: #{distilbert_forward.4} parent=11 // pred_fallthru
        _
      // Predicated region
      $region57: #{distilbert_forward.4} parent=11 // pred_check
        %p398 = pneg %p324
      $region58: #{distilbert_forward.4} parent=11 // pred_check_branch
        %400 = sbr.rel (%p398) target = $region60
      $region59: #{distilbert_forward.4} parent=11 // pred_region
        _
      $region60: #{distilbert_forward.4} parent=11 // pred_fallthru
        _
    $region12: #{distilbert_forward.4} parent=5 // pred_fallthru
      _
    %p401 = scmp.lt.s32.totalorder %s20, 2
    // Predicated region
    $region61: #{distilbert_forward.4} parent=5 // pred_check
      %p402 = pneg %p401
    $region62: #{distilbert_forward.4} parent=5 // pred_check_branch
      %404 = sbr.rel (%p402) target = $region64
    $region63: #{distilbert_forward.4} parent=5 // pred_region
      // Predicated region
      $region65: #{distilbert_forward.4} parent=63 // pred_check
        %p405 = pneg %p40
      $region66: #{distilbert_forward.4} parent=63 // pred_check_branch
        %407 = sbr.rel (%p405) target = $region68
      $region67: #{distilbert_forward.4} parent=63 // pred_region
        %p408 = scmp.lt.s32.totalorder %s20, 1
        %s409 = scalar_select %p408, %s20, 1
        %s410 = scalar_lea.vmem %s0, %s409
      $region68: #{distilbert_forward.4} parent=63 // pred_fallthru
        _
      // Predicated region
      $region69: #{distilbert_forward.4} parent=63 // pred_check
        %p411 = pneg %p66
      $region70: #{distilbert_forward.4} parent=63 // pred_check_branch
        %413 = sbr.rel (%p411) target = $region72
      $region71: #{distilbert_forward.4} parent=63 // pred_region
        %p414 = scmp.lt.s32.totalorder %s20, 1
        %s415 = scalar_select %p414, %s20, 1
        %s416 = smul.addr %s415, 4
        %s417 = scalar_lea.vmem %s1, %s416
      $region72: #{distilbert_forward.4} parent=63 // pred_fallthru
        _
    $region64: #{distilbert_forward.4} parent=5 // pred_fallthru
      _
    %p418 = scmp.le.s32.totalorder 1, %s20
    %p419 = scmp.lt.s32.totalorder %s20, 3
    %p420 = pnand %p418, %p419
    %p421 = pneg %p420
    // Predicated region
    $region73: #{distilbert_forward.4} parent=5 // pred_check
      _
    $region74: #{distilbert_forward.4} parent=5 // pred_check_branch
      %423 = sbr.rel (%p420) target = $region76
    $region75: #{distilbert_forward.4} parent=5 // pred_region
      %s424 = ssub.s32 %s20, 1
      %p425 = scmp.lt.s32.totalorder %s25, 1
      %s426 = scalar_select %p425, %s25, 1
      %s427 = scalar_lea.vmem %s0, %s426
      %p428 = pneg %p46
      %p429 = pneg %p43
      %p430 = scmp.lt.s32.totalorder %s25, 1
      %s431 = scalar_select %p430, %s25, 1
      %s432 = smul.addr %s431, 4
      %s433 = scalar_lea.vmem %s1, %s432
      %p434 = pneg %p72
      %p435 = pneg %p69
      %p436 = pneg %p93
      %p437 = pneg %p90
      %p438 = pneg %p114
      %p439 = pneg %p111
      %p440 = pneg %p135
      %p441 = pneg %p132
      %p442 = pneg %p156
      %p443 = pneg %p153
      %p444 = pneg %p177
      %p445 = pneg %p174
      %p446 = pneg %p198
      %p447 = pneg %p195
      %p448 = pneg %p219
      %p449 = pneg %p216
      %p450 = pneg %p240
      %p451 = pneg %p237
      %p452 = pneg %p261
      %p453 = pneg %p258
      %p454 = pneg %p282
      %p455 = pneg %p279
      %p456 = pneg %p303
      %p457 = pneg %p300
      %p458 = pneg %p324
      %p459 = pneg %p321
      %p460 = pneg %p350
      %p461 = pneg %p347
      %p462 = scmp.lt.s32.totalorder %s25, 1
      %s463 = scalar_select %p462, %s25, 1
      %s464 = smul.addr %s463, 4
      %s465 = scalar_lea.vmem %s14, %s464
      %p466 = scmp.lt.s32.totalorder %s25, 1
      %s467 = scalar_select %p466, %s25, 1
      %s468 = scalar_lea.vmem %s0, %s467
      %p469 = scmp.lt.s32.totalorder %s25, 1
      %s470 = scalar_select %p469, %s25, 1
      %s471 = smul.addr %s470, 4
      %s472 = scalar_lea.vmem %s1, %s471
      %p473 = scmp.lt.s32.totalorder %s25, 1
      %s474 = scalar_select %p473, %s25, 1
      %s475 = smul.addr %s474, 4
      %s476 = scalar_lea.vmem %s14, %s475
      %v478 = vld [vmem:[%s472] sm:$0xf]
      %v479 = vunpack.c.l.bf16 %v478
      %v480 = vpack.c.bf16 %v479, %v479
      %v481 = vld [vmem:[%s2] sm:$0xf]
      %v482 = vld [vmem:[%s2 + $0x4] sm:$0xf]
      %v483 = vld [vmem:[%s2 + $0x8] sm:$0xf]
      %v484 = vld [vmem:[%s2 + $0xc] sm:$0xf]
      %v485 = vld [vmem:[%s3] sm:$0x1]
      %v487 = vperm.slane %v485, 0
      %v493 = vunpack.c.l.b16 %v481
      %v494 = vunpack.c.l.b16 %v482
      %v495 = vunpack.c.l.b16 %v483
      %v496 = vunpack.c.l.b16 %v484
      %v497 = vpack.c.b16 %v494, %v493
      %v498 = vpack.c.b16 %v496, %v495
      %vm501 = vcmask 261120
      %v503 = vsel %vm501, %v480, 0
      %505 = vmatpush.bf16.msra.mxu0 0
      %506 = vmatpush.bf16.msra.mxu0 0
      %507 = vmatpush.bf16.msra.mxu0 0
      %508 = vmatpush.bf16.msra.mxu0 0
      %509 = vmatpush.bf16.msra.mxu0 0
      %510 = vmatpush.bf16.msra.mxu0 0
      %511 = vmatpush.bf16.msra.mxu0 %v498
      %512 = vmatpush.bf16.msra.mxu0 %v497
      %513 = vmatmul.bf16.gmra.mxu0 %v503
      %v514 = vpop.f32.mrf.mxu0
      %v515 = vadd.f32 %v487, %v514
      %v516 = vpop.f32.mrf.mxu0
      %517 = vdwg.mxu0
      %v518 = vpack.c.bf16 %v515, %v515
      %vm519 = vcmask 781312
      %520 = vst.msk [vmem:[#allocation2] sm:$0xf] %vm519, %v518
      %v521 = vld [vmem:[%s468] sm:$0x1]
      %vm522 = vcmp.gt.f32.partialorder %v521, 0.0
      %v523 = vsel %vm522, 0.0, -3.4028235e+38
      %v524 = vld [vmem:[#allocation2] sm:$0xf]
      %v526 = vunpack.c.l.b16 %v524
      %v527 = vpack.c.b16 %v526, %v526
      %528 = vrot.lane.b32.xlu0 %v527, 96
      %v529 = vpop.permute.xlu0 %528
      %vm530 = vcmask 64512
      %v532 = vsel %vm530, %v524, 0
      %v535 = vsel %vm530, %v529, 0
      %537 = vmatpush.bf16.xpose.msra.mxu0 0
      %538 = vmatpush.bf16.xpose.msra.mxu0 0
      %539 = vmatpush.bf16.xpose.msra.mxu0 0
      %540 = vmatpush.bf16.xpose.msra.mxu0 0
      %541 = vmatpush.bf16.xpose.msra.mxu0 0
      %542 = vmatpush.bf16.xpose.msra.mxu0 0
      %543 = vmatpush.bf16.xpose.msra.mxu0 0
      %544 = vmatpush.bf16.xpose.msra.mxu0 %v535
      %545 = vmatmul.bf16.gmra.mxu0 %v532
      %v546 = vpop.f32.mrf.mxu0
      %v547 = vadd.f32 0.0, %v546
      %v548 = vpop.f32.mrf.mxu0
      %549 = vdwg.mxu0
      %v550 = vmul.f32 %v547, 0.35355338
      %v552 = vperm.slane %v523, 0
      %v554 = vadd.f32 %v550, %v552
      %v555 = vsel %vm530, %v554, -inf
      %556 = vmax.xlane.f32.xlu0 %v555
      %v557 = vpop.xlane.xlu0 %556
      %v558 = vsub.f32 %v554, %v557
      %v559 = vmul.f32 %v558, 1.442695
      %v560 = vpow.pop %v559
      %v561 = vsel %vm530, %v560, 0.0
      %562 = vadd.xlane.f32.xlu0 %v561
      %v563 = vpop.xlane.xlu0 %562
      %v564 = vrcp.pop %v563
      %v565 = vmul.f32 %v560, %v564
      %v566 = vpack.c.bf16 %v565, %v565
      %567 = vrot.lane.b32.xlu0 %v527, 64
      %v568 = vpop.permute.xlu0 %567
      %v570 = vsel %vm530, %v566, 0
      %vm572 = vcmask 1043456
      %v574 = vsel %vm572, %v568, 0
      %576 = vmatpush.bf16.msra.mxu0 0
      %577 = vmatpush.bf16.msra.mxu0 0
      %578 = vmatpush.bf16.msra.mxu0 0
      %579 = vmatpush.bf16.msra.mxu0 0
      %580 = vmatpush.bf16.msra.mxu0 0
      %581 = vmatpush.bf16.msra.mxu0 0
      %582 = vmatpush.bf16.msra.mxu0 0
      %583 = vmatpush.bf16.msra.mxu0 %v574
      %584 = vmatmul.bf16.gmra.mxu0 %v570
      %v585 = vpop.f32.mrf.mxu0
      %v586 = vadd.f32 0.0, %v585
      %v587 = vpop.f32.mrf.mxu0
      %588 = vdwg.mxu0
      %v589 = vpack.c.bf16 %v586, %v586
      %vm590 = vcmask 60416
      %591 = vst.msk [vmem:[#allocation3] sm:$0xf] %vm590, %v589
      %v592 = vld [vmem:[#allocation2] sm:$0xf]
      %v594 = vunpack.c.l.b16 %v592
      %v595 = vpack.c.b16 %v594, %v594
      %596 = vrot.lane.b32.xlu0 %v595, 120
      %v597 = vpop.permute.xlu0 %596
      %598 = vrot.lane.b32.xlu0 %v595, 88
      %v599 = vpop.permute.xlu0 %598
      %v601 = vsel %vm530, %v597, 0
      %v604 = vsel %vm530, %v599, 0
      %606 = vmatpush.bf16.xpose.msra.mxu0 0
      %607 = vmatpush.bf16.xpose.msra.mxu0 0
      %608 = vmatpush.bf16.xpose.msra.mxu0 0
      %609 = vmatpush.bf16.xpose.msra.mxu0 0
      %610 = vmatpush.bf16.xpose.msra.mxu0 0
      %611 = vmatpush.bf16.xpose.msra.mxu0 0
      %612 = vmatpush.bf16.xpose.msra.mxu0 0
      %613 = vmatpush.bf16.xpose.msra.mxu0 %v604
      %614 = vmatmul.bf16.gmra.mxu0 %v601
      %v615 = vpop.f32.mrf.mxu0
      %v616 = vadd.f32 0.0, %v615
      %v617 = vpop.f32.mrf.mxu0
      %618 = vdwg.mxu0
      %v619 = vmul.f32 %v616, 0.35355338
      %v620 = vadd.f32 %v619, %v552
      %v621 = vsel %vm530, %v620, -inf
      %622 = vmax.xlane.f32.xlu0 %v621
      %v623 = vpop.xlane.xlu0 %622
      %v624 = vsub.f32 %v620, %v623
      %v625 = vmul.f32 %v624, 1.442695
      %v626 = vpow.pop %v625
      %v627 = vsel %vm530, %v626, 0.0
      %628 = vadd.xlane.f32.xlu0 %v627
      %v629 = vpop.xlane.xlu0 %628
      %v630 = vrcp.pop %v629
      %v631 = vmul.f32 %v626, %v630
      %v632 = vpack.c.bf16 %v631, %v631
      %633 = vrot.lane.b32.xlu0 %v595, 56
      %v634 = vpop.permute.xlu0 %633
      %v636 = vsel %vm530, %v632, 0
      %v639 = vsel %vm572, %v634, 0
      %641 = vmatpush.bf16.msra.mxu0 0
      %642 = vmatpush.bf16.msra.mxu0 0
      %643 = vmatpush.bf16.msra.mxu0 0
      %644 = vmatpush.bf16.msra.mxu0 0
      %645 = vmatpush.bf16.msra.mxu0 0
      %646 = vmatpush.bf16.msra.mxu0 0
      %647 = vmatpush.bf16.msra.mxu0 0
      %648 = vmatpush.bf16.msra.mxu0 %v639
      %649 = vmatmul.bf16.gmra.mxu0 %v636
      %v650 = vpop.f32.mrf.mxu0
      %v651 = vadd.f32 0.0, %v650
      %v652 = vpop.f32.mrf.mxu0
      %653 = vdwg.mxu0
      %v654 = vpack.c.bf16 %v651, %v651
      %656 = vrot.lane.b32.xlu0 %v654, 8
      %v657 = vpop.permute.xlu0 %656
      %vm659 = vcmask 126016
      %660 = vst.msk [vmem:[#allocation3] sm:$0xf] %vm659, %v657
      %v661 = vld [vmem:[#allocation2] sm:$0xf]
      %v663 = vunpack.c.l.b16 %v661
      %v664 = vpack.c.b16 %v663, %v663
      %665 = vrot.lane.b32.xlu0 %v664, 112
      %v666 = vpop.permute.xlu0 %665
      %667 = vrot.lane.b32.xlu0 %v664, 80
      %v668 = vpop.permute.xlu0 %667
      %v670 = vsel %vm530, %v666, 0
      %v673 = vsel %vm530, %v668, 0
      %675 = vmatpush.bf16.xpose.msra.mxu0 0
      %676 = vmatpush.bf16.xpose.msra.mxu0 0
      %677 = vmatpush.bf16.xpose.msra.mxu0 0
      %678 = vmatpush.bf16.xpose.msra.mxu0 0
      %679 = vmatpush.bf16.xpose.msra.mxu0 0
      %680 = vmatpush.bf16.xpose.msra.mxu0 0
      %681 = vmatpush.bf16.xpose.msra.mxu0 0
      %682 = vmatpush.bf16.xpose.msra.mxu0 %v673
      %683 = vmatmul.bf16.gmra.mxu0 %v670
      %v684 = vpop.f32.mrf.mxu0
      %v685 = vadd.f32 0.0, %v684
      %v686 = vpop.f32.mrf.mxu0
      %687 = vdwg.mxu0
      %v688 = vmul.f32 %v685, 0.35355338
      %v689 = vadd.f32 %v688, %v552
      %v690 = vsel %vm530, %v689, -inf
      %691 = vmax.xlane.f32.xlu0 %v690
      %v692 = vpop.xlane.xlu0 %691
      %v693 = vsub.f32 %v689, %v692
      %v694 = vmul.f32 %v693, 1.442695
      %v695 = vpow.pop %v694
      %v696 = vsel %vm530, %v695, 0.0
      %697 = vadd.xlane.f32.xlu0 %v696
      %v698 = vpop.xlane.xlu0 %697
      %v699 = vrcp.pop %v698
      %v700 = vmul.f32 %v695, %v699
      %v701 = vpack.c.bf16 %v700, %v700
      %702 = vrot.lane.b32.xlu0 %v664, 48
      %v703 = vpop.permute.xlu0 %702
      %v705 = vsel %vm530, %v701, 0
      %v708 = vsel %vm572, %v703, 0
      %710 = vmatpush.bf16.msra.mxu0 0
      %711 = vmatpush.bf16.msra.mxu0 0
      %712 = vmatpush.bf16.msra.mxu0 0
      %713 = vmatpush.bf16.msra.mxu0 0
      %714 = vmatpush.bf16.msra.mxu0 0
      %715 = vmatpush.bf16.msra.mxu0 0
      %716 = vmatpush.bf16.msra.mxu0 0
      %717 = vmatpush.bf16.msra.mxu0 %v708
      %718 = vmatmul.bf16.gmra.mxu0 %v705
      %v719 = vpop.f32.mrf.mxu0
      %v720 = vadd.f32 0.0, %v719
      %v721 = vpop.f32.mrf.mxu0
      %722 = vdwg.mxu0
      %v723 = vpack.c.bf16 %v720, %v720
      %725 = vrot.lane.b32.xlu0 %v723, 16
      %v726 = vpop.permute.xlu0 %725
      %vm728 = vcmask 191616
      %729 = vst.msk [vmem:[#allocation3] sm:$0xf] %vm728, %v726
      %v730 = vld [vmem:[#allocation2] sm:$0xf]
      %v732 = vunpack.c.l.b16 %v730
      %v733 = vpack.c.b16 %v732, %v732
      %734 = vrot.lane.b32.xlu0 %v733, 104
      %v735 = vpop.permute.xlu0 %734
      %736 = vrot.lane.b32.xlu0 %v733, 72
      %v737 = vpop.permute.xlu0 %736
      %v739 = vsel %vm530, %v735, 0
      %v742 = vsel %vm530, %v737, 0
      %744 = vmatpush.bf16.xpose.msra.mxu0 0
      %745 = vmatpush.bf16.xpose.msra.mxu0 0
      %746 = vmatpush.bf16.xpose.msra.mxu0 0
      %747 = vmatpush.bf16.xpose.msra.mxu0 0
      %748 = vmatpush.bf16.xpose.msra.mxu0 0
      %749 = vmatpush.bf16.xpose.msra.mxu0 0
      %750 = vmatpush.bf16.xpose.msra.mxu0 0
      %751 = vmatpush.bf16.xpose.msra.mxu0 %v742
      %752 = vmatmul.bf16.gmra.mxu0 %v739
      %v753 = vpop.f32.mrf.mxu0
      %v754 = vadd.f32 0.0, %v753
      %v755 = vpop.f32.mrf.mxu0
      %756 = vdwg.mxu0
      %v757 = vmul.f32 %v754, 0.35355338
      %v758 = vadd.f32 %v757, %v552
      %v759 = vsel %vm530, %v758, -inf
      %760 = vmax.xlane.f32.xlu0 %v759
      %v761 = vpop.xlane.xlu0 %760
      %v762 = vsub.f32 %v758, %v761
      %v763 = vmul.f32 %v762, 1.442695
      %v764 = vpow.pop %v763
      %v765 = vsel %vm530, %v764, 0.0
      %766 = vadd.xlane.f32.xlu0 %v765
      %v767 = vpop.xlane.xlu0 %766
      %v768 = vrcp.pop %v767
      %v769 = vmul.f32 %v764, %v768
      %v770 = vpack.c.bf16 %v769, %v769
      %771 = vrot.lane.b32.xlu0 %v733, 40
      %v772 = vpop.permute.xlu0 %771
      %v774 = vsel %vm530, %v770, 0
      %v777 = vsel %vm572, %v772, 0
      %779 = vmatpush.bf16.msra.mxu0 0
      %780 = vmatpush.bf16.msra.mxu0 0
      %781 = vmatpush.bf16.msra.mxu0 0
      %782 = vmatpush.bf16.msra.mxu0 0
      %783 = vmatpush.bf16.msra.mxu0 0
      %784 = vmatpush.bf16.msra.mxu0 0
      %785 = vmatpush.bf16.msra.mxu0 0
      %786 = vmatpush.bf16.msra.mxu0 %v777
      %787 = vmatmul.bf16.gmra.mxu0 %v774
      %v788 = vpop.f32.mrf.mxu0
      %v789 = vadd.f32 0.0, %v788
      %v790 = vpop.f32.mrf.mxu0
      %791 = vdwg.mxu0
      %v792 = vpack.c.bf16 %v789, %v789
      %794 = vrot.lane.b32.xlu0 %v792, 24
      %v795 = vpop.permute.xlu0 %794
      %vm797 = vcmask 257216
      %798 = vst.msk [vmem:[#allocation3] sm:$0xf] %vm797, %v795
      %v799 = vld [vmem:[#allocation3] sm:$0xf]
      %v800 = vld [vmem:[%s4] sm:$0xf]
      %v801 = vld [vmem:[%s4 + $0x4] sm:$0xf]
      %v802 = vld [vmem:[%s4 + $0x8] sm:$0xf]
      %v803 = vld [vmem:[%s4 + $0xc] sm:$0xf]
      %v804 = vld [vmem:[%s5] sm:$0x1]
      %v806 = vperm.slane %v804, 0
      %v812 = vunpack.c.l.b16 %v800
      %v813 = vunpack.c.l.b16 %v801
      %v814 = vunpack.c.l.b16 %v802
      %v815 = vunpack.c.l.b16 %v803
      %v816 = vpack.c.b16 %v813, %v812
      %v817 = vpack.c.b16 %v815, %v814
      %v821 = vsel %vm501, %v799, 0
      %823 = vmatpush.bf16.msra.mxu0 0
      %824 = vmatpush.bf16.msra.mxu0 0
      %825 = vmatpush.bf16.msra.mxu0 0
      %826 = vmatpush.bf16.msra.mxu0 0
      %827 = vmatpush.bf16.msra.mxu0 0
      %828 = vmatpush.bf16.msra.mxu0 0
      %829 = vmatpush.bf16.msra.mxu0 %v817
      %830 = vmatpush.bf16.msra.mxu0 %v816
      %831 = vmatmul.bf16.gmra.mxu0 %v821
      %v832 = vpop.f32.mrf.mxu0
      %v833 = vadd.f32 %v806, %v832
      %v834 = vpop.f32.mrf.mxu0
      %835 = vdwg.mxu0
      %v836 = vadd.f32 %v833, %v479
      %v837 = vld [vmem:[%s6] sm:$0x1]
      %v838 = vld [vmem:[%s7] sm:$0x1]
      %v839 = vsel %vm501, %v836, 0.0
      %840 = vadd.xlane.f32.xlu0 %v839
      %v841 = vpop.xlane.xlu0 %840
      %v842 = vrcp.pop 32.0
      %v843 = vmul.f32 32.0, %v842
      %v844 = vsub.f32 1.0, %v843
      %v845 = vmul.f32 %v842, %v844
      %v846 = vadd.f32 %v842, %v845
      %vm847 = vweird.f32 %v842
      %v848 = vsel %vm847, %v842, %v846
      %v849 = vmul.f32 %v841, %v848
      %v850 = vsub.f32 %v836, %v849
      %v851 = vmul.f32 %v850, %v850
      %v852 = vsel %vm501, %v851, 0.0
      %853 = vadd.xlane.f32.xlu0 %v852
      %v854 = vpop.xlane.xlu0 %853
      %v855 = vmul.f32 %v854, %v848
      %v856 = vadd.f32 %v855, 1e-12
      %v857 = vrsqrt.pop %v856
      %v858 = vmul.f32 %v857, %v856
      %v859 = vmul.f32 %v858, %v857
      %v860 = vmul.f32 0.5, %v859
      %v861 = vsub.f32 1.5, %v860
      %v862 = vmul.f32 %v857, %v861
      %vm863 = vweird.f32 %v856
      %vm864 = vweird.f32 %v857
      %vm865 = vmor %vm863, %vm864
      %v866 = vsel %vm865, %v857, %v862
      %v867 = vmul.f32 %v850, %v866
      %v869 = vperm.slane %v837, 0
      %v871 = vmul.f32 %v867, %v869
      %v873 = vperm.slane %v838, 0
      %v875 = vadd.f32 %v871, %v873
      %v876 = vpack.c.bf16 %v875, %v875
      %v877 = vld [vmem:[%s8] sm:$0xf]
      %v878 = vld [vmem:[%s8 + $0x4] sm:$0xf]
      %v879 = vld [vmem:[%s8 + $0x8] sm:$0xf]
      %v880 = vld [vmem:[%s8 + $0xc] sm:$0xf]
      %v881 = vld [vmem:[%s9] sm:$0x1]
      %v883 = vperm.slane %v881, 0
      %v889 = vunpack.c.l.b16 %v877
      %v890 = vunpack.c.l.b16 %v878
      %v891 = vunpack.c.l.b16 %v879
      %v892 = vunpack.c.l.b16 %v880
      %v893 = vpack.c.b16 %v890, %v889
      %v894 = vpack.c.b16 %v892, %v891
      %v898 = vsel %vm501, %v876, 0
      %900 = vmatpush.bf16.msra.mxu0 0
      %901 = vmatpush.bf16.msra.mxu0 0
      %902 = vmatpush.bf16.msra.mxu0 0
      %903 = vmatpush.bf16.msra.mxu0 0
      %904 = vmatpush.bf16.msra.mxu0 0
      %905 = vmatpush.bf16.msra.mxu0 0
      %906 = vmatpush.bf16.msra.mxu0 %v894
      %907 = vmatpush.bf16.msra.mxu0 %v893
      %908 = vmatmul.bf16.gmra.mxu0 %v898
      %v909 = vpop.f32.mrf.mxu0
      %v910 = vadd.f32 %v883, %v909
      %v911 = vpop.f32.mrf.mxu0
      %912 = vdwg.mxu0
      %v913 = vmul.f32 %v910, %v910
      %v914 = vmul.f32 %v910, %v913
      %v915 = vmul.f32 %v914, 0.044715
      %v916 = vadd.f32 %v910, %v915
      %v917 = vmul.f32 %v916, 0.7978846
      %v918 = vtanh.pop %v917
      %v919 = vadd.f32 %v918, 1.0
      %v920 = vmul.f32 %v919, 0.5
      %v921 = vmul.f32 %v910, %v920
      %v922 = vpack.c.bf16 %v921, %v921
      %v923 = vld [vmem:[%s10] sm:$0xf]
      %v924 = vld [vmem:[%s10 + $0x4] sm:$0xf]
      %v925 = vld [vmem:[%s10 + $0x8] sm:$0xf]
      %v926 = vld [vmem:[%s10 + $0xc] sm:$0xf]
      %v927 = vld [vmem:[%s10 + $0x10] sm:$0xf]
      %v928 = vld [vmem:[%s10 + $0x14] sm:$0xf]
      %v929 = vld [vmem:[%s10 + $0x18] sm:$0xf]
      %v930 = vld [vmem:[%s10 + $0x1c] sm:$0xf]
      %v931 = vld [vmem:[%s11] sm:$0x1]
      %v933 = vperm.slane %v931, 0
      %v943 = vunpack.c.l.b16 %v923
      %v944 = vunpack.c.l.b16 %v924
      %v945 = vunpack.c.l.b16 %v925
      %v946 = vunpack.c.l.b16 %v926
      %v947 = vunpack.c.l.b16 %v927
      %v948 = vunpack.c.l.b16 %v928
      %v949 = vunpack.c.l.b16 %v929
      %v950 = vunpack.c.l.b16 %v930
      %v951 = vpack.c.b16 %v944, %v943
      %v952 = vpack.c.b16 %v946, %v945
      %v953 = vpack.c.b16 %v948, %v947
      %v954 = vpack.c.b16 %v950, %v949
      %vm959 = vcmask 523264
      %v961 = vsel %vm959, %v922, 0
      %963 = vmatpush.bf16.msra.mxu0 0
      %964 = vmatpush.bf16.msra.mxu0 0
      %965 = vmatpush.bf16.msra.mxu0 0
      %966 = vmatpush.bf16.msra.mxu0 0
      %967 = vmatpush.bf16.msra.mxu0 %v954
      %968 = vmatpush.bf16.msra.mxu0 %v953
      %969 = vmatpush.bf16.msra.mxu0 %v952
      %970 = vmatpush.bf16.msra.mxu0 %v951
      %971 = vmatmul.bf16.gmra.mxu0 %v961
      %v972 = vpop.f32.mrf.mxu0
      %v973 = vadd.f32 %v933, %v972
      %v974 = vpop.f32.mrf.mxu0
      %975 = vdwg.mxu0
      %v976 = vadd.f32 %v973, %v875
      %v977 = vld [vmem:[%s12] sm:$0x1]
      %v978 = vld [vmem:[%s13] sm:$0x1]
      %v979 = vsel %vm501, %v976, 0.0
      %980 = vadd.xlane.f32.xlu0 %v979
      %v981 = vpop.xlane.xlu0 %980
      %v982 = vmul.f32 %v981, %v848
      %v983 = vsub.f32 %v976, %v982
      %v984 = vmul.f32 %v983, %v983
      %v985 = vsel %vm501, %v984, 0.0
      %986 = vadd.xlane.f32.xlu0 %v985
      %v987 = vpop.xlane.xlu0 %986
      %v988 = vmul.f32 %v987, %v848
      %v989 = vadd.f32 %v988, 1e-12
      %v990 = vrsqrt.pop %v989
      %v991 = vmul.f32 %v990, %v989
      %v992 = vmul.f32 %v991, %v990
      %v993 = vmul.f32 0.5, %v992
      %v994 = vsub.f32 1.5, %v993
      %v995 = vmul.f32 %v990, %v994
      %vm996 = vweird.f32 %v989
      %vm997 = vweird.f32 %v990
      %vm998 = vmor %vm996, %vm997
      %v999 = vsel %vm998, %v990, %v995
      %v1000 = vmul.f32 %v983, %v999
      %v1002 = vperm.slane %v977, 0
      %v1004 = vmul.f32 %v1000, %v1002
      %v1006 = vperm.slane %v978, 0
      %v1008 = vadd.f32 %v1004, %v1006
      %v1009 = vpack.c.bf16 %v1008, %v1008
      %vm1010 = vcmask 257024
      %1011 = vst.msk [vmem:[%s476] sm:$0xf] %vm1010, %v1009
      %p1012 = scmp.lt.s32.totalorder %s25, 1
      %s1013 = scalar_select %p1012, %s25, 1
      %s1014 = smul.addr %s1013, 4
      %s1015 = scalar_lea.vmem %s14, %s1014
      // Predicated region
      $region77: #{distilbert_forward.4} parent=75 // pred_check
        %p1016 = pneg %p347
      $region78: #{distilbert_forward.4} parent=75 // pred_check_branch
        %1018 = sbr.rel (%p1016) target = $region80
      $region79: #{distilbert_forward.4} parent=75 // pred_region
        _
      $region80: #{distilbert_forward.4} parent=75 // pred_fallthru
        _
    $region76: #{distilbert_forward.4} parent=5 // pred_fallthru
      _
    %p1019 = scmp.le.s32.totalorder 2, %s20
    // Predicated region
    $region81: #{distilbert_forward.4} parent=5 // pred_check
      %p1020 = pneg %p1019
    $region82: #{distilbert_forward.4} parent=5 // pred_check_branch
      %1022 = sbr.rel (%p1020) target = $region84
    $region83: #{distilbert_forward.4} parent=5 // pred_region
      %s1023 = ssub.s32 %s20, 2
      // Predicated region
      $region85: #{distilbert_forward.4} parent=83 // pred_check
        %p1024 = pneg %p353
      $region86: #{distilbert_forward.4} parent=83 // pred_check_branch
        %1026 = sbr.rel (%p1024) target = $region88
      $region87: #{distilbert_forward.4} parent=83 // pred_region
        %p1027 = scmp.lt.s32.totalorder %s26, 1
        %s1028 = scalar_select %p1027, %s26, 1
        %s1029 = smul.addr %s1028, 4
        %s1030 = scalar_lea.vmem %s14, %s1029
      $region88: #{distilbert_forward.4} parent=83 // pred_fallthru
        _
    $region84: #{distilbert_forward.4} parent=5 // pred_fallthru
      _
  $region6: #{distilbert_forward.4} parent=0 // loop_footer
    %s24 = sadd.s32 1, %s20
  $region7: #{distilbert_forward.4} parent=0 // loop_footer_branch
    %19 = sbr.rel target = $region3
  $region8: #{distilbert_forward.4} parent=0 // loop_exit
    _

// kernel: distilbert_forward.3
$region0: #{distilbert_forward.3}
  #allocation0 [shape = 'u32[]', space=smem, size = 0x4, offset = 0x4, fixed_abs, tag = 'smem constant byte address 0x4 - core index']
  #allocation1 [shape = 'u32[72,128]{1,0:T(1,128)}', space=vmem, size = 0x9000, scoped, tag = 'internal scratch']
  #allocation2 [shape = 'bf16[8,96]{1,0:T(8,128)(2,1)}', space=vmem, size = 0x800, scoped, tag = 'scratch operand']
  #allocation3 [shape = 'bf16[8,32]{1,0:T(8,128)(2,1)}', space=vmem, size = 0x800, scoped, tag = 'scratch operand']
  %s0 = inlined_call_operand.vmem [shape: f32[2,1,8], index: 0, kind: input, shape index: {}]
  %s1 = inlined_call_operand.vmem [shape: bf16[2,8,32], index: 1, kind: input, shape index: {}]
  %s2 = inlined_call_operand.vmem [shape: f32[1,32], index: 2, kind: input, shape index: {}]
  %s3 = inlined_call_operand.vmem [shape: f32[1,32], index: 3, kind: input, shape index: {}]
  %s4 = inlined_call_operand.vmem [shape: bf16[32,96], index: 4, kind: input, shape index: {}]
  %s5 = inlined_call_operand.vmem [shape: f32[1,96], index: 5, kind: input, shape index: {}]
  %s6 = inlined_call_operand.vmem [shape: bf16[32,32], index: 6, kind: input, shape index: {}]
  %s7 = inlined_call_operand.vmem [shape: f32[1,32], index: 7, kind: input, shape index: {}]
  %s8 = inlined_call_operand.vmem [shape: f32[1,32], index: 8, kind: input, shape index: {}]
  %s9 = inlined_call_operand.vmem [shape: f32[1,32], index: 9, kind: input, shape index: {}]
  %s10 = inlined_call_operand.vmem [shape: bf16[32,64], index: 10, kind: input, shape index: {}]
  %s11 = inlined_call_operand.vmem [shape: f32[1,64], index: 11, kind: input, shape index: {}]
  %s12 = inlined_call_operand.vmem [shape: bf16[64,32], index: 12, kind: input, shape index: {}]
  %s13 = inlined_call_operand.vmem [shape: f32[1,32], index: 13, kind: input, shape index: {}]
  %s14 = inlined_call_operand.vmem [shape: f32[1,32], index: 14, kind: input, shape index: {}]
  %s15 = inlined_call_operand.vmem [shape: f32[1,32], index: 15, kind: input, shape index: {}]
  %s16 = inlined_call_operand.vmem [shape: bf16[2,8,32], index: 16, kind: output, shape index: {}]
  %s17 = sld [smem:[#allocation0]]
  $region97: #{distilbert_forward.3} parent=0
    _
  %s19 = ssub.s32 1, %s17
  %s20 = scalar_select 0, %s19, %s17
  loop: start=0, step=1, limit=4
  $region2: #{distilbert_forward.3} parent=0 // loop_pre_header
    _
  $region3: #{distilbert_forward.3} parent=0 // loop_header
    %s22 = sphi 0, %s26
    %p23 = scmp.ge.s32.totalorder %s22, 4
    %s32 = sphi 0, %s34
    %s35 = sphi 0, %s32
    %s36 = sphi 0, %s35
    %s52 = sphi 0, %s36
    %s58 = sphi 0, %s60
    %s61 = sphi 0, %s58
    %s62 = sphi 0, %s61
    %s78 = sphi 0, %s62
    %s82 = sphi 0, %s82
    %s84 = sphi 0, %s82
    %s85 = sphi 0, %s84
    %s99 = sphi 0, %s85
    %s103 = sphi 0, %s103
    %s105 = sphi 0, %s103
    %s106 = sphi 0, %s105
    %s120 = sphi 0, %s106
    %s124 = sphi 0, %s124
    %s126 = sphi 0, %s124
    %s127 = sphi 0, %s126
    %s141 = sphi 0, %s127
    %s145 = sphi 0, %s145
    %s147 = sphi 0, %s145
    %s148 = sphi 0, %s147
    %s162 = sphi 0, %s148
    %s166 = sphi 0, %s166
    %s168 = sphi 0, %s166
    %s169 = sphi 0, %s168
    %s183 = sphi 0, %s169
    %s187 = sphi 0, %s187
    %s189 = sphi 0, %s187
    %s190 = sphi 0, %s189
    %s204 = sphi 0, %s190
    %s208 = sphi 0, %s208
    %s210 = sphi 0, %s208
    %s211 = sphi 0, %s210
    %s225 = sphi 0, %s211
    %s229 = sphi 0, %s229
    %s231 = sphi 0, %s229
    %s232 = sphi 0, %s231
    %s246 = sphi 0, %s232
    %s250 = sphi 0, %s250
    %s252 = sphi 0, %s250
    %s253 = sphi 0, %s252
    %s267 = sphi 0, %s253
    %s271 = sphi 0, %s271
    %s273 = sphi 0, %s271
    %s274 = sphi 0, %s273
    %s288 = sphi 0, %s274
    %s292 = sphi 0, %s292
    %s294 = sphi 0, %s292
    %s295 = sphi 0, %s294
    %s309 = sphi 0, %s295
    %s313 = sphi 0, %s313
    %s315 = sphi 0, %s313
    %s316 = sphi 0, %s315
    %s330 = sphi 0, %s316
    %s334 = sphi 0, %s334
    %s336 = sphi 0, %s334
    %s337 = sphi 0, %s336
    %s351 = sphi 0, %s337
    %s355 = sphi 0, %s355
    %s357 = sphi 0, %s355
    %s358 = sphi 0, %s357
    %s372 = sphi 0, %s358
    %s378 = sphi 0, %s380
    %s381 = sphi 0, %s378
    %s382 = sphi 0, %s381
    %s398 = sphi 0, %s382
  $region4: #{distilbert_forward.3} parent=0 // loop_header_branch
    %25 = sbr.rel (%p23) target = $region8
  $region5: #{distilbert_forward.3} parent=0 // loop_body
    %s27 = ssub.s32 %s22, 1
    %s28 = ssub.s32 %s22, 2
    %s29 = sadd.s32 %s22, 1
    %s30 = ssub.s32 %s22, %s29
    %p31 = scmp.eq.s32.totalorder %s30, 0
    %s33 = sadd.s32 %s32, 1
    %s34 = scalar_select %p31, %s32, %s33
    %p37 = pneg %p31
    %p38 = scmp.eq.s32.totalorder %s22, 1
    %p39 = por %p37, %p38
    %p40 = scmp.ne.s32.totalorder %s32, %s35
    %p41 = scmp.eq.s32.totalorder %s22, 0
    %p42 = por %p40, %p41
    %p43 = scmp.ne.s32.totalorder %s32, %s35
    %p44 = scmp.eq.s32.totalorder %s27, 1
    %p45 = por %p43, %p44
    %p46 = scmp.ne.s32.totalorder %s35, %s36
    %p47 = scmp.eq.s32.totalorder %s27, 0
    %p48 = por %p46, %p47
    %p49 = scmp.ne.s32.totalorder %s35, %s36
    %p50 = scmp.eq.s32.totalorder %s28, 1
    %p51 = por %p49, %p50
    %p53 = scmp.ne.s32.totalorder %s36, %s52
    %p54 = scmp.eq.s32.totalorder %s28, 0
    %p55 = por %p53, %p54
    %s56 = ssub.s32 %s22, %s29
    %p57 = scmp.eq.s32.totalorder %s56, 0
    %s59 = sadd.s32 %s58, 1
    %s60 = scalar_select %p57, %s58, %s59
    %p63 = pneg %p57
    %p64 = scmp.eq.s32.totalorder %s22, 1
    %p65 = por %p63, %p64
    %p66 = scmp.ne.s32.totalorder %s58, %s61
    %p67 = scmp.eq.s32.totalorder %s22, 0
    %p68 = por %p66, %p67
    %p69 = scmp.ne.s32.totalorder %s58, %s61
    %p70 = scmp.eq.s32.totalorder %s27, 1
    %p71 = por %p69, %p70
    %p72 = scmp.ne.s32.totalorder %s61, %s62
    %p73 = scmp.eq.s32.totalorder %s27, 0
    %p74 = por %p72, %p73
    %p75 = scmp.ne.s32.totalorder %s61, %s62
    %p76 = scmp.eq.s32.totalorder %s28, 1
    %p77 = por %p75, %p76
    %p79 = scmp.ne.s32.totalorder %s62, %s78
    %p80 = scmp.eq.s32.totalorder %s28, 0
    %p81 = por %p79, %p80
    %s83 = sadd.s32 %s82, 1
    %p86 = scmp.eq.s32.totalorder %s22, 1
    %p87 = scmp.ne.s32.totalorder %s82, %s84
    %p88 = scmp.eq.s32.totalorder %s22, 0
    %p89 = por %p87, %p88
    %p90 = scmp.ne.s32.totalorder %s82, %s84
    %p91 = scmp.eq.s32.totalorder %s27, 1
    %p92 = por %p90, %p91
    %p93 = scmp.ne.s32.totalorder %s84, %s85
    %p94 = scmp.eq.s32.totalorder %s27, 0
    %p95 = por %p93, %p94
    %p96 = scmp.ne.s32.totalorder %s84, %s85
    %p97 = scmp.eq.s32.totalorder %s28, 1
    %p98 = por %p96, %p97
    %p100 = scmp.ne.s32.totalorder %s85, %s99
    %p101 = scmp.eq.s32.totalorder %s28, 0
    %p102 = por %p100, %p101
    %s104 = sadd.s32 %s103, 1
    %p107 = scmp.eq.s32.totalorder %s22, 1
    %p108 = scmp.ne.s32.totalorder %s103, %s105
    %p109 = scmp.eq.s32.totalorder %s22, 0
    %p110 = por %p108, %p109
    %p111 = scmp.ne.s32.totalorder %s103, %s105
    %p112 = scmp.eq.s32.totalorder %s27, 1
    %p113 = por %p111, %p112
    %p114 = scmp.ne.s32.totalorder %s105, %s106
    %p115 = scmp.eq.s32.totalorder %s27, 0
    %p116 = por %p114, %p115
    %p117 = scmp.ne.s32.totalorder %s105, %s106
    %p118 = scmp.eq.s32.totalorder %s28, 1
    %p119 = por %p117, %p118
    %p121 = scmp.ne.s32.totalorder %s106, %s120
    %p122 = scmp.eq.s32.totalorder %s28, 0
    %p123 = por %p121, %p122
    %s125 = sadd.s32 %s124, 1
    %p128 = scmp.eq.s32.totalorder %s22, 1
    %p129 = scmp.ne.s32.totalorder %s124, %s126
    %p130 = scmp.eq.s32.totalorder %s22, 0
    %p131 = por %p129, %p130
    %p132 = scmp.ne.s32.totalorder %s124, %s126
    %p133 = scmp.eq.s32.totalorder %s27, 1
    %p134 = por %p132, %p133
    %p135 = scmp.ne.s32.totalorder %s126, %s127
    %p136 = scmp.eq.s32.totalorder %s27, 0
    %p137 = por %p135, %p136
    %p138 = scmp.ne.s32.totalorder %s126, %s127
    %p139 = scmp.eq.s32.totalorder %s28, 1
    %p140 = por %p138, %p139
    %p142 = scmp.ne.s32.totalorder %s127, %s141
    %p143 = scmp.eq.s32.totalorder %s28, 0
    %p144 = por %p142, %p143
    %s146 = sadd.s32 %s145, 1
    %p149 = scmp.eq.s32.totalorder %s22, 1
    %p150 = scmp.ne.s32.totalorder %s145, %s147
    %p151 = scmp.eq.s32.totalorder %s22, 0
    %p152 = por %p150, %p151
    %p153 = scmp.ne.s32.totalorder %s145, %s147
    %p154 = scmp.eq.s32.totalorder %s27, 1
    %p155 = por %p153, %p154
    %p156 = scmp.ne.s32.totalorder %s147, %s148
    %p157 = scmp.eq.s32.totalorder %s27, 0
    %p158 = por %p156, %p157
    %p159 = scmp.ne.s32.totalorder %s147, %s148
    %p160 = scmp.eq.s32.totalorder %s28, 1
    %p161 = por %p159, %p160
    %p163 = scmp.ne.s32.totalorder %s148, %s162
    %p164 = scmp.eq.s32.totalorder %s28, 0
    %p165 = por %p163, %p164
    %s167 = sadd.s32 %s166, 1
    %p170 = scmp.eq.s32.totalorder %s22, 1
    %p171 = scmp.ne.s32.totalorder %s166, %s168
    %p172 = scmp.eq.s32.totalorder %s22, 0
    %p173 = por %p171, %p172
    %p174 = scmp.ne.s32.totalorder %s166, %s168
    %p175 = scmp.eq.s32.totalorder %s27, 1
    %p176 = por %p174, %p175
    %p177 = scmp.ne.s32.totalorder %s168, %s169
    %p178 = scmp.eq.s32.totalorder %s27, 0
    %p179 = por %p177, %p178
    %p180 = scmp.ne.s32.totalorder %s168, %s169
    %p181 = scmp.eq.s32.totalorder %s28, 1
    %p182 = por %p180, %p181
    %p184 = scmp.ne.s32.totalorder %s169, %s183
    %p185 = scmp.eq.s32.totalorder %s28, 0
    %p186 = por %p184, %p185
    %s188 = sadd.s32 %s187, 1
    %p191 = scmp.eq.s32.totalorder %s22, 1
    %p192 = scmp.ne.s32.totalorder %s187, %s189
    %p193 = scmp.eq.s32.totalorder %s22, 0
    %p194 = por %p192, %p193
    %p195 = scmp.ne.s32.totalorder %s187, %s189
    %p196 = scmp.eq.s32.totalorder %s27, 1
    %p197 = por %p195, %p196
    %p198 = scmp.ne.s32.totalorder %s189, %s190
    %p199 = scmp.eq.s32.totalorder %s27, 0
    %p200 = por %p198, %p199
    %p201 = scmp.ne.s32.totalorder %s189, %s190
    %p202 = scmp.eq.s32.totalorder %s28, 1
    %p203 = por %p201, %p202
    %p205 = scmp.ne.s32.totalorder %s190, %s204
    %p206 = scmp.eq.s32.totalorder %s28, 0
    %p207 = por %p205, %p206
    %s209 = sadd.s32 %s208, 1
    %p212 = scmp.eq.s32.totalorder %s22, 1
    %p213 = scmp.ne.s32.totalorder %s208, %s210
    %p214 = scmp.eq.s32.totalorder %s22, 0
    %p215 = por %p213, %p214
    %p216 = scmp.ne.s32.totalorder %s208, %s210
    %p217 = scmp.eq.s32.totalorder %s27, 1
    %p218 = por %p216, %p217
    %p219 = scmp.ne.s32.totalorder %s210, %s211
    %p220 = scmp.eq.s32.totalorder %s27, 0
    %p221 = por %p219, %p220
    %p222 = scmp.ne.s32.totalorder %s210, %s211
    %p223 = scmp.eq.s32.totalorder %s28, 1
    %p224 = por %p222, %p223
    %p226 = scmp.ne.s32.totalorder %s211, %s225
    %p227 = scmp.eq.s32.totalorder %s28, 0
    %p228 = por %p226, %p227
    %s230 = sadd.s32 %s229, 1
    %p233 = scmp.eq.s32.totalorder %s22, 1
    %p234 = scmp.ne.s32.totalorder %s229, %s231
    %p235 = scmp.eq.s32.totalorder %s22, 0
    %p236 = por %p234, %p235
    %p237 = scmp.ne.s32.totalorder %s229, %s231
    %p238 = scmp.eq.s32.totalorder %s27, 1
    %p239 = por %p237, %p238
    %p240 = scmp.ne.s32.totalorder %s231, %s232
    %p241 = scmp.eq.s32.totalorder %s27, 0
    %p242 = por %p240, %p241
    %p243 = scmp.ne.s32.totalorder %s231, %s232
    %p244 = scmp.eq.s32.totalorder %s28, 1
    %p245 = por %p243, %p244
    %p247 = scmp.ne.s32.totalorder %s232, %s246
    %p248 = scmp.eq.s32.totalorder %s28, 0
    %p249 = por %p247, %p248
    %s251 = sadd.s32 %s250, 1
    %p254 = scmp.eq.s32.totalorder %s22, 1
    %p255 = scmp.ne.s32.totalorder %s250, %s252
    %p256 = scmp.eq.s32.totalorder %s22, 0
    %p257 = por %p255, %p256
    %p258 = scmp.ne.s32.totalorder %s250, %s252
    %p259 = scmp.eq.s32.totalorder %s27, 1
    %p260 = por %p258, %p259
    %p261 = scmp.ne.s32.totalorder %s252, %s253
    %p262 = scmp.eq.s32.totalorder %s27, 0
    %p263 = por %p261, %p262
    %p264 = scmp.ne.s32.totalorder %s252, %s253
    %p265 = scmp.eq.s32.totalorder %s28, 1
    %p266 = por %p264, %p265
    %p268 = scmp.ne.s32.totalorder %s253, %s267
    %p269 = scmp.eq.s32.totalorder %s28, 0
    %p270 = por %p268, %p269
    %s272 = sadd.s32 %s271, 1
    %p275 = scmp.eq.s32.totalorder %s22, 1
    %p276 = scmp.ne.s32.totalorder %s271, %s273
    %p277 = scmp.eq.s32.totalorder %s22, 0
    %p278 = por %p276, %p277
    %p279 = scmp.ne.s32.totalorder %s271, %s273
    %p280 = scmp.eq.s32.totalorder %s27, 1
    %p281 = por %p279, %p280
    %p282 = scmp.ne.s32.totalorder %s273, %s274
    %p283 = scmp.eq.s32.totalorder %s27, 0
    %p284 = por %p282, %p283
    %p285 = scmp.ne.s32.totalorder %s273, %s274
    %p286 = scmp.eq.s32.totalorder %s28, 1
    %p287 = por %p285, %p286
    %p289 = scmp.ne.s32.totalorder %s274, %s288
    %p290 = scmp.eq.s32.totalorder %s28, 0
    %p291 = por %p289, %p290
    %s293 = sadd.s32 %s292, 1
    %p296 = scmp.eq.s32.totalorder %s22, 1
    %p297 = scmp.ne.s32.totalorder %s292, %s294
    %p298 = scmp.eq.s32.totalorder %s22, 0
    %p299 = por %p297, %p298
    %p300 = scmp.ne.s32.totalorder %s292, %s294
    %p301 = scmp.eq.s32.totalorder %s27, 1
    %p302 = por %p300, %p301
    %p303 = scmp.ne.s32.totalorder %s294, %s295
    %p304 = scmp.eq.s32.totalorder %s27, 0
    %p305 = por %p303, %p304
    %p306 = scmp.ne.s32.totalorder %s294, %s295
    %p307 = scmp.eq.s32.totalorder %s28, 1
    %p308 = por %p306, %p307
    %p310 = scmp.ne.s32.totalorder %s295, %s309
    %p311 = scmp.eq.s32.totalorder %s28, 0
    %p312 = por %p310, %p311
    %s314 = sadd.s32 %s313, 1
    %p317 = scmp.eq.s32.totalorder %s22, 1
    %p318 = scmp.ne.s32.totalorder %s313, %s315
    %p319 = scmp.eq.s32.totalorder %s22, 0
    %p320 = por %p318, %p319
    %p321 = scmp.ne.s32.totalorder %s313, %s315
    %p322 = scmp.eq.s32.totalorder %s27, 1
    %p323 = por %p321, %p322
    %p324 = scmp.ne.s32.totalorder %s315, %s316
    %p325 = scmp.eq.s32.totalorder %s27, 0
    %p326 = por %p324, %p325
    %p327 = scmp.ne.s32.totalorder %s315, %s316
    %p328 = scmp.eq.s32.totalorder %s28, 1
    %p329 = por %p327, %p328
    %p331 = scmp.ne.s32.totalorder %s316, %s330
    %p332 = scmp.eq.s32.totalorder %s28, 0
    %p333 = por %p331, %p332
    %s335 = sadd.s32 %s334, 1
    %p338 = scmp.eq.s32.totalorder %s22, 1
    %p339 = scmp.ne.s32.totalorder %s334, %s336
    %p340 = scmp.eq.s32.totalorder %s22, 0
    %p341 = por %p339, %p340
    %p342 = scmp.ne.s32.totalorder %s334, %s336
    %p343 = scmp.eq.s32.totalorder %s27, 1
    %p344 = por %p342, %p343
    %p345 = scmp.ne.s32.totalorder %s336, %s337
    %p346 = scmp.eq.s32.totalorder %s27, 0
    %p347 = por %p345, %p346
    %p348 = scmp.ne.s32.totalorder %s336, %s337
    %p349 = scmp.eq.s32.totalorder %s28, 1
    %p350 = por %p348, %p349
    %p352 = scmp.ne.s32.totalorder %s337, %s351
    %p353 = scmp.eq.s32.totalorder %s28, 0
    %p354 = por %p352, %p353
    %s356 = sadd.s32 %s355, 1
    %p359 = scmp.eq.s32.totalorder %s22, 1
    %p360 = scmp.ne.s32.totalorder %s355, %s357
    %p361 = scmp.eq.s32.totalorder %s22, 0
    %p362 = por %p360, %p361
    %p363 = scmp.ne.s32.totalorder %s355, %s357
    %p364 = scmp.eq.s32.totalorder %s27, 1
    %p365 = por %p363, %p364
    %p366 = scmp.ne.s32.totalorder %s357, %s358
    %p367 = scmp.eq.s32.totalorder %s27, 0
    %p368 = por %p366, %p367
    %p369 = scmp.ne.s32.totalorder %s357, %s358
    %p370 = scmp.eq.s32.totalorder %s28, 1
    %p371 = por %p369, %p370
    %p373 = scmp.ne.s32.totalorder %s358, %s372
    %p374 = scmp.eq.s32.totalorder %s28, 0
    %p375 = por %p373, %p374
    %s376 = ssub.s32 %s22, %s29
    %p377 = scmp.eq.s32.totalorder %s376, 0
    %s379 = sadd.s32 %s378, 1
    %s380 = scalar_select %p377, %s378, %s379
    %p383 = pneg %p377
    %p384 = scmp.eq.s32.totalorder %s22, 1
    %p385 = por %p383, %p384
    %p386 = scmp.ne.s32.totalorder %s378, %s381
    %p387 = scmp.eq.s32.totalorder %s22, 0
    %p388 = por %p386, %p387
    %p389 = scmp.ne.s32.totalorder %s378, %s381
    %p390 = scmp.eq.s32.totalorder %s27, 1
    %p391 = por %p389, %p390
    %p392 = scmp.ne.s32.totalorder %s381, %s382
    %p393 = scmp.eq.s32.totalorder %s27, 0
    %p394 = por %p392, %p393
    %p395 = scmp.ne.s32.totalorder %s381, %s382
    %p396 = scmp.eq.s32.totalorder %s28, 1
    %p397 = por %p395, %p396
    %p399 = scmp.ne.s32.totalorder %s382, %s398
    %p400 = scmp.eq.s32.totalorder %s28, 0
    %p401 = por %p399, %p400
    %p402 = scmp.le.s32.totalorder 1, %s22
    %p403 = scmp.lt.s32.totalorder %s22, 3
    %p404 = pnand %p402, %p403
    %p405 = pneg %p404
    // Predicated region
    $region9: #{distilbert_forward.3} parent=5 // pred_check
      _
    $region10: #{distilbert_forward.3} parent=5 // pred_check_branch
      %407 = sbr.rel (%p404) target = $region12
    $region11: #{distilbert_forward.3} parent=5 // pred_region
      %s408 = ssub.s32 %s22, 1
      // Predicated region
      $region13: #{distilbert_forward.3} parent=11 // pred_check
        %p409 = pneg %p95
      $region14: #{distilbert_forward.3} parent=11 // pred_check_branch
        %411 = sbr.rel (%p409) target = $region16
      $region15: #{distilbert_forward.3} parent=11 // pred_region
        _
      $region16: #{distilbert_forward.3} parent=11 // pred_fallthru
        _
      // Predicated region
      $region17: #{distilbert_forward.3} parent=11 // pred_check
        %p412 = pneg %p116
      $region18: #{distilbert_forward.3} parent=11 // pred_check_branch
        %414 = sbr.rel (%p412) target = $region20
      $region19: #{distilbert_forward.3} parent=11 // pred_region
        _
      $region20: #{distilbert_forward.3} parent=11 // pred_fallthru
        _
      // Predicated region
      $region21: #{distilbert_forward.3} parent=11 // pred_check
        %p415 = pneg %p137
      $region22: #{distilbert_forward.3} parent=11 // pred_check_branch
        %417 = sbr.rel (%p415) target = $region24
      $region23: #{distilbert_forward.3} parent=11 // pred_region
        _
      $region24: #{distilbert_forward.3} parent=11 // pred_fallthru
        _
      // Predicated region
      $region25: #{distilbert_forward.3} parent=11 // pred_check
        %p418 = pneg %p158
      $region26: #{distilbert_forward.3} parent=11 // pred_check_branch
        %420 = sbr.rel (%p418) target = $region28
      $region27: #{distilbert_forward.3} parent=11 // pred_region
        _
      $region28: #{distilbert_forward.3} parent=11 // pred_fallthru
        _
      // Predicated region
      $region29: #{distilbert_forward.3} parent=11 // pred_check
        %p421 = pneg %p179
      $region30: #{distilbert_forward.3} parent=11 // pred_check_branch
        %423 = sbr.rel (%p421) target = $region32
      $region31: #{distilbert_forward.3} parent=11 // pred_region
        _
      $region32: #{distilbert_forward.3} parent=11 // pred_fallthru
        _
      // Predicated region
      $region33: #{distilbert_forward.3} parent=11 // pred_check
        %p424 = pneg %p200
      $region34: #{distilbert_forward.3} parent=11 // pred_check_branch
        %426 = sbr.rel (%p424) target = $region36
      $region35: #{distilbert_forward.3} parent=11 // pred_region
        _
      $region36: #{distilbert_forward.3} parent=11 // pred_fallthru
        _
      // Predicated region
      $region37: #{distilbert_forward.3} parent=11 // pred_check
        %p427 = pneg %p221
      $region38: #{distilbert_forward.3} parent=11 // pred_check_branch
        %429 = sbr.rel (%p427) target = $region40
      $region39: #{distilbert_forward.3} parent=11 // pred_region
        _
      $region40: #{distilbert_forward.3} parent=11 // pred_fallthru
        _
      // Predicated region
      $region41: #{distilbert_forward.3} parent=11 // pred_check
        %p430 = pneg %p242
      $region42: #{distilbert_forward.3} parent=11 // pred_check_branch
        %432 = sbr.rel (%p430) target = $region44
      $region43: #{distilbert_forward.3} parent=11 // pred_region
        _
      $region44: #{distilbert_forward.3} parent=11 // pred_fallthru
        _
      // Predicated region
      $region45: #{distilbert_forward.3} parent=11 // pred_check
        %p433 = pneg %p263
      $region46: #{distilbert_forward.3} parent=11 // pred_check_branch
        %435 = sbr.rel (%p433) target = $region48
      $region47: #{distilbert_forward.3} parent=11 // pred_region
        _
      $region48: #{distilbert_forward.3} parent=11 // pred_fallthru
        _
      // Predicated region
      $region49: #{distilbert_forward.3} parent=11 // pred_check
        %p436 = pneg %p284
      $region50: #{distilbert_forward.3} parent=11 // pred_check_branch
        %438 = sbr.rel (%p436) target = $region52
      $region51: #{distilbert_forward.3} parent=11 // pred_region
        _
      $region52: #{distilbert_forward.3} parent=11 // pred_fallthru
        _
      // Predicated region
      $region53: #{distilbert_forward.3} parent=11 // pred_check
        %p439 = pneg %p305
      $region54: #{distilbert_forward.3} parent=11 // pred_check_branch
        %441 = sbr.rel (%p439) target = $region56
      $region55: #{distilbert_forward.3} parent=11 // pred_region
        _
      $region56: #{distilbert_forward.3} parent=11 // pred_fallthru
        _
      // Predicated region
      $region57: #{distilbert_forward.3} parent=11 // pred_check
        %p442 = pneg %p326
      $region58: #{distilbert_forward.3} parent=11 // pred_check_branch
        %444 = sbr.rel (%p442) target = $region60
      $region59: #{distilbert_forward.3} parent=11 // pred_region
        _
      $region60: #{distilbert_forward.3} parent=11 // pred_fallthru
        _
      // Predicated region
      $region61: #{distilbert_forward.3} parent=11 // pred_check
        %p445 = pneg %p347
      $region62: #{distilbert_forward.3} parent=11 // pred_check_branch
        %447 = sbr.rel (%p445) target = $region64
      $region63: #{distilbert_forward.3} parent=11 // pred_region
        _
      $region64: #{distilbert_forward.3} parent=11 // pred_fallthru
        _
      // Predicated region
      $region65: #{distilbert_forward.3} parent=11 // pred_check
        %p448 = pneg %p368
      $region66: #{distilbert_forward.3} parent=11 // pred_check_branch
        %450 = sbr.rel (%p448) target = $region68
      $region67: #{distilbert_forward.3} parent=11 // pred_region
        _
      $region68: #{distilbert_forward.3} parent=11 // pred_fallthru
        _
    $region12: #{distilbert_forward.3} parent=5 // pred_fallthru
      _
    %p451 = scmp.lt.s32.totalorder %s22, 2
    // Predicated region
    $region69: #{distilbert_forward.3} parent=5 // pred_check
      %p452 = pneg %p451
    $region70: #{distilbert_forward.3} parent=5 // pred_check_branch
      %454 = sbr.rel (%p452) target = $region72
    $region71: #{distilbert_forward.3} parent=5 // pred_region
      // Predicated region
      $region73: #{distilbert_forward.3} parent=71 // pred_check
        %p455 = pneg %p42
      $region74: #{distilbert_forward.3} parent=71 // pred_check_branch
        %457 = sbr.rel (%p455) target = $region76
      $region75: #{distilbert_forward.3} parent=71 // pred_region
        %p458 = scmp.lt.s32.totalorder %s22, 1
        %s459 = scalar_select %p458, %s22, 1
        %s460 = scalar_lea.vmem %s0, %s459
      $region76: #{distilbert_forward.3} parent=71 // pred_fallthru
        _
      // Predicated region
      $region77: #{distilbert_forward.3} parent=71 // pred_check
        %p461 = pneg %p68
      $region78: #{distilbert_forward.3} parent=71 // pred_check_branch
        %463 = sbr.rel (%p461) target = $region80
      $region79: #{distilbert_forward.3} parent=71 // pred_region
        %p464 = scmp.lt.s32.totalorder %s22, 1
        %s465 = scalar_select %p464, %s22, 1
        %s466 = smul.addr %s465, 4
        %s467 = scalar_lea.vmem %s1, %s466
      $region80: #{distilbert_forward.3} parent=71 // pred_fallthru
        _
    $region72: #{distilbert_forward.3} parent=5 // pred_fallthru
      _
    %p468 = scmp.le.s32.totalorder 1, %s22
    %p469 = scmp.lt.s32.totalorder %s22, 3
    %p470 = pnand %p468, %p469
    %p471 = pneg %p470
    // Predicated region
    $region81: #{distilbert_forward.3} parent=5 // pred_check
      _
    $region82: #{distilbert_forward.3} parent=5 // pred_check_branch
      %473 = sbr.rel (%p470) target = $region84
    $region83: #{distilbert_forward.3} parent=5 // pred_region
      %s474 = ssub.s32 %s22, 1
      %p475 = scmp.lt.s32.totalorder %s27, 1
      %s476 = scalar_select %p475, %s27, 1
      %s477 = scalar_lea.vmem %s0, %s476
      %p478 = pneg %p48
      %p479 = pneg %p45
      %p480 = scmp.lt.s32.totalorder %s27, 1
      %s481 = scalar_select %p480, %s27, 1
      %s482 = smul.addr %s481, 4
      %s483 = scalar_lea.vmem %s1, %s482
      %p484 = pneg %p74
      %p485 = pneg %p71
      %p486 = pneg %p95
      %p487 = pneg %p92
      %p488 = pneg %p116
      %p489 = pneg %p113
      %p490 = pneg %p137
      %p491 = pneg %p134
      %p492 = pneg %p158
      %p493 = pneg %p155
      %p494 = pneg %p179
      %p495 = pneg %p176
      %p496 = pneg %p200
      %p497 = pneg %p197
      %p498 = pneg %p221
      %p499 = pneg %p218
      %p500 = pneg %p242
      %p501 = pneg %p239
      %p502 = pneg %p263
      %p503 = pneg %p260
      %p504 = pneg %p284
      %p505 = pneg %p281
      %p506 = pneg %p305
      %p507 = pneg %p302
      %p508 = pneg %p326
      %p509 = pneg %p323
      %p510 = pneg %p347
      %p511 = pneg %p344
      %p512 = pneg %p368
      %p513 = pneg %p365
      %p514 = pneg %p394
      %p515 = pneg %p391
      %p516 = scmp.lt.s32.totalorder %s27, 1
      %s517 = scalar_select %p516, %s27, 1
      %s518 = smul.addr %s517, 4
      %s519 = scalar_lea.vmem %s16, %s518
      %p520 = scmp.lt.s32.totalorder %s27, 1
      %s521 = scalar_select %p520, %s27, 1
      %s522 = scalar_lea.vmem %s0, %s521
      %p523 = scmp.lt.s32.totalorder %s27, 1
      %s524 = scalar_select %p523, %s27, 1
      %s525 = smul.addr %s524, 4
      %s526 = scalar_lea.vmem %s1, %s525
      %p527 = scmp.lt.s32.totalorder %s27, 1
      %s528 = scalar_select %p527, %s27, 1
      %s529 = smul.addr %s528, 4
      %s530 = scalar_lea.vmem %s16, %s529
      %v532 = vld [vmem:[%s526] sm:$0xf]
      %v533 = vunpack.c.l.bf16 %v532
      %v534 = vld [vmem:[%s2] sm:$0x1]
      %v535 = vld [vmem:[%s3] sm:$0x1]
      %vm536 = vcmask 261120
      %v537 = vsel %vm536, %v533, 0.0
      %538 = vadd.xlane.f32.xlu0 %v537
      %v539 = vpop.xlane.xlu0 %538
      %v540 = vrcp.pop 32.0
      %v541 = vmul.f32 32.0, %v540
      %v542 = vsub.f32 1.0, %v541
      %v543 = vmul.f32 %v540, %v542
      %v544 = vadd.f32 %v540, %v543
      %vm545 = vweird.f32 %v540
      %v546 = vsel %vm545, %v540, %v544
      %v547 = vmul.f32 %v539, %v546
      %v548 = vsub.f32 %v533, %v547
      %v549 = vmul.f32 %v548, %v548
      %v550 = vsel %vm536, %v549, 0.0
      %551 = vadd.xlane.f32.xlu0 %v550
      %v552 = vpop.xlane.xlu0 %551
      %v553 = vmul.f32 %v552, %v546
      %v554 = vadd.f32 %v553, 1e-12
      %v555 = vrsqrt.pop %v554
      %v556 = vmul.f32 %v555, %v554
      %v557 = vmul.f32 %v556, %v555
      %v558 = vmul.f32 0.5, %v557
      %v559 = vsub.f32 1.5, %v558
      %v560 = vmul.f32 %v555, %v559
      %vm561 = vweird.f32 %v554
      %vm562 = vweird.f32 %v555
      %vm563 = vmor %vm561, %vm562
      %v564 = vsel %vm563, %v555, %v560
      %v565 = vmul.f32 %v548, %v564
      %v567 = vperm.slane %v534, 0
      %v569 = vmul.f32 %v565, %v567
      %v571 = vperm.slane %v535, 0
      %v573 = vadd.f32 %v569, %v571
      %v574 = vpack.c.bf16 %v573, %v573
      %v575 = vld [vmem:[%s4] sm:$0xf]
      %v576 = vld [vmem:[%s4 + $0x4] sm:$0xf]
      %v577 = vld [vmem:[%s4 + $0x8] sm:$0xf]
      %v578 = vld [vmem:[%s4 + $0xc] sm:$0xf]
      %v579 = vld [vmem:[%s5] sm:$0x1]
      %v581 = vperm.slane %v579, 0
      %v587 = vunpack.c.l.b16 %v575
      %v588 = vunpack.c.l.b16 %v576
      %v589 = vunpack.c.l.b16 %v577
      %v590 = vunpack.c.l.b16 %v578
      %v591 = vpack.c.b16 %v588, %v587
      %v592 = vpack.c.b16 %v590, %v589
      %v596 = vsel %vm536, %v574, 0
      %598 = vmatpush.bf16.msra.mxu0 0
      %599 = vmatpush.bf16.msra.mxu0 0
      %600 = vmatpush.bf16.msra.mxu0 0
      %601 = vmatpush.bf16.msra.mxu0 0
      %602 = vmatpush.bf16.msra.mxu0 0
      %603 = vmatpush.bf16.msra.mxu0 0
      %604 = vmatpush.bf16.msra.mxu0 %v592
      %605 = vmatpush.bf16.msra.mxu0 %v591
      %606 = vmatmul.bf16.gmra.mxu0 %v596
      %v607 = vpop.f32.mrf.mxu0
      %v608 = vadd.f32 %v581, %v607
      %v609 = vpop.f32.mrf.mxu0
      %610 = vdwg.mxu0
      %v611 = vpack.c.bf16 %v608, %v608
      %vm612 = vcmask 781312
      %613 = vst.msk [vmem:[#allocation2] sm:$0xf] %vm612, %v611
      %v614 = vld [vmem:[%s522] sm:$0x1]
      %vm615 = vcmp.gt.f32.partialorder %v614, 0.0
      %v616 = vsel %vm615, 0.0, -3.4028235e+38
      %v617 = vld [vmem:[#allocation2] sm:$0xf]
      %v619 = vunpack.c.l.b16 %v617
      %v620 = vpack.c.b16 %v619, %v619
      %621 = vrot.lane.b32.xlu0 %v620, 96
      %v622 = vpop.permute.xlu0 %621
      %vm623 = vcmask 64512
      %v625 = vsel %vm623, %v617, 0
      %v628 = vsel %vm623, %v622, 0
      %630 = vmatpush.bf16.xpose.msra.mxu0 0
      %631 = vmatpush.bf16.xpose.msra.mxu0 0
      %632 = vmatpush.bf16.xpose.msra.mxu0 0
      %633 = vmatpush.bf16.xpose.msra.mxu0 0
      %634 = vmatpush.bf16.xpose.msra.mxu0 0
      %635 = vmatpush.bf16.xpose.msra.mxu0 0
      %636 = vmatpush.bf16.xpose.msra.mxu0 0
      %637 = vmatpush.bf16.xpose.msra.mxu0 %v628
      %638 = vmatmul.bf16.gmra.mxu0 %v625
      %v639 = vpop.f32.mrf.mxu0
      %v640 = vadd.f32 0.0, %v639
      %v641 = vpop.f32.mrf.mxu0
      %642 = vdwg.mxu0
      %v643 = vmul.f32 %v640, 0.35355338
      %v645 = vperm.slane %v616, 0
      %v647 = vadd.f32 %v643, %v645
      %v648 = vsel %vm623, %v647, -inf
      %649 = vmax.xlane.f32.xlu0 %v648
      %v650 = vpop.xlane.xlu0 %649
      %v651 = vsub.f32 %v647, %v650
      %v652 = vmul.f32 %v651, 1.442695
      %v653 = vpow.pop %v652
      %v654 = vsel %vm623, %v653, 0.0
      %655 = vadd.xlane.f32.xlu0 %v654
      %v656 = vpop.xlane.xlu0 %655
      %v657 = vrcp.pop %v656
      %v658 = vmul.f32 %v653, %v657
      %v659 = vpack.c.bf16 %v658, %v658
      %660 = vrot.lane.b32.xlu0 %v620, 64
      %v661 = vpop.permute.xlu0 %660
      %v663 = vsel %vm623, %v659, 0
      %vm665 = vcmask 1043456
      %v667 = vsel %vm665, %v661, 0
      %669 = vmatpush.bf16.msra.mxu0 0
      %670 = vmatpush.bf16.msra.mxu0 0
      %671 = vmatpush.bf16.msra.mxu0 0
      %672 = vmatpush.bf16.msra.mxu0 0
      %673 = vmatpush.bf16.msra.mxu0 0
      %674 = vmatpush.bf16.msra.mxu0 0
      %675 = vmatpush.bf16.msra.mxu0 0
      %676 = vmatpush.bf16.msra.mxu0 %v667
      %677 = vmatmul.bf16.gmra.mxu0 %v663
      %v678 = vpop.f32.mrf.mxu0
      %v679 = vadd.f32 0.0, %v678
      %v680 = vpop.f32.mrf.mxu0
      %681 = vdwg.mxu0
      %v682 = vpack.c.bf16 %v679, %v679
      %vm683 = vcmask 60416
      %684 = vst.msk [vmem:[#allocation3] sm:$0xf] %vm683, %v682
      %v685 = vld [vmem:[#allocation2] sm:$0xf]
      %v687 = vunpack.c.l.b16 %v685
      %v688 = vpack.c.b16 %v687, %v687
      %689 = vrot.lane.b32.xlu0 %v688, 120
      %v690 = vpop.permute.xlu0 %689
      %691 = vrot.lane.b32.xlu0 %v688, 88
      %v692 = vpop.permute.xlu0 %691
      %v694 = vsel %vm623, %v690, 0
      %v697 = vsel %vm623, %v692, 0
      %699 = vmatpush.bf16.xpose.msra.mxu0 0
      %700 = vmatpush.bf16.xpose.msra.mxu0 0
      %701 = vmatpush.bf16.xpose.msra.mxu0 0
      %702 = vmatpush.bf16.xpose.msra.mxu0 0
      %703 = vmatpush.bf16.xpose.msra.mxu0 0
      %704 = vmatpush.bf16.xpose.msra.mxu0 0
      %705 = vmatpush.bf16.xpose.msra.mxu0 0
      %706 = vmatpush.bf16.xpose.msra.mxu0 %v697
      %707 = vmatmul.bf16.gmra.mxu0 %v694
      %v708 = vpop.f32.mrf.mxu0
      %v709 = vadd.f32 0.0, %v708
      %v710 = vpop.f32.mrf.mxu0
      %711 = vdwg.mxu0
      %v712 = vmul.f32 %v709, 0.35355338
      %v713 = vadd.f32 %v712, %v645
      %v714 = vsel %vm623, %v713, -inf
      %715 = vmax.xlane.f32.xlu0 %v714
      %v716 = vpop.xlane.xlu0 %715
      %v717 = vsub.f32 %v713, %v716
      %v718 = vmul.f32 %v717, 1.442695
      %v719 = vpow.pop %v718
      %v720 = vsel %vm623, %v719, 0.0
      %721 = vadd.xlane.f32.xlu0 %v720
      %v722 = vpop.xlane.xlu0 %721
      %v723 = vrcp.pop %v722
      %v724 = vmul.f32 %v719, %v723
      %v725 = vpack.c.bf16 %v724, %v724
      %726 = vrot.lane.b32.xlu0 %v688, 56
      %v727 = vpop.permute.xlu0 %726
      %v729 = vsel %vm623, %v725, 0
      %v732 = vsel %vm665, %v727, 0
      %734 = vmatpush.bf16.msra.mxu0 0
      %735 = vmatpush.bf16.msra.mxu0 0
      %736 = vmatpush.bf16.msra.mxu0 0
      %737 = vmatpush.bf16.msra.mxu0 0
      %738 = vmatpush.bf16.msra.mxu0 0
      %739 = vmatpush.bf16.msra.mxu0 0
      %740 = vmatpush.bf16.msra.mxu0 0
      %741 = vmatpush.bf16.msra.mxu0 %v732
      %742 = vmatmul.bf16.gmra.mxu0 %v729
      %v743 = vpop.f32.mrf.mxu0
      %v744 = vadd.f32 0.0, %v743
      %v745 = vpop.f32.mrf.mxu0
      %746 = vdwg.mxu0
      %v747 = vpack.c.bf16 %v744, %v744
      %749 = vrot.lane.b32.xlu0 %v747, 8
      %v750 = vpop.permute.xlu0 %749
      %vm752 = vcmask 126016
      %753 = vst.msk [vmem:[#allocation3] sm:$0xf] %vm752, %v750
      %v754 = vld [vmem:[#allocation2] sm:$0xf]
      %v756 = vunpack.c.l.b16 %v754
      %v757 = vpack.c.b16 %v756, %v756
      %758 = vrot.lane.b32.xlu0 %v757, 112
      %v759 = vpop.permute.xlu0 %758
      %760 = vrot.lane.b32.xlu0 %v757, 80
      %v761 = vpop.permute.xlu0 %760
      %v763 = vsel %vm623, %v759, 0
      %v766 = vsel %vm623, %v761, 0
      %768 = vmatpush.bf16.xpose.msra.mxu0 0
      %769 = vmatpush.bf16.xpose.msra.mxu0 0
      %770 = vmatpush.bf16.xpose.msra.mxu0 0
      %771 = vmatpush.bf16.xpose.msra.mxu0 0
      %772 = vmatpush.bf16.xpose.msra.mxu0 0
      %773 = vmatpush.bf16.xpose.msra.mxu0 0
      %774 = vmatpush.bf16.xpose.msra.mxu0 0
      %775 = vmatpush.bf16.xpose.msra.mxu0 %v766
      %776 = vmatmul.bf16.gmra.mxu0 %v763
      %v777 = vpop.f32.mrf.mxu0
      %v778 = vadd.f32 0.0, %v777
      %v779 = vpop.f32.mrf.mxu0
      %780 = vdwg.mxu0
      %v781 = vmul.f32 %v778, 0.35355338
      %v782 = vadd.f32 %v781, %v645
      %v783 = vsel %vm623, %v782, -inf
      %784 = vmax.xlane.f32.xlu0 %v783
      %v785 = vpop.xlane.xlu0 %784
      %v786 = vsub.f32 %v782, %v785
      %v787 = vmul.f32 %v786, 1.442695
      %v788 = vpow.pop %v787
      %v789 = vsel %vm623, %v788, 0.0
      %790 = vadd.xlane.f32.xlu0 %v789
      %v791 = vpop.xlane.xlu0 %790
      %v792 = vrcp.pop %v791
      %v793 = vmul.f32 %v788, %v792
      %v794 = vpack.c.bf16 %v793, %v793
      %795 = vrot.lane.b32.xlu0 %v757, 48
      %v796 = vpop.permute.xlu0 %795
      %v798 = vsel %vm623, %v794, 0
      %v801 = vsel %vm665, %v796, 0
      %803 = vmatpush.bf16.msra.mxu0 0
      %804 = vmatpush.bf16.msra.mxu0 0
      %805 = vmatpush.bf16.msra.mxu0 0
      %806 = vmatpush.bf16.msra.mxu0 0
      %807 = vmatpush.bf16.msra.mxu0 0
      %808 = vmatpush.bf16.msra.mxu0 0
      %809 = vmatpush.bf16.msra.mxu0 0
      %810 = vmatpush.bf16.msra.mxu0 %v801
      %811 = vmatmul.bf16.gmra.mxu0 %v798
      %v812 = vpop.f32.mrf.mxu0
      %v813 = vadd.f32 0.0, %v812
      %v814 = vpop.f32.mrf.mxu0
      %815 = vdwg.mxu0
      %v816 = vpack.c.bf16 %v813, %v813
      %818 = vrot.lane.b32.xlu0 %v816, 16
      %v819 = vpop.permute.xlu0 %818
      %vm821 = vcmask 191616
      %822 = vst.msk [vmem:[#allocation3] sm:$0xf] %vm821, %v819
      %v823 = vld [vmem:[#allocation2] sm:$0xf]
      %v825 = vunpack.c.l.b16 %v823
      %v826 = vpack.c.b16 %v825, %v825
      %827 = vrot.lane.b32.xlu0 %v826, 104
      %v828 = vpop.permute.xlu0 %827
      %829 = vrot.lane.b32.xlu0 %v826, 72
      %v830 = vpop.permute.xlu0 %829
      %v832 = vsel %vm623, %v828, 0
      %v835 = vsel %vm623, %v830, 0
      %837 = vmatpush.bf16.xpose.msra.mxu0 0
      %838 = vmatpush.bf16.xpose.msra.mxu0 0
      %839 = vmatpush.bf16.xpose.msra.mxu0 0
      %840 = vmatpush.bf16.xpose.msra.mxu0 0
      %841 = vmatpush.bf16.xpose.msra.mxu0 0
      %842 = vmatpush.bf16.xpose.msra.mxu0 0
      %843 = vmatpush.bf16.xpose.msra.mxu0 0
      %844 = vmatpush.bf16.xpose.msra.mxu0 %v835
      %845 = vmatmul.bf16.gmra.mxu0 %v832
      %v846 = vpop.f32.mrf.mxu0
      %v847 = vadd.f32 0.0, %v846
      %v848 = vpop.f32.mrf.mxu0
      %849 = vdwg.mxu0
      %v850 = vmul.f32 %v847, 0.35355338
      %v851 = vadd.f32 %v850, %v645
      %v852 = vsel %vm623, %v851, -inf
      %853 = vmax.xlane.f32.xlu0 %v852
      %v854 = vpop.xlane.xlu0 %853
      %v855 = vsub.f32 %v851, %v854
      %v856 = vmul.f32 %v855, 1.442695
      %v857 = vpow.pop %v856
      %v858 = vsel %vm623, %v857, 0.0
      %859 = vadd.xlane.f32.xlu0 %v858
      %v860 = vpop.xlane.xlu0 %859
      %v861 = vrcp.pop %v860
      %v862 = vmul.f32 %v857, %v861
      %v863 = vpack.c.bf16 %v862, %v862
      %864 = vrot.lane.b32.xlu0 %v826, 40
      %v865 = vpop.permute.xlu0 %864
      %v867 = vsel %vm623, %v863, 0
      %v870 = vsel %vm665, %v865, 0
      %872 = vmatpush.bf16.msra.mxu0 0
      %873 = vmatpush.bf16.msra.mxu0 0
      %874 = vmatpush.bf16.msra.mxu0 0
      %875 = vmatpush.bf16.msra.mxu0 0
      %876 = vmatpush.bf16.msra.mxu0 0
      %877 = vmatpush.bf16.msra.mxu0 0
      %878 = vmatpush.bf16.msra.mxu0 0
      %879 = vmatpush.bf16.msra.mxu0 %v870
      %880 = vmatmul.bf16.gmra.mxu0 %v867
      %v881 = vpop.f32.mrf.mxu0
      %v882 = vadd.f32 0.0, %v881
      %v883 = vpop.f32.mrf.mxu0
      %884 = vdwg.mxu0
      %v885 = vpack.c.bf16 %v882, %v882
      %887 = vrot.lane.b32.xlu0 %v885, 24
      %v888 = vpop.permute.xlu0 %887
      %vm890 = vcmask 257216
      %891 = vst.msk [vmem:[#allocation3] sm:$0xf] %vm890, %v888
      %v892 = vld [vmem:[#allocation3] sm:$0xf]
      %v893 = vld [vmem:[%s6] sm:$0xf]
      %v894 = vld [vmem:[%s6 + $0x4] sm:$0xf]
      %v895 = vld [vmem:[%s6 + $0x8] sm:$0xf]
      %v896 = vld [vmem:[%s6 + $0xc] sm:$0xf]
      %v897 = vld [vmem:[%s7] sm:$0x1]
      %v899 = vperm.slane %v897, 0
      %v905 = vunpack.c.l.b16 %v893
      %v906 = vunpack.c.l.b16 %v894
      %v907 = vunpack.c.l.b16 %v895
      %v908 = vunpack.c.l.b16 %v896
      %v909 = vpack.c.b16 %v906, %v905
      %v910 = vpack.c.b16 %v908, %v907
      %v914 = vsel %vm536, %v892, 0
      %916 = vmatpush.bf16.msra.mxu0 0
      %917 = vmatpush.bf16.msra.mxu0 0
      %918 = vmatpush.bf16.msra.mxu0 0
      %919 = vmatpush.bf16.msra.mxu0 0
      %920 = vmatpush.bf16.msra.mxu0 0
      %921 = vmatpush.bf16.msra.mxu0 0
      %922 = vmatpush.bf16.msra.mxu0 %v910
      %923 = vmatpush.bf16.msra.mxu0 %v909
      %924 = vmatmul.bf16.gmra.mxu0 %v914
      %v925 = vpop.f32.mrf.mxu0
      %v926 = vadd.f32 %v899, %v925
      %v927 = vpop.f32.mrf.mxu0
      %928 = vdwg.mxu0
      %v929 = vadd.f32 %v926, %v573
      %v930 = vld [vmem:[%s8] sm:$0x1]
      %v931 = vld [vmem:[%s9] sm:$0x1]
      %v932 = vsel %vm536, %v929, 0.0
      %933 = vadd.xlane.f32.xlu0 %v932
      %v934 = vpop.xlane.xlu0 %933
      %v935 = vmul.f32 %v934, %v546
      %v936 = vsub.f32 %v929, %v935
      %v937 = vmul.f32 %v936, %v936
      %v938 = vsel %vm536, %v937, 0.0
      %939 = vadd.xlane.f32.xlu0 %v938
      %v940 = vpop.xlane.xlu0 %939
      %v941 = vmul.f32 %v940, %v546
      %v942 = vadd.f32 %v941, 1e-12
      %v943 = vrsqrt.pop %v942
      %v944 = vmul.f32 %v943, %v942
      %v945 = vmul.f32 %v944, %v943
      %v946 = vmul.f32 0.5, %v945
      %v947 = vsub.f32 1.5, %v946
      %v948 = vmul.f32 %v943, %v947
      %vm949 = vweird.f32 %v942
      %vm950 = vweird.f32 %v943
      %vm951 = vmor %vm949, %vm950
      %v952 = vsel %vm951, %v943, %v948
      %v953 = vmul.f32 %v936, %v952
      %v955 = vperm.slane %v930, 0
      %v957 = vmul.f32 %v953, %v955
      %v959 = vperm.slane %v931, 0
      %v961 = vadd.f32 %v957, %v959
      %v962 = vpack.c.bf16 %v961, %v961
      %v963 = vld [vmem:[%s10] sm:$0xf]
      %v964 = vld [vmem:[%s10 + $0x4] sm:$0xf]
      %v965 = vld [vmem:[%s10 + $0x8] sm:$0xf]
      %v966 = vld [vmem:[%s10 + $0xc] sm:$0xf]
      %v967 = vld [vmem:[%s11] sm:$0x1]
      %v969 = vperm.slane %v967, 0
      %v975 = vunpack.c.l.b16 %v963
      %v976 = vunpack.c.l.b16 %v964
      %v977 = vunpack.c.l.b16 %v965
      %v978 = vunpack.c.l.b16 %v966
      %v979 = vpack.c.b16 %v976, %v975
      %v980 = vpack.c.b16 %v978, %v977
      %v984 = vsel %vm536, %v962, 0
      %986 = vmatpush.bf16.msra.mxu0 0
      %987 = vmatpush.bf16.msra.mxu0 0
      %988 = vmatpush.bf16.msra.mxu0 0
      %989 = vmatpush.bf16.msra.mxu0 0
      %990 = vmatpush.bf16.msra.mxu0 0
      %991 = vmatpush.bf16.msra.mxu0 0
      %992 = vmatpush.bf16.msra.mxu0 %v980
      %993 = vmatpush.bf16.msra.mxu0 %v979
      %994 = vmatmul.bf16.gmra.mxu0 %v984
      %v995 = vpop.f32.mrf.mxu0
      %v996 = vadd.f32 %v969, %v995
      %v997 = vpop.f32.mrf.mxu0
      %998 = vdwg.mxu0
      %v999 = vmul.f32 %v996, %v996
      %v1000 = vmul.f32 %v996, %v999
      %v1001 = vmul.f32 %v1000, 0.044715
      %v1002 = vadd.f32 %v996, %v1001
      %v1003 = vmul.f32 %v1002, 0.7978846
      %v1004 = vtanh.pop %v1003
      %v1005 = vadd.f32 %v1004, 1.0
      %v1006 = vmul.f32 %v1005, 0.5
      %v1007 = vmul.f32 %v996, %v1006
      %v1008 = vpack.c.bf16 %v1007, %v1007
      %v1009 = vld [vmem:[%s12] sm:$0xf]
      %v1010 = vld [vmem:[%s12 + $0x4] sm:$0xf]
      %v1011 = vld [vmem:[%s12 + $0x8] sm:$0xf]
      %v1012 = vld [vmem:[%s12 + $0xc] sm:$0xf]
      %v1013 = vld [vmem:[%s12 + $0x10] sm:$0xf]
      %v1014 = vld [vmem:[%s12 + $0x14] sm:$0xf]
      %v1015 = vld [vmem:[%s12 + $0x18] sm:$0xf]
      %v1016 = vld [vmem:[%s12 + $0x1c] sm:$0xf]
      %v1017 = vld [vmem:[%s13] sm:$0x1]
      %v1019 = vperm.slane %v1017, 0
      %v1029 = vunpack.c.l.b16 %v1009
      %v1030 = vunpack.c.l.b16 %v1010
      %v1031 = vunpack.c.l.b16 %v1011
      %v1032 = vunpack.c.l.b16 %v1012
      %v1033 = vunpack.c.l.b16 %v1013
      %v1034 = vunpack.c.l.b16 %v1014
      %v1035 = vunpack.c.l.b16 %v1015
      %v1036 = vunpack.c.l.b16 %v1016
      %v1037 = vpack.c.b16 %v1030, %v1029
      %v1038 = vpack.c.b16 %v1032, %v1031
      %v1039 = vpack.c.b16 %v1034, %v1033
      %v1040 = vpack.c.b16 %v1036, %v1035
      %vm1045 = vcmask 523264
      %v1047 = vsel %vm1045, %v1008, 0
      %1049 = vmatpush.bf16.msra.mxu0 0
      %1050 = vmatpush.bf16.msra.mxu0 0
      %1051 = vmatpush.bf16.msra.mxu0 0
      %1052 = vmatpush.bf16.msra.mxu0 0
      %1053 = vmatpush.bf16.msra.mxu0 %v1040
      %1054 = vmatpush.bf16.msra.mxu0 %v1039
      %1055 = vmatpush.bf16.msra.mxu0 %v1038
      %1056 = vmatpush.bf16.msra.mxu0 %v1037
      %1057 = vmatmul.bf16.gmra.mxu0 %v1047
      %v1058 = vpop.f32.mrf.mxu0
      %v1059 = vadd.f32 %v1019, %v1058
      %v1060 = vpop.f32.mrf.mxu0
      %1061 = vdwg.mxu0
      %v1062 = vadd.f32 %v1059, %v961
      %v1063 = vld [vmem:[%s14] sm:$0x1]
      %v1064 = vld [vmem:[%s15] sm:$0x1]
      %v1065 = vsel %vm536, %v1062, 0.0
      %1066 = vadd.xlane.f32.xlu0 %v1065
      %v1067 = vpop.xlane.xlu0 %1066
      %v1068 = vmul.f32 %v1067, %v546
      %v1069 = vsub.f32 %v1062, %v1068
      %v1070 = vmul.f32 %v1069, %v1069
      %v1071 = vsel %vm536, %v1070, 0.0
      %1072 = vadd.xlane.f32.xlu0 %v1071
      %v1073 = vpop.xlane.xlu0 %1072
      %v1074 = vmul.f32 %v1073, %v546
      %v1075 = vadd.f32 %v1074, 1e-12
      %v1076 = vrsqrt.pop %v1075
      %v1077 = vmul.f32 %v1076, %v1075
      %v1078 = vmul.f32 %v1077, %v1076
      %v1079 = vmul.f32 0.5, %v1078
      %v1080 = vsub.f32 1.5, %v1079
      %v1081 = vmul.f32 %v1076, %v1080
      %vm1082 = vweird.f32 %v1075
      %vm1083 = vweird.f32 %v1076
      %vm1084 = vmor %vm1082, %vm1083
      %v1085 = vsel %vm1084, %v1076, %v1081
      %v1086 = vmul.f32 %v1069, %v1085
      %v1088 = vperm.slane %v1063, 0
      %v1090 = vmul.f32 %v1086, %v1088
      %v1092 = vperm.slane %v1064, 0
      %v1094 = vadd.f32 %v1090, %v1092
      %v1095 = vpack.c.bf16 %v1094, %v1094
      %vm1096 = vcmask 257024
      %1097 = vst.msk [vmem:[%s530] sm:$0xf] %vm1096, %v1095
      %p1098 = scmp.lt.s32.totalorder %s27, 1
      %s1099 = scalar_select %p1098, %s27, 1
      %s1100 = smul.addr %s1099, 4
      %s1101 = scalar_lea.vmem %s16, %s1100
      // Predicated region
      $region85: #{distilbert_forward.3} parent=83 // pred_check
        %p1102 = pneg %p391
      $region86: #{distilbert_forward.3} parent=83 // pred_check_branch
        %1104 = sbr.rel (%p1102) target = $region88
      $region87: #{distilbert_forward.3} parent=83 // pred_region
        _
      $region88: #{distilbert_forward.3} parent=83 // pred_fallthru
        _
    $region84: #{distilbert_forward.3} parent=5 // pred_fallthru
      _
    %p1105 = scmp.le.s32.totalorder 2, %s22
    // Predicated region
    $region89: #{distilbert_forward.3} parent=5 // pred_check
      %p1106 = pneg %p1105
    $region90: #{distilbert_forward.3} parent=5 // pred_check_branch
      %1108 = sbr.rel (%p1106) target = $region92
    $region91: #{distilbert_forward.3} parent=5 // pred_region
      %s1109 = ssub.s32 %s22, 2
      // Predicated region
      $region93: #{distilbert_forward.3} parent=91 // pred_check
        %p1110 = pneg %p397
      $region94: #{distilbert_forward.3} parent=91 // pred_check_branch
        %1112 = sbr.rel (%p1110) target = $region96
      $region95: #{distilbert_forward.3} parent=91 // pred_region
        %p1113 = scmp.lt.s32.totalorder %s28, 1
        %s1114 = scalar_select %p1113, %s28, 1
        %s1115 = smul.addr %s1114, 4
        %s1116 = scalar_lea.vmem %s16, %s1115
      $region96: #{distilbert_forward.3} parent=91 // pred_fallthru
        _
    $region92: #{distilbert_forward.3} parent=5 // pred_fallthru
      _
  $region6: #{distilbert_forward.3} parent=0 // loop_footer
    %s26 = sadd.s32 1, %s22
  $region7: #{distilbert_forward.3} parent=0 // loop_footer_branch
    %21 = sbr.rel target = $region3
  $region8: #{distilbert_forward.3} parent=0 // loop_exit
    _

</llo_original>
